<compile_context>
chip_gen: v6e
topology: v6e:2x2x1
jax: 0.10.0
libtpu: 0.0.40
codegen_flags: <defaults>
</compile_context>

<pallas_src>
import functools

import jax
import jax.numpy as jnp
from jax.experimental import pallas as pl
from jax.experimental.pallas import tpu as pltpu

D_IN, D_H1, D_Z, D_H2, D_OUT = 784, 400, 20, 400, 784
# Lane-dense padded dims (multiples of 128).
D_IN_P, D_Z_P, D_OUT_P = 896, 128, 896


def _round_up(n, m):
    return (n + m - 1) // m * m


def _leaky_relu(x, slope=0.2):
    return jnp.where(x > 0, x, slope * x)


def denoiser_kernel(x_ref,
                    w1_ref, b1_ref,
                    w2_ref, b2_ref,
                    w3_ref, b3_ref,
                    w4_ref, b4_ref,
                    o_ref):
    cdt = w1_ref.dtype  # matmul-operand dtype (bf16 by default, f32 if requested)
    # Encoder: Linear(784,400) -> LeakyReLU(0.2) -> Linear(400,20) -> LeakyReLU(0.2)
    h = jnp.dot(x_ref[...], w1_ref[...], preferred_element_type=jnp.float32)
    h = _leaky_relu(h + b1_ref[...])
    h = jnp.dot(h.astype(cdt), w2_ref[...], preferred_element_type=jnp.float32)
    h = _leaky_relu(h + b2_ref[...])
    # Decoder: Linear(20,400) -> LeakyReLU(0.2) -> Linear(400,784) -> Sigmoid
    h = jnp.dot(h.astype(cdt), w3_ref[...], preferred_element_type=jnp.float32)
    h = _leaky_relu(h + b3_ref[...])
    h = jnp.dot(h.astype(cdt), w4_ref[...], preferred_element_type=jnp.float32)
    h = h + b4_ref[...]
    # Sigmoid: exp -> EUP, approx reciprocal -> EUP (keeps the VALU slot free).
    o_ref[...] = pl.reciprocal(1.0 + jnp.exp(-h), approx=True)


def _pad2(a, shape, dtype):
    """Zero-pad a 2-D array up to `shape` and cast to `dtype`."""
    out = jnp.zeros(shape, dtype)
    return out.at[: a.shape[0], : a.shape[1]].set(a.astype(dtype))


@functools.partial(jax.jit, static_argnames=("batch_tile", "matmul_dtype"))
def denoiser_forward(x, params, batch_tile=256, matmul_dtype=jnp.bfloat16):
    """x: [B, 784] float32; params: dict of pre-transposed f32 weights/biases."""
    B = x.shape[0]
    bp = _round_up(max(B, batch_tile), batch_tile)      # padded batch
    grid = (bp // batch_tile,)

    # --- pad / cast operands to lane-dense, MXU-friendly shapes --------------
    xp = _pad2(x, (bp, D_IN_P), matmul_dtype)
    w1 = _pad2(params["w1"], (D_IN_P, D_H1), matmul_dtype)
    b1 = params["b1"].astype(jnp.float32)
    w2 = _pad2(params["w2"], (D_H1, D_Z_P), matmul_dtype)
    b2 = _pad2(params["b2"], (1, D_Z_P), jnp.float32)
    w3 = _pad2(params["w3"], (D_Z_P, D_H2), matmul_dtype)
    b3 = params["b3"].astype(jnp.float32)
    w4 = _pad2(params["w4"], (D_H2, D_OUT_P), matmul_dtype)
    b4 = _pad2(params["b4"], (1, D_OUT_P), jnp.float32)
    weight_args = (w1, b1, w2, b2, w3, b3, w4, b4)

    def x_map(i):
        return (i, 0)

    def full_map(i):
        return (0, 0)

    weight_specs = [pl.BlockSpec(a.shape, full_map) for a in weight_args]

    itm = jnp.dtype(matmul_dtype).itemsize
    flops = 2 * bp * (D_IN_P * D_H1 + D_H1 * D_Z_P + D_Z_P * D_H2 + D_H2 * D_OUT_P)
    bytes_accessed = (bp * D_IN_P * itm + bp * D_OUT_P * 4
                      + sum(a.size * a.dtype.itemsize for a in weight_args))
    cost = pl.CostEstimate(flops=flops,
                           transcendentals=bp * D_OUT_P,
                           bytes_accessed=bytes_accessed)

    out = pl.pallas_call(
        denoiser_kernel,
        out_shape=jax.ShapeDtypeStruct((bp, D_OUT_P), jnp.float32),
        grid_spec=pltpu.PrefetchScalarGridSpec(
            num_scalar_prefetch=0,
            grid=grid,
            in_specs=[pl.BlockSpec((batch_tile, D_IN_P), x_map)] + weight_specs,
            out_specs=pl.BlockSpec((batch_tile, D_OUT_P), x_map),
        ),
        compiler_params=pltpu.CompilerParams(
            dimension_semantics=("parallel",)),
        cost_estimate=cost,
    )(xp, *weight_args)
    # Slice away batch and lane padding.
    return out[:B, :D_OUT]


def init_params(key):
    """Deterministic synthetic parameters.

    PyTorch nn.Linear stores W as [out, in]; we initialize in that shape and
    pre-transpose to [in, out] for the kernel. Biases are kept 2-D [1, out].
    All stored in f32; the wrapper pads/casts for the kernel.
    """
    dims = [(D_IN, D_H1), (D_H1, D_Z), (D_Z, D_H2), (D_H2, D_OUT)]
    params = {}
    for idx, (din, dout) in enumerate(dims, start=1):
        key, kw, kb = jax.random.split(key, 3)
        bound = 1.0 / jnp.sqrt(jnp.float32(din))
        w_torch = jax.random.uniform(kw, (dout, din), jnp.float32, -bound, bound)
        b_torch = jax.random.uniform(kb, (dout,), jnp.float32, -bound, bound)
        params[f"w{idx}"] = jnp.transpose(w_torch)          # [in, out]
        params[f"b{idx}"] = b_torch.reshape(1, dout)        # [1, out]
    return params


def reference_forward(x, params, matmul_dtype=jnp.float32):
    """Pure-JAX reference of the PyTorch module semantics.

    `matmul_dtype` mirrors the kernel's matmul-operand precision (f32 accumulate).
    """
    def lin(h, w, b):
        return jnp.dot(h.astype(matmul_dtype), w.astype(matmul_dtype),
                       preferred_element_type=jnp.float32) + b

    h = _leaky_relu(lin(x, params["w1"], params["b1"]))
    h = _leaky_relu(lin(h, params["w2"], params["b2"]))
    h = _leaky_relu(lin(h, params["w3"], params["b3"]))
    return jax.nn.sigmoid(lin(h, params["w4"], params["b4"]))


if __name__ == "__main__":
    key = jax.random.PRNGKey(0)
    key, kx = jax.random.split(key)
    params = init_params(key)

    B = 256
    x = jax.random.uniform(kx, (B, D_IN), jnp.float32)  # MNIST-like flattened input

    # batch_tile=128 keeps >=2 parallel grid steps at this small test size
    # (so both v7x TensorCores are exercised); use the default 256-512 for
    # production-sized batches.
    out = denoiser_forward(x, params, batch_tile=128)
    out = jax.block_until_ready(out)

    ref = reference_forward(x, params, matmul_dtype=jnp.bfloat16)
    assert out.shape == (B, D_OUT)
    max_err = float(jnp.max(jnp.abs(out - ref)))
    assert max_err < 1e-2, f"mismatch vs reference: max abs err = {max_err}"

    print("KERNEL_OK")
</pallas_src>

<mosaic_0001>
module attributes {stable_mosaic.version = 11 : i64} {
  func.func @denoiser_kernel(%arg0: i32, %arg1: memref<128x896xbf16, #tpu.memory_space<vmem>>, %arg2: memref<896x400xbf16, #tpu.memory_space<vmem>>, %arg3: memref<1x400xf32, #tpu.memory_space<vmem>>, %arg4: memref<400x128xbf16, #tpu.memory_space<vmem>>, %arg5: memref<1x128xf32, #tpu.memory_space<vmem>>, %arg6: memref<128x400xbf16, #tpu.memory_space<vmem>>, %arg7: memref<1x400xf32, #tpu.memory_space<vmem>>, %arg8: memref<400x896xbf16, #tpu.memory_space<vmem>>, %arg9: memref<1x896xf32, #tpu.memory_space<vmem>>, %arg10: memref<128x896xf32, #tpu.memory_space<vmem>>) attributes {dimension_semantics = [#tpu.dimension_semantics<parallel>], iteration_bounds = array<i64: 2>, scalar_prefetch = 0 : i64, scratch_operands = 0 : i64, tpu.core_type = #tpu.core_type<tc>, window_params = [{transform_indices = @transform_0, window_bounds = array<i64: 128, 896>}, {pipeline_mode = #tpu.pipeline_mode<synchronous>, transform_indices = @transform_1, window_bounds = array<i64: 896, 400>}, {pipeline_mode = #tpu.pipeline_mode<synchronous>, transform_indices = @transform_2, window_bounds = array<i64: 1, 400>}, {pipeline_mode = #tpu.pipeline_mode<synchronous>, transform_indices = @transform_3, window_bounds = array<i64: 400, 128>}, {pipeline_mode = #tpu.pipeline_mode<synchronous>, transform_indices = @transform_4, window_bounds = array<i64: 1, 128>}, {pipeline_mode = #tpu.pipeline_mode<synchronous>, transform_indices = @transform_5, window_bounds = array<i64: 128, 400>}, {pipeline_mode = #tpu.pipeline_mode<synchronous>, transform_indices = @transform_6, window_bounds = array<i64: 1, 400>}, {pipeline_mode = #tpu.pipeline_mode<synchronous>, transform_indices = @transform_7, window_bounds = array<i64: 400, 896>}, {pipeline_mode = #tpu.pipeline_mode<synchronous>, transform_indices = @transform_8, window_bounds = array<i64: 1, 896>}, {transform_indices = @transform_9, window_bounds = array<i64: 128, 896>}]} {
    %c0 = arith.constant 0 : index
    %c0_0 = arith.constant 0 : index
    %0 = vector.load %arg1[%c0, %c0_0] : memref<128x896xbf16, #tpu.memory_space<vmem>>, vector<128x896xbf16>
    %c0_1 = arith.constant 0 : index
    %c0_2 = arith.constant 0 : index
    %1 = vector.load %arg2[%c0_1, %c0_2] : memref<896x400xbf16, #tpu.memory_space<vmem>>, vector<896x400xbf16>
    %cst = arith.constant dense<0.000000e+00> : vector<128x400xf32>
    %2 = tpu.matmul %0, %1, %cst {dimension_numbers = #tpu.dot_dimension_numbers<[1], [0], [0], [1], [0, 0, 1, 1], [], []>} : vector<128x896xbf16>, vector<896x400xbf16>, vector<128x400xf32> -> vector<128x400xf32>
    %c0_3 = arith.constant 0 : index
    %c0_4 = arith.constant 0 : index
    %3 = vector.load %arg3[%c0_3, %c0_4] : memref<1x400xf32, #tpu.memory_space<vmem>>, vector<1x400xf32>
    %4 = vector.broadcast %3 : vector<1x400xf32> to vector<128x400xf32>
    %5 = arith.addf %2, %4 : vector<128x400xf32>
    %cst_5 = arith.constant 0.000000e+00 : f32
    %6 = vector.broadcast %cst_5 : f32 to vector<128x400xf32>
    %7 = arith.cmpf ogt, %5, %6 : vector<128x400xf32>
    %cst_6 = arith.constant 2.000000e-01 : f32
    %8 = vector.broadcast %cst_6 : f32 to vector<128x400xf32>
    %9 = arith.mulf %8, %5 : vector<128x400xf32>
    %10 = arith.select %7, %5, %9 : vector<128x400xi1>, vector<128x400xf32>
    %11 = arith.truncf %10 : vector<128x400xf32> to vector<128x400xbf16>
    %c0_7 = arith.constant 0 : index
    %c0_8 = arith.constant 0 : index
    %12 = vector.load %arg4[%c0_7, %c0_8] : memref<400x128xbf16, #tpu.memory_space<vmem>>, vector<400x128xbf16>
    %cst_9 = arith.constant dense<0.000000e+00> : vector<128x128xf32>
    %13 = tpu.matmul %11, %12, %cst_9 {dimension_numbers = #tpu.dot_dimension_numbers<[1], [0], [0], [1], [0, 0, 1, 1], [], []>} : vector<128x400xbf16>, vector<400x128xbf16>, vector<128x128xf32> -> vector<128x128xf32>
    %c0_10 = arith.constant 0 : index
    %c0_11 = arith.constant 0 : index
    %14 = vector.load %arg5[%c0_10, %c0_11] : memref<1x128xf32, #tpu.memory_space<vmem>>, vector<1x128xf32>
    %15 = vector.broadcast %14 : vector<1x128xf32> to vector<128x128xf32>
    %16 = arith.addf %13, %15 : vector<128x128xf32>
    %cst_12 = arith.constant 0.000000e+00 : f32
    %17 = vector.broadcast %cst_12 : f32 to vector<128x128xf32>
    %18 = arith.cmpf ogt, %16, %17 : vector<128x128xf32>
    %cst_13 = arith.constant 2.000000e-01 : f32
    %19 = vector.broadcast %cst_13 : f32 to vector<128x128xf32>
    %20 = arith.mulf %19, %16 : vector<128x128xf32>
    %21 = arith.select %18, %16, %20 : vector<128x128xi1>, vector<128x128xf32>
    %22 = arith.truncf %21 : vector<128x128xf32> to vector<128x128xbf16>
    %c0_14 = arith.constant 0 : index
    %c0_15 = arith.constant 0 : index
    %23 = vector.load %arg6[%c0_14, %c0_15] : memref<128x400xbf16, #tpu.memory_space<vmem>>, vector<128x400xbf16>
    %cst_16 = arith.constant dense<0.000000e+00> : vector<128x400xf32>
    %24 = tpu.matmul %22, %23, %cst_16 {dimension_numbers = #tpu.dot_dimension_numbers<[1], [0], [0], [1], [0, 0, 1, 1], [], []>} : vector<128x128xbf16>, vector<128x400xbf16>, vector<128x400xf32> -> vector<128x400xf32>
    %c0_17 = arith.constant 0 : index
    %c0_18 = arith.constant 0 : index
    %25 = vector.load %arg7[%c0_17, %c0_18] : memref<1x400xf32, #tpu.memory_space<vmem>>, vector<1x400xf32>
    %26 = vector.broadcast %25 : vector<1x400xf32> to vector<128x400xf32>
    %27 = arith.addf %24, %26 : vector<128x400xf32>
    %cst_19 = arith.constant 0.000000e+00 : f32
    %28 = vector.broadcast %cst_19 : f32 to vector<128x400xf32>
    %29 = arith.cmpf ogt, %27, %28 : vector<128x400xf32>
    %cst_20 = arith.constant 2.000000e-01 : f32
    %30 = vector.broadcast %cst_20 : f32 to vector<128x400xf32>
    %31 = arith.mulf %30, %27 : vector<128x400xf32>
    %32 = arith.select %29, %27, %31 : vector<128x400xi1>, vector<128x400xf32>
    %33 = arith.truncf %32 : vector<128x400xf32> to vector<128x400xbf16>
    %c0_21 = arith.constant 0 : index
    %c0_22 = arith.constant 0 : index
    %34 = vector.load %arg8[%c0_21, %c0_22] : memref<400x896xbf16, #tpu.memory_space<vmem>>, vector<400x896xbf16>
    %cst_23 = arith.constant dense<0.000000e+00> : vector<128x896xf32>
    %35 = tpu.matmul %33, %34, %cst_23 {dimension_numbers = #tpu.dot_dimension_numbers<[1], [0], [0], [1], [0, 0, 1, 1], [], []>} : vector<128x400xbf16>, vector<400x896xbf16>, vector<128x896xf32> -> vector<128x896xf32>
    %c0_24 = arith.constant 0 : index
    %c0_25 = arith.constant 0 : index
    %36 = vector.load %arg9[%c0_24, %c0_25] : memref<1x896xf32, #tpu.memory_space<vmem>>, vector<1x896xf32>
    %37 = vector.broadcast %36 : vector<1x896xf32> to vector<128x896xf32>
    %38 = arith.addf %35, %37 : vector<128x896xf32>
    %cst_26 = arith.constant 0.000000e+00 : f32
    %39 = vector.broadcast %cst_26 : f32 to vector<128x896xf32>
    %40 = arith.subf %39, %38 : vector<128x896xf32>
    %41 = math.exp %40 : vector<128x896xf32>
    %cst_27 = arith.constant 1.000000e+00 : f32
    %42 = vector.broadcast %cst_27 : f32 to vector<128x896xf32>
    %43 = arith.addf %42, %41 : vector<128x896xf32>
    %44 = tpu.reciprocal %43 {approx = true} : vector<128x896xf32> -> vector<128x896xf32>
    %c0_28 = arith.constant 0 : index
    %c0_29 = arith.constant 0 : index
    %45 = vector.load %arg10[%c0_28, %c0_29] : memref<128x896xf32, #tpu.memory_space<vmem>>, vector<128x896xf32>
    tpu.vector_store %arg10[%c0_28, %c0_29], %44 {strides = array<i32>} : memref<128x896xf32, #tpu.memory_space<vmem>>, vector<128x896xf32>,
    return
  }
  func.func @transform_0(%arg0: i32) -> (i32, i32) {
    %c0_i32 = arith.constant 0 : i32
    %c0_i32_0 = arith.constant 0 : i32
    return %arg0, %c0_i32 : i32, i32
  }
  func.func @transform_1(%arg0: i32) -> (i32, i32) {
    %c0_i32 = arith.constant 0 : i32
    %c0_i32_0 = arith.constant 0 : i32
    %c0_i32_1 = arith.constant 0 : i32
    return %c0_i32, %c0_i32_0 : i32, i32
  }
  func.func @transform_2(%arg0: i32) -> (i32, i32) {
    %c0_i32 = arith.constant 0 : i32
    %c0_i32_0 = arith.constant 0 : i32
    %c0_i32_1 = arith.constant 0 : i32
    return %c0_i32, %c0_i32_0 : i32, i32
  }
  func.func @transform_3(%arg0: i32) -> (i32, i32) {
    %c0_i32 = arith.constant 0 : i32
    %c0_i32_0 = arith.constant 0 : i32
    %c0_i32_1 = arith.constant 0 : i32
    return %c0_i32, %c0_i32_0 : i32, i32
  }
  func.func @transform_4(%arg0: i32) -> (i32, i32) {
    %c0_i32 = arith.constant 0 : i32
    %c0_i32_0 = arith.constant 0 : i32
    %c0_i32_1 = arith.constant 0 : i32
    return %c0_i32, %c0_i32_0 : i32, i32
  }
  func.func @transform_5(%arg0: i32) -> (i32, i32) {
    %c0_i32 = arith.constant 0 : i32
    %c0_i32_0 = arith.constant 0 : i32
    %c0_i32_1 = arith.constant 0 : i32
    return %c0_i32, %c0_i32_0 : i32, i32
  }
  func.func @transform_6(%arg0: i32) -> (i32, i32) {
    %c0_i32 = arith.constant 0 : i32
    %c0_i32_0 = arith.constant 0 : i32
    %c0_i32_1 = arith.constant 0 : i32
    return %c0_i32, %c0_i32_0 : i32, i32
  }
  func.func @transform_7(%arg0: i32) -> (i32, i32) {
    %c0_i32 = arith.constant 0 : i32
    %c0_i32_0 = arith.constant 0 : i32
    %c0_i32_1 = arith.constant 0 : i32
    return %c0_i32, %c0_i32_0 : i32, i32
  }
  func.func @transform_8(%arg0: i32) -> (i32, i32) {
    %c0_i32 = arith.constant 0 : i32
    %c0_i32_0 = arith.constant 0 : i32
    %c0_i32_1 = arith.constant 0 : i32
    return %c0_i32, %c0_i32_0 : i32, i32
  }
  func.func @transform_9(%arg0: i32) -> (i32, i32) {
    %c0_i32 = arith.constant 0 : i32
    %c0_i32_0 = arith.constant 0 : i32
    return %arg0, %c0_i32 : i32, i32
  }
}

</mosaic_0001>

<llo_original>
// kernel: denoiser_forward.1
$region0: #{denoiser_forward.1}
  #allocation0 [shape = 'u32[]', space=smem, size = 0x4, offset = 0x4, fixed_abs, tag = 'smem constant byte address 0x4 - core index']
  #allocation1 [shape = 'u32[144,128]{1,0:T(1,128)}', space=vmem, size = 0x12000, scoped, tag = 'internal scratch']
  %s0 = inlined_call_operand.vmem [shape: bf16[256,896], index: 0, kind: input, shape index: {}]
  %s1 = inlined_call_operand.vmem [shape: bf16[896,400], index: 1, kind: input, shape index: {}]
  %s2 = inlined_call_operand.vmem [shape: f32[1,400], index: 2, kind: input, shape index: {}]
  %s3 = inlined_call_operand.vmem [shape: bf16[400,128], index: 3, kind: input, shape index: {}]
  %s4 = inlined_call_operand.vmem [shape: f32[1,128], index: 4, kind: input, shape index: {}]
  %s5 = inlined_call_operand.vmem [shape: bf16[128,400], index: 5, kind: input, shape index: {}]
  %s6 = inlined_call_operand.vmem [shape: f32[1,400], index: 6, kind: input, shape index: {}]
  %s7 = inlined_call_operand.vmem [shape: bf16[400,896], index: 7, kind: input, shape index: {}]
  %s8 = inlined_call_operand.vmem [shape: f32[1,896], index: 8, kind: input, shape index: {}]
  %s9 = inlined_call_operand.vmem [shape: f32[256,896], index: 9, kind: output, shape index: {}]
  %s10 = sld [smem:[#allocation0]]
  $region69: #{denoiser_forward.1} parent=0
    _
  %s12 = ssub.s32 1, %s10
  %s13 = scalar_select 0, %s12, %s10
  loop: start=0, step=1, limit=4
  $region2: #{denoiser_forward.1} parent=0 // loop_pre_header
    _
  $region3: #{denoiser_forward.1} parent=0 // loop_header
    %s15 = sphi 0, %s19
    %p16 = scmp.ge.s32.totalorder %s15, 4
    %s25 = sphi 0, %s27
    %s28 = sphi 0, %s25
    %s29 = sphi 0, %s28
    %s45 = sphi 0, %s29
    %s49 = sphi 0, %s49
    %s51 = sphi 0, %s49
    %s52 = sphi 0, %s51
    %s66 = sphi 0, %s52
    %s70 = sphi 0, %s70
    %s72 = sphi 0, %s70
    %s73 = sphi 0, %s72
    %s87 = sphi 0, %s73
    %s91 = sphi 0, %s91
    %s93 = sphi 0, %s91
    %s94 = sphi 0, %s93
    %s108 = sphi 0, %s94
    %s112 = sphi 0, %s112
    %s114 = sphi 0, %s112
    %s115 = sphi 0, %s114
    %s129 = sphi 0, %s115
    %s133 = sphi 0, %s133
    %s135 = sphi 0, %s133
    %s136 = sphi 0, %s135
    %s150 = sphi 0, %s136
    %s154 = sphi 0, %s154
    %s156 = sphi 0, %s154
    %s157 = sphi 0, %s156
    %s171 = sphi 0, %s157
    %s175 = sphi 0, %s175
    %s177 = sphi 0, %s175
    %s178 = sphi 0, %s177
    %s192 = sphi 0, %s178
    %s196 = sphi 0, %s196
    %s198 = sphi 0, %s196
    %s199 = sphi 0, %s198
    %s213 = sphi 0, %s199
    %s219 = sphi 0, %s221
    %s222 = sphi 0, %s219
    %s223 = sphi 0, %s222
    %s239 = sphi 0, %s223
  $region4: #{denoiser_forward.1} parent=0 // loop_header_branch
    %18 = sbr.rel (%p16) target = $region8
  $region5: #{denoiser_forward.1} parent=0 // loop_body
    %s20 = ssub.s32 %s15, 1
    %s21 = ssub.s32 %s15, 2
    %s22 = sadd.s32 %s15, 1
    %s23 = ssub.s32 %s15, %s22
    %p24 = scmp.eq.s32.totalorder %s23, 0
    %s26 = sadd.s32 %s25, 1
    %s27 = scalar_select %p24, %s25, %s26
    %p30 = pneg %p24
    %p31 = scmp.eq.s32.totalorder %s15, 1
    %p32 = por %p30, %p31
    %p33 = scmp.ne.s32.totalorder %s25, %s28
    %p34 = scmp.eq.s32.totalorder %s15, 0
    %p35 = por %p33, %p34
    %p36 = scmp.ne.s32.totalorder %s25, %s28
    %p37 = scmp.eq.s32.totalorder %s20, 1
    %p38 = por %p36, %p37
    %p39 = scmp.ne.s32.totalorder %s28, %s29
    %p40 = scmp.eq.s32.totalorder %s20, 0
    %p41 = por %p39, %p40
    %p42 = scmp.ne.s32.totalorder %s28, %s29
    %p43 = scmp.eq.s32.totalorder %s21, 1
    %p44 = por %p42, %p43
    %p46 = scmp.ne.s32.totalorder %s29, %s45
    %p47 = scmp.eq.s32.totalorder %s21, 0
    %p48 = por %p46, %p47
    %s50 = sadd.s32 %s49, 1
    %p53 = scmp.eq.s32.totalorder %s15, 1
    %p54 = scmp.ne.s32.totalorder %s49, %s51
    %p55 = scmp.eq.s32.totalorder %s15, 0
    %p56 = por %p54, %p55
    %p57 = scmp.ne.s32.totalorder %s49, %s51
    %p58 = scmp.eq.s32.totalorder %s20, 1
    %p59 = por %p57, %p58
    %p60 = scmp.ne.s32.totalorder %s51, %s52
    %p61 = scmp.eq.s32.totalorder %s20, 0
    %p62 = por %p60, %p61
    %p63 = scmp.ne.s32.totalorder %s51, %s52
    %p64 = scmp.eq.s32.totalorder %s21, 1
    %p65 = por %p63, %p64
    %p67 = scmp.ne.s32.totalorder %s52, %s66
    %p68 = scmp.eq.s32.totalorder %s21, 0
    %p69 = por %p67, %p68
    %s71 = sadd.s32 %s70, 1
    %p74 = scmp.eq.s32.totalorder %s15, 1
    %p75 = scmp.ne.s32.totalorder %s70, %s72
    %p76 = scmp.eq.s32.totalorder %s15, 0
    %p77 = por %p75, %p76
    %p78 = scmp.ne.s32.totalorder %s70, %s72
    %p79 = scmp.eq.s32.totalorder %s20, 1
    %p80 = por %p78, %p79
    %p81 = scmp.ne.s32.totalorder %s72, %s73
    %p82 = scmp.eq.s32.totalorder %s20, 0
    %p83 = por %p81, %p82
    %p84 = scmp.ne.s32.totalorder %s72, %s73
    %p85 = scmp.eq.s32.totalorder %s21, 1
    %p86 = por %p84, %p85
    %p88 = scmp.ne.s32.totalorder %s73, %s87
    %p89 = scmp.eq.s32.totalorder %s21, 0
    %p90 = por %p88, %p89
    %s92 = sadd.s32 %s91, 1
    %p95 = scmp.eq.s32.totalorder %s15, 1
    %p96 = scmp.ne.s32.totalorder %s91, %s93
    %p97 = scmp.eq.s32.totalorder %s15, 0
    %p98 = por %p96, %p97
    %p99 = scmp.ne.s32.totalorder %s91, %s93
    %p100 = scmp.eq.s32.totalorder %s20, 1
    %p101 = por %p99, %p100
    %p102 = scmp.ne.s32.totalorder %s93, %s94
    %p103 = scmp.eq.s32.totalorder %s20, 0
    %p104 = por %p102, %p103
    %p105 = scmp.ne.s32.totalorder %s93, %s94
    %p106 = scmp.eq.s32.totalorder %s21, 1
    %p107 = por %p105, %p106
    %p109 = scmp.ne.s32.totalorder %s94, %s108
    %p110 = scmp.eq.s32.totalorder %s21, 0
    %p111 = por %p109, %p110
    %s113 = sadd.s32 %s112, 1
    %p116 = scmp.eq.s32.totalorder %s15, 1
    %p117 = scmp.ne.s32.totalorder %s112, %s114
    %p118 = scmp.eq.s32.totalorder %s15, 0
    %p119 = por %p117, %p118
    %p120 = scmp.ne.s32.totalorder %s112, %s114
    %p121 = scmp.eq.s32.totalorder %s20, 1
    %p122 = por %p120, %p121
    %p123 = scmp.ne.s32.totalorder %s114, %s115
    %p124 = scmp.eq.s32.totalorder %s20, 0
    %p125 = por %p123, %p124
    %p126 = scmp.ne.s32.totalorder %s114, %s115
    %p127 = scmp.eq.s32.totalorder %s21, 1
    %p128 = por %p126, %p127
    %p130 = scmp.ne.s32.totalorder %s115, %s129
    %p131 = scmp.eq.s32.totalorder %s21, 0
    %p132 = por %p130, %p131
    %s134 = sadd.s32 %s133, 1
    %p137 = scmp.eq.s32.totalorder %s15, 1
    %p138 = scmp.ne.s32.totalorder %s133, %s135
    %p139 = scmp.eq.s32.totalorder %s15, 0
    %p140 = por %p138, %p139
    %p141 = scmp.ne.s32.totalorder %s133, %s135
    %p142 = scmp.eq.s32.totalorder %s20, 1
    %p143 = por %p141, %p142
    %p144 = scmp.ne.s32.totalorder %s135, %s136
    %p145 = scmp.eq.s32.totalorder %s20, 0
    %p146 = por %p144, %p145
    %p147 = scmp.ne.s32.totalorder %s135, %s136
    %p148 = scmp.eq.s32.totalorder %s21, 1
    %p149 = por %p147, %p148
    %p151 = scmp.ne.s32.totalorder %s136, %s150
    %p152 = scmp.eq.s32.totalorder %s21, 0
    %p153 = por %p151, %p152
    %s155 = sadd.s32 %s154, 1
    %p158 = scmp.eq.s32.totalorder %s15, 1
    %p159 = scmp.ne.s32.totalorder %s154, %s156
    %p160 = scmp.eq.s32.totalorder %s15, 0
    %p161 = por %p159, %p160
    %p162 = scmp.ne.s32.totalorder %s154, %s156
    %p163 = scmp.eq.s32.totalorder %s20, 1
    %p164 = por %p162, %p163
    %p165 = scmp.ne.s32.totalorder %s156, %s157
    %p166 = scmp.eq.s32.totalorder %s20, 0
    %p167 = por %p165, %p166
    %p168 = scmp.ne.s32.totalorder %s156, %s157
    %p169 = scmp.eq.s32.totalorder %s21, 1
    %p170 = por %p168, %p169
    %p172 = scmp.ne.s32.totalorder %s157, %s171
    %p173 = scmp.eq.s32.totalorder %s21, 0
    %p174 = por %p172, %p173
    %s176 = sadd.s32 %s175, 1
    %p179 = scmp.eq.s32.totalorder %s15, 1
    %p180 = scmp.ne.s32.totalorder %s175, %s177
    %p181 = scmp.eq.s32.totalorder %s15, 0
    %p182 = por %p180, %p181
    %p183 = scmp.ne.s32.totalorder %s175, %s177
    %p184 = scmp.eq.s32.totalorder %s20, 1
    %p185 = por %p183, %p184
    %p186 = scmp.ne.s32.totalorder %s177, %s178
    %p187 = scmp.eq.s32.totalorder %s20, 0
    %p188 = por %p186, %p187
    %p189 = scmp.ne.s32.totalorder %s177, %s178
    %p190 = scmp.eq.s32.totalorder %s21, 1
    %p191 = por %p189, %p190
    %p193 = scmp.ne.s32.totalorder %s178, %s192
    %p194 = scmp.eq.s32.totalorder %s21, 0
    %p195 = por %p193, %p194
    %s197 = sadd.s32 %s196, 1
    %p200 = scmp.eq.s32.totalorder %s15, 1
    %p201 = scmp.ne.s32.totalorder %s196, %s198
    %p202 = scmp.eq.s32.totalorder %s15, 0
    %p203 = por %p201, %p202
    %p204 = scmp.ne.s32.totalorder %s196, %s198
    %p205 = scmp.eq.s32.totalorder %s20, 1
    %p206 = por %p204, %p205
    %p207 = scmp.ne.s32.totalorder %s198, %s199
    %p208 = scmp.eq.s32.totalorder %s20, 0
    %p209 = por %p207, %p208
    %p210 = scmp.ne.s32.totalorder %s198, %s199
    %p211 = scmp.eq.s32.totalorder %s21, 1
    %p212 = por %p210, %p211
    %p214 = scmp.ne.s32.totalorder %s199, %s213
    %p215 = scmp.eq.s32.totalorder %s21, 0
    %p216 = por %p214, %p215
    %s217 = ssub.s32 %s15, %s22
    %p218 = scmp.eq.s32.totalorder %s217, 0
    %s220 = sadd.s32 %s219, 1
    %s221 = scalar_select %p218, %s219, %s220
    %p224 = pneg %p218
    %p225 = scmp.eq.s32.totalorder %s15, 1
    %p226 = por %p224, %p225
    %p227 = scmp.ne.s32.totalorder %s219, %s222
    %p228 = scmp.eq.s32.totalorder %s15, 0
    %p229 = por %p227, %p228
    %p230 = scmp.ne.s32.totalorder %s219, %s222
    %p231 = scmp.eq.s32.totalorder %s20, 1
    %p232 = por %p230, %p231
    %p233 = scmp.ne.s32.totalorder %s222, %s223
    %p234 = scmp.eq.s32.totalorder %s20, 0
    %p235 = por %p233, %p234
    %p236 = scmp.ne.s32.totalorder %s222, %s223
    %p237 = scmp.eq.s32.totalorder %s21, 1
    %p238 = por %p236, %p237
    %p240 = scmp.ne.s32.totalorder %s223, %s239
    %p241 = scmp.eq.s32.totalorder %s21, 0
    %p242 = por %p240, %p241
    %p243 = scmp.le.s32.totalorder 1, %s15
    %p244 = scmp.lt.s32.totalorder %s15, 3
    %p245 = pnand %p243, %p244
    %p246 = pneg %p245
    // Predicated region
    $region9: #{denoiser_forward.1} parent=5 // pred_check
      _
    $region10: #{denoiser_forward.1} parent=5 // pred_check_branch
      %248 = sbr.rel (%p245) target = $region12
    $region11: #{denoiser_forward.1} parent=5 // pred_region
      %s249 = ssub.s32 %s15, 1
      // Predicated region
      $region13: #{denoiser_forward.1} parent=11 // pred_check
        %p250 = pneg %p62
      $region14: #{denoiser_forward.1} parent=11 // pred_check_branch
        %252 = sbr.rel (%p250) target = $region16
      $region15: #{denoiser_forward.1} parent=11 // pred_region
        _
      $region16: #{denoiser_forward.1} parent=11 // pred_fallthru
        _
      // Predicated region
      $region17: #{denoiser_forward.1} parent=11 // pred_check
        %p253 = pneg %p83
      $region18: #{denoiser_forward.1} parent=11 // pred_check_branch
        %255 = sbr.rel (%p253) target = $region20
      $region19: #{denoiser_forward.1} parent=11 // pred_region
        _
      $region20: #{denoiser_forward.1} parent=11 // pred_fallthru
        _
      // Predicated region
      $region21: #{denoiser_forward.1} parent=11 // pred_check
        %p256 = pneg %p104
      $region22: #{denoiser_forward.1} parent=11 // pred_check_branch
        %258 = sbr.rel (%p256) target = $region24
      $region23: #{denoiser_forward.1} parent=11 // pred_region
        _
      $region24: #{denoiser_forward.1} parent=11 // pred_fallthru
        _
      // Predicated region
      $region25: #{denoiser_forward.1} parent=11 // pred_check
        %p259 = pneg %p125
      $region26: #{denoiser_forward.1} parent=11 // pred_check_branch
        %261 = sbr.rel (%p259) target = $region28
      $region27: #{denoiser_forward.1} parent=11 // pred_region
        _
      $region28: #{denoiser_forward.1} parent=11 // pred_fallthru
        _
      // Predicated region
      $region29: #{denoiser_forward.1} parent=11 // pred_check
        %p262 = pneg %p146
      $region30: #{denoiser_forward.1} parent=11 // pred_check_branch
        %264 = sbr.rel (%p262) target = $region32
      $region31: #{denoiser_forward.1} parent=11 // pred_region
        _
      $region32: #{denoiser_forward.1} parent=11 // pred_fallthru
        _
      // Predicated region
      $region33: #{denoiser_forward.1} parent=11 // pred_check
        %p265 = pneg %p167
      $region34: #{denoiser_forward.1} parent=11 // pred_check_branch
        %267 = sbr.rel (%p265) target = $region36
      $region35: #{denoiser_forward.1} parent=11 // pred_region
        _
      $region36: #{denoiser_forward.1} parent=11 // pred_fallthru
        _
      // Predicated region
      $region37: #{denoiser_forward.1} parent=11 // pred_check
        %p268 = pneg %p188
      $region38: #{denoiser_forward.1} parent=11 // pred_check_branch
        %270 = sbr.rel (%p268) target = $region40
      $region39: #{denoiser_forward.1} parent=11 // pred_region
        _
      $region40: #{denoiser_forward.1} parent=11 // pred_fallthru
        _
      // Predicated region
      $region41: #{denoiser_forward.1} parent=11 // pred_check
        %p271 = pneg %p209
      $region42: #{denoiser_forward.1} parent=11 // pred_check_branch
        %273 = sbr.rel (%p271) target = $region44
      $region43: #{denoiser_forward.1} parent=11 // pred_region
        _
      $region44: #{denoiser_forward.1} parent=11 // pred_fallthru
        _
    $region12: #{denoiser_forward.1} parent=5 // pred_fallthru
      _
    %p274 = scmp.lt.s32.totalorder %s15, 2
    // Predicated region
    $region45: #{denoiser_forward.1} parent=5 // pred_check
      %p275 = pneg %p274
    $region46: #{denoiser_forward.1} parent=5 // pred_check_branch
      %277 = sbr.rel (%p275) target = $region48
    $region47: #{denoiser_forward.1} parent=5 // pred_region
      // Predicated region
      $region49: #{denoiser_forward.1} parent=47 // pred_check
        %p278 = pneg %p35
      $region50: #{denoiser_forward.1} parent=47 // pred_check_branch
        %280 = sbr.rel (%p278) target = $region52
      $region51: #{denoiser_forward.1} parent=47 // pred_region
        %s281 = smul.u32 16, %s15
        %p282 = scmp.lt.s32.totalorder %s281, 31
        %s283 = scalar_select %p282, %s281, 31
        %s284 = smul.addr %s283, 7
        %s285 = smul.addr %s284, 4
        %s286 = scalar_lea.vmem %s0, %s285
        %s287 = smul.u32 16, %s15
      $region52: #{denoiser_forward.1} parent=47 // pred_fallthru
        _
    $region48: #{denoiser_forward.1} parent=5 // pred_fallthru
      _
    %p288 = scmp.le.s32.totalorder 1, %s15
    %p289 = scmp.lt.s32.totalorder %s15, 3
    %p290 = pnand %p288, %p289
    %p291 = pneg %p290
    // Predicated region
    $region53: #{denoiser_forward.1} parent=5 // pred_check
      _
    $region54: #{denoiser_forward.1} parent=5 // pred_check_branch
      %293 = sbr.rel (%p290) target = $region56
    $region55: #{denoiser_forward.1} parent=5 // pred_region
      %s294 = ssub.s32 %s15, 1
      %s295 = smul.u32 16, %s20
      %p296 = scmp.lt.s32.totalorder %s295, 31
      %s297 = scalar_select %p296, %s295, 31
      %s298 = smul.addr %s297, 7
      %s299 = smul.addr %s298, 4
      %s300 = scalar_lea.vmem %s0, %s299
      %p301 = pneg %p41
      %p302 = pneg %p38
      %p303 = pneg %p62
      %p304 = pneg %p59
      %p305 = pneg %p83
      %p306 = pneg %p80
      %p307 = pneg %p104
      %p308 = pneg %p101
      %p309 = pneg %p125
      %p310 = pneg %p122
      %p311 = pneg %p146
      %p312 = pneg %p143
      %p313 = pneg %p167
      %p314 = pneg %p164
      %p315 = pneg %p188
      %p316 = pneg %p185
      %p317 = pneg %p209
      %p318 = pneg %p206
      %p319 = pneg %p235
      %p320 = pneg %p232
      %s321 = smul.u32 16, %s20
      %p322 = scmp.lt.s32.totalorder %s321, 31
      %s323 = scalar_select %p322, %s321, 31
      %s324 = smul.addr %s323, 7
      %s325 = smul.addr %s324, 8
      %s326 = scalar_lea.vmem %s9, %s325
      %s327 = smul.u32 16, %s20
      %p328 = scmp.lt.s32.totalorder %s327, 31
      %s329 = scalar_select %p328, %s327, 31
      %s330 = smul.addr %s329, 7
      %s331 = smul.addr %s330, 4
      %s332 = scalar_lea.vmem %s0, %s331
      %s333 = smul.u32 16, %s20
      %s334 = smul.u32 16, %s20
      %p335 = scmp.lt.s32.totalorder %s334, 31
      %s336 = scalar_select %p335, %s334, 31
      %s337 = smul.addr %s336, 7
      %s338 = smul.addr %s337, 8
      %s339 = scalar_lea.vmem %s9, %s338
      %s340 = smul.u32 16, %s20
      %v342 = vld [vmem:[%s332] sm:$0xff]
      %v343 = vld [vmem:[%s332 + $0x8] sm:$0xff]
      %v344 = vld [vmem:[%s332 + $0x10] sm:$0xff]
      %v345 = vld [vmem:[%s332 + $0x18] sm:$0xf]
      %v346 = vld [vmem:[%s332 + $0x1c] sm:$0xff]
      %v347 = vld [vmem:[%s332 + $0x24] sm:$0xff]
      %v348 = vld [vmem:[%s332 + $0x2c] sm:$0xff]
      %v349 = vld [vmem:[%s332 + $0x34] sm:$0xf]
      %v350 = vld [vmem:[%s332 + $0x38] sm:$0xff]
      %v351 = vld [vmem:[%s332 + $0x40] sm:$0xff]
      %v352 = vld [vmem:[%s332 + $0x48] sm:$0xff]
      %v353 = vld [vmem:[%s332 + $0x50] sm:$0xf]
      %v354 = vld [vmem:[%s332 + $0x54] sm:$0xff]
      %v355 = vld [vmem:[%s332 + $0x5c] sm:$0xff]
      %v356 = vld [vmem:[%s332 + $0x64] sm:$0xff]
      %v357 = vld [vmem:[%s332 + $0x6c] sm:$0xf]
      %v358 = vld [vmem:[%s332 + $0x70] sm:$0xff]
      %v359 = vld [vmem:[%s332 + $0x78] sm:$0xff]
      %v360 = vld [vmem:[%s332 + $0x80] sm:$0xff]
      %v361 = vld [vmem:[%s332 + $0x88] sm:$0xf]
      %v362 = vld [vmem:[%s332 + $0x8c] sm:$0xff]
      %v363 = vld [vmem:[%s332 + $0x94] sm:$0xff]
      %v364 = vld [vmem:[%s332 + $0x9c] sm:$0xff]
      %v365 = vld [vmem:[%s332 + $0xa4] sm:$0xf]
      %v366 = vld [vmem:[%s332 + $0xa8] sm:$0xff]
      %v367 = vld [vmem:[%s332 + $0xb0] sm:$0xff]
      %v368 = vld [vmem:[%s332 + $0xb8] sm:$0xff]
      %v369 = vld [vmem:[%s332 + $0xc0] sm:$0xf]
      %v370 = vld [vmem:[%s332 + $0xc4] sm:$0xff]
      %v371 = vld [vmem:[%s332 + $0xcc] sm:$0xff]
      %v372 = vld [vmem:[%s332 + $0xd4] sm:$0xff]
      %v373 = vld [vmem:[%s332 + $0xdc] sm:$0xf]
      %v374 = vld [vmem:[%s332 + $0xe0] sm:$0xff]
      %v375 = vld [vmem:[%s332 + $0xe8] sm:$0xff]
      %v376 = vld [vmem:[%s332 + $0xf0] sm:$0xff]
      %v377 = vld [vmem:[%s332 + $0xf8] sm:$0xf]
      %v378 = vld [vmem:[%s332 + $0xfc] sm:$0xff]
      %v379 = vld [vmem:[%s332 + $0x104] sm:$0xff]
      %v380 = vld [vmem:[%s332 + $0x10c] sm:$0xff]
      %v381 = vld [vmem:[%s332 + $0x114] sm:$0xf]
      %v382 = vld [vmem:[%s332 + $0x118] sm:$0xff]
      %v383 = vld [vmem:[%s332 + $0x120] sm:$0xff]
      %v384 = vld [vmem:[%s332 + $0x128] sm:$0xff]
      %v385 = vld [vmem:[%s332 + $0x130] sm:$0xf]
      %v386 = vld [vmem:[%s332 + $0x134] sm:$0xff]
      %v387 = vld [vmem:[%s332 + $0x13c] sm:$0xff]
      %v388 = vld [vmem:[%s332 + $0x144] sm:$0xff]
      %v389 = vld [vmem:[%s332 + $0x14c] sm:$0xf]
      %v390 = vld [vmem:[%s332 + $0x150] sm:$0xff]
      %v391 = vld [vmem:[%s332 + $0x158] sm:$0xff]
      %v392 = vld [vmem:[%s332 + $0x160] sm:$0xff]
      %v393 = vld [vmem:[%s332 + $0x168] sm:$0xf]
      %v394 = vld [vmem:[%s332 + $0x16c] sm:$0xff]
      %v395 = vld [vmem:[%s332 + $0x174] sm:$0xff]
      %v396 = vld [vmem:[%s332 + $0x17c] sm:$0xff]
      %v397 = vld [vmem:[%s332 + $0x184] sm:$0xf]
      %v398 = vld [vmem:[%s332 + $0x188] sm:$0xff]
      %v399 = vld [vmem:[%s332 + $0x190] sm:$0xff]
      %v400 = vld [vmem:[%s332 + $0x198] sm:$0xff]
      %v401 = vld [vmem:[%s332 + $0x1a0] sm:$0xf]
      %v402 = vld [vmem:[%s332 + $0x1a4] sm:$0xff]
      %v403 = vld [vmem:[%s332 + $0x1ac] sm:$0xff]
      %v404 = vld [vmem:[%s332 + $0x1b4] sm:$0xff]
      %v405 = vld [vmem:[%s332 + $0x1bc] sm:$0xf]
      %v406 = vld [vmem:[%s1] sm:$0xff]
      %v407 = vld [vmem:[%s1 + $0x8] sm:$0xff]
      %v408 = vld [vmem:[%s1 + $0x10] sm:$0xff]
      %v409 = vld [vmem:[%s1 + $0x18] sm:$0xff]
      %v410 = vld [vmem:[%s1 + $0x20] sm:$0xff]
      %v411 = vld [vmem:[%s1 + $0x28] sm:$0xff]
      %v412 = vld [vmem:[%s1 + $0x30] sm:$0xff]
      %v413 = vld [vmem:[%s1 + $0x38] sm:$0xff]
      %v414 = vld [vmem:[%s1 + $0x40] sm:$0xff]
      %v415 = vld [vmem:[%s1 + $0x48] sm:$0xff]
      %v416 = vld [vmem:[%s1 + $0x50] sm:$0xff]
      %v417 = vld [vmem:[%s1 + $0x58] sm:$0xff]
      %v418 = vld [vmem:[%s1 + $0x60] sm:$0xff]
      %v419 = vld [vmem:[%s1 + $0x68] sm:$0xff]
      %v420 = vld [vmem:[%s1 + $0x70] sm:$0xff]
      %v421 = vld [vmem:[%s1 + $0x78] sm:$0xff]
      %v422 = vld [vmem:[%s1 + $0x80] sm:$0xff]
      %v423 = vld [vmem:[%s1 + $0x88] sm:$0xff]
      %v424 = vld [vmem:[%s1 + $0x90] sm:$0xff]
      %v425 = vld [vmem:[%s1 + $0x98] sm:$0xff]
      %v426 = vld [vmem:[%s1 + $0xa0] sm:$0xff]
      %v427 = vld [vmem:[%s1 + $0xa8] sm:$0xff]
      %v428 = vld [vmem:[%s1 + $0xb0] sm:$0xff]
      %v429 = vld [vmem:[%s1 + $0xb8] sm:$0xff]
      %v430 = vld [vmem:[%s1 + $0xc0] sm:$0xff]
      %v431 = vld [vmem:[%s1 + $0xc8] sm:$0xff]
      %v432 = vld [vmem:[%s1 + $0xd0] sm:$0xff]
      %v433 = vld [vmem:[%s1 + $0xd8] sm:$0xff]
      %v434 = vld [vmem:[%s1 + $0xe0] sm:$0xff]
      %v435 = vld [vmem:[%s1 + $0xe8] sm:$0xff]
      %v436 = vld [vmem:[%s1 + $0xf0] sm:$0xff]
      %v437 = vld [vmem:[%s1 + $0xf8] sm:$0xff]
      %v438 = vld [vmem:[%s1 + $0x100] sm:$0xff]
      %v439 = vld [vmem:[%s1 + $0x108] sm:$0xff]
      %v440 = vld [vmem:[%s1 + $0x110] sm:$0xff]
      %v441 = vld [vmem:[%s1 + $0x118] sm:$0xff]
      %v442 = vld [vmem:[%s1 + $0x120] sm:$0xff]
      %v443 = vld [vmem:[%s1 + $0x128] sm:$0xff]
      %v444 = vld [vmem:[%s1 + $0x130] sm:$0xff]
      %v445 = vld [vmem:[%s1 + $0x138] sm:$0xff]
      %v446 = vld [vmem:[%s1 + $0x140] sm:$0xff]
      %v447 = vld [vmem:[%s1 + $0x148] sm:$0xff]
      %v448 = vld [vmem:[%s1 + $0x150] sm:$0xff]
      %v449 = vld [vmem:[%s1 + $0x158] sm:$0xff]
      %v450 = vld [vmem:[%s1 + $0x160] sm:$0xff]
      %v451 = vld [vmem:[%s1 + $0x168] sm:$0xff]
      %v452 = vld [vmem:[%s1 + $0x170] sm:$0xff]
      %v453 = vld [vmem:[%s1 + $0x178] sm:$0xff]
      %v454 = vld [vmem:[%s1 + $0x180] sm:$0xff]
      %v455 = vld [vmem:[%s1 + $0x188] sm:$0xff]
      %v456 = vld [vmem:[%s1 + $0x190] sm:$0xff]
      %v457 = vld [vmem:[%s1 + $0x198] sm:$0xff]
      %v458 = vld [vmem:[%s1 + $0x1a0] sm:$0xff]
      %v459 = vld [vmem:[%s1 + $0x1a8] sm:$0xff]
      %v460 = vld [vmem:[%s1 + $0x1b0] sm:$0xff]
      %v461 = vld [vmem:[%s1 + $0x1b8] sm:$0xff]
      %v462 = vld [vmem:[%s1 + $0x1c0] sm:$0xff]
      %v463 = vld [vmem:[%s1 + $0x1c8] sm:$0xff]
      %v464 = vld [vmem:[%s1 + $0x1d0] sm:$0xff]
      %v465 = vld [vmem:[%s1 + $0x1d8] sm:$0xff]
      %v466 = vld [vmem:[%s1 + $0x1e0] sm:$0xff]
      %v467 = vld [vmem:[%s1 + $0x1e8] sm:$0xff]
      %v468 = vld [vmem:[%s1 + $0x1f0] sm:$0xff]
      %v469 = vld [vmem:[%s1 + $0x1f8] sm:$0xff]
      %v470 = vld [vmem:[%s1 + $0x200] sm:$0xff]
      %v471 = vld [vmem:[%s1 + $0x208] sm:$0xff]
      %v472 = vld [vmem:[%s1 + $0x210] sm:$0xff]
      %v473 = vld [vmem:[%s1 + $0x218] sm:$0xff]
      %v474 = vld [vmem:[%s1 + $0x220] sm:$0xff]
      %v475 = vld [vmem:[%s1 + $0x228] sm:$0xff]
      %v476 = vld [vmem:[%s1 + $0x230] sm:$0xff]
      %v477 = vld [vmem:[%s1 + $0x238] sm:$0xff]
      %v478 = vld [vmem:[%s1 + $0x240] sm:$0xff]
      %v479 = vld [vmem:[%s1 + $0x248] sm:$0xff]
      %v480 = vld [vmem:[%s1 + $0x250] sm:$0xff]
      %v481 = vld [vmem:[%s1 + $0x258] sm:$0xff]
      %v482 = vld [vmem:[%s1 + $0x260] sm:$0xff]
      %v483 = vld [vmem:[%s1 + $0x268] sm:$0xff]
      %v484 = vld [vmem:[%s1 + $0x270] sm:$0xff]
      %v485 = vld [vmem:[%s1 + $0x278] sm:$0xff]
      %v486 = vld [vmem:[%s1 + $0x280] sm:$0xff]
      %v487 = vld [vmem:[%s1 + $0x288] sm:$0xff]
      %v488 = vld [vmem:[%s1 + $0x290] sm:$0xff]
      %v489 = vld [vmem:[%s1 + $0x298] sm:$0xff]
      %v490 = vld [vmem:[%s1 + $0x2a0] sm:$0xff]
      %v491 = vld [vmem:[%s1 + $0x2a8] sm:$0xff]
      %v492 = vld [vmem:[%s1 + $0x2b0] sm:$0xff]
      %v493 = vld [vmem:[%s1 + $0x2b8] sm:$0xff]
      %v494 = vld [vmem:[%s1 + $0x2c0] sm:$0xff]
      %v495 = vld [vmem:[%s1 + $0x2c8] sm:$0xff]
      %v496 = vld [vmem:[%s1 + $0x2d0] sm:$0xff]
      %v497 = vld [vmem:[%s1 + $0x2d8] sm:$0xff]
      %v498 = vld [vmem:[%s1 + $0x2e0] sm:$0xff]
      %v499 = vld [vmem:[%s1 + $0x2e8] sm:$0xff]
      %v500 = vld [vmem:[%s1 + $0x2f0] sm:$0xff]
      %v501 = vld [vmem:[%s1 + $0x2f8] sm:$0xff]
      %v502 = vld [vmem:[%s1 + $0x300] sm:$0xff]
      %v503 = vld [vmem:[%s1 + $0x308] sm:$0xff]
      %v504 = vld [vmem:[%s1 + $0x310] sm:$0xff]
      %v505 = vld [vmem:[%s1 + $0x318] sm:$0xff]
      %v506 = vld [vmem:[%s1 + $0x320] sm:$0xff]
      %v507 = vld [vmem:[%s1 + $0x328] sm:$0xff]
      %v508 = vld [vmem:[%s1 + $0x330] sm:$0xff]
      %v509 = vld [vmem:[%s1 + $0x338] sm:$0xff]
      %v510 = vld [vmem:[%s1 + $0x340] sm:$0xff]
      %v511 = vld [vmem:[%s1 + $0x348] sm:$0xff]
      %v512 = vld [vmem:[%s1 + $0x350] sm:$0xff]
      %v513 = vld [vmem:[%s1 + $0x358] sm:$0xff]
      %v514 = vld [vmem:[%s1 + $0x360] sm:$0xff]
      %v515 = vld [vmem:[%s1 + $0x368] sm:$0xff]
      %v516 = vld [vmem:[%s1 + $0x370] sm:$0xff]
      %v517 = vld [vmem:[%s1 + $0x378] sm:$0xff]
      %v518 = vld [vmem:[%s1 + $0x380] sm:$0xff]
      %v519 = vld [vmem:[%s1 + $0x388] sm:$0xff]
      %v520 = vld [vmem:[%s1 + $0x390] sm:$0xff]
      %v521 = vld [vmem:[%s1 + $0x398] sm:$0xff]
      %v522 = vld [vmem:[%s1 + $0x3a0] sm:$0xff]
      %v523 = vld [vmem:[%s1 + $0x3a8] sm:$0xff]
      %v524 = vld [vmem:[%s1 + $0x3b0] sm:$0xff]
      %v525 = vld [vmem:[%s1 + $0x3b8] sm:$0xff]
      %v526 = vld [vmem:[%s1 + $0x3c0] sm:$0xff]
      %v527 = vld [vmem:[%s1 + $0x3c8] sm:$0xff]
      %v528 = vld [vmem:[%s1 + $0x3d0] sm:$0xff]
      %v529 = vld [vmem:[%s1 + $0x3d8] sm:$0xff]
      %v530 = vld [vmem:[%s1 + $0x3e0] sm:$0xff]
      %v531 = vld [vmem:[%s1 + $0x3e8] sm:$0xff]
      %v532 = vld [vmem:[%s1 + $0x3f0] sm:$0xff]
      %v533 = vld [vmem:[%s1 + $0x3f8] sm:$0xff]
      %v534 = vld [vmem:[%s1 + $0x400] sm:$0xff]
      %v535 = vld [vmem:[%s1 + $0x408] sm:$0xff]
      %v536 = vld [vmem:[%s1 + $0x410] sm:$0xff]
      %v537 = vld [vmem:[%s1 + $0x418] sm:$0xff]
      %v538 = vld [vmem:[%s1 + $0x420] sm:$0xff]
      %v539 = vld [vmem:[%s1 + $0x428] sm:$0xff]
      %v540 = vld [vmem:[%s1 + $0x430] sm:$0xff]
      %v541 = vld [vmem:[%s1 + $0x438] sm:$0xff]
      %v542 = vld [vmem:[%s1 + $0x440] sm:$0xff]
      %v543 = vld [vmem:[%s1 + $0x448] sm:$0xff]
      %v544 = vld [vmem:[%s1 + $0x450] sm:$0xff]
      %v545 = vld [vmem:[%s1 + $0x458] sm:$0xff]
      %v546 = vld [vmem:[%s1 + $0x460] sm:$0xff]
      %v547 = vld [vmem:[%s1 + $0x468] sm:$0xff]
      %v548 = vld [vmem:[%s1 + $0x470] sm:$0xff]
      %v549 = vld [vmem:[%s1 + $0x478] sm:$0xff]
      %v550 = vld [vmem:[%s1 + $0x480] sm:$0xff]
      %v551 = vld [vmem:[%s1 + $0x488] sm:$0xff]
      %v552 = vld [vmem:[%s1 + $0x490] sm:$0xff]
      %v553 = vld [vmem:[%s1 + $0x498] sm:$0xff]
      %v554 = vld [vmem:[%s1 + $0x4a0] sm:$0xff]
      %v555 = vld [vmem:[%s1 + $0x4a8] sm:$0xff]
      %v556 = vld [vmem:[%s1 + $0x4b0] sm:$0xff]
      %v557 = vld [vmem:[%s1 + $0x4b8] sm:$0xff]
      %v558 = vld [vmem:[%s1 + $0x4c0] sm:$0xff]
      %v559 = vld [vmem:[%s1 + $0x4c8] sm:$0xff]
      %v560 = vld [vmem:[%s1 + $0x4d0] sm:$0xff]
      %v561 = vld [vmem:[%s1 + $0x4d8] sm:$0xff]
      %v562 = vld [vmem:[%s1 + $0x4e0] sm:$0xff]
      %v563 = vld [vmem:[%s1 + $0x4e8] sm:$0xff]
      %v564 = vld [vmem:[%s1 + $0x4f0] sm:$0xff]
      %v565 = vld [vmem:[%s1 + $0x4f8] sm:$0xff]
      %v566 = vld [vmem:[%s1 + $0x500] sm:$0xff]
      %v567 = vld [vmem:[%s1 + $0x508] sm:$0xff]
      %v568 = vld [vmem:[%s1 + $0x510] sm:$0xff]
      %v569 = vld [vmem:[%s1 + $0x518] sm:$0xff]
      %v570 = vld [vmem:[%s1 + $0x520] sm:$0xff]
      %v571 = vld [vmem:[%s1 + $0x528] sm:$0xff]
      %v572 = vld [vmem:[%s1 + $0x530] sm:$0xff]
      %v573 = vld [vmem:[%s1 + $0x538] sm:$0xff]
      %v574 = vld [vmem:[%s1 + $0x540] sm:$0xff]
      %v575 = vld [vmem:[%s1 + $0x548] sm:$0xff]
      %v576 = vld [vmem:[%s1 + $0x550] sm:$0xff]
      %v577 = vld [vmem:[%s1 + $0x558] sm:$0xff]
      %v578 = vld [vmem:[%s1 + $0x560] sm:$0xff]
      %v579 = vld [vmem:[%s1 + $0x568] sm:$0xff]
      %v580 = vld [vmem:[%s1 + $0x570] sm:$0xff]
      %v581 = vld [vmem:[%s1 + $0x578] sm:$0xff]
      %v582 = vld [vmem:[%s1 + $0x580] sm:$0xff]
      %v583 = vld [vmem:[%s1 + $0x588] sm:$0xff]
      %v584 = vld [vmem:[%s1 + $0x590] sm:$0xff]
      %v585 = vld [vmem:[%s1 + $0x598] sm:$0xff]
      %v586 = vld [vmem:[%s1 + $0x5a0] sm:$0xff]
      %v587 = vld [vmem:[%s1 + $0x5a8] sm:$0xff]
      %v588 = vld [vmem:[%s1 + $0x5b0] sm:$0xff]
      %v589 = vld [vmem:[%s1 + $0x5b8] sm:$0xff]
      %v590 = vld [vmem:[%s1 + $0x5c0] sm:$0xff]
      %v591 = vld [vmem:[%s1 + $0x5c8] sm:$0xff]
      %v592 = vld [vmem:[%s1 + $0x5d0] sm:$0xff]
      %v593 = vld [vmem:[%s1 + $0x5d8] sm:$0xff]
      %v594 = vld [vmem:[%s1 + $0x5e0] sm:$0xff]
      %v595 = vld [vmem:[%s1 + $0x5e8] sm:$0xff]
      %v596 = vld [vmem:[%s1 + $0x5f0] sm:$0xff]
      %v597 = vld [vmem:[%s1 + $0x5f8] sm:$0xff]
      %v598 = vld [vmem:[%s1 + $0x600] sm:$0xff]
      %v599 = vld [vmem:[%s1 + $0x608] sm:$0xff]
      %v600 = vld [vmem:[%s1 + $0x610] sm:$0xff]
      %v601 = vld [vmem:[%s1 + $0x618] sm:$0xff]
      %v602 = vld [vmem:[%s1 + $0x620] sm:$0xff]
      %v603 = vld [vmem:[%s1 + $0x628] sm:$0xff]
      %v604 = vld [vmem:[%s1 + $0x630] sm:$0xff]
      %v605 = vld [vmem:[%s1 + $0x638] sm:$0xff]
      %v606 = vld [vmem:[%s1 + $0x640] sm:$0xff]
      %v607 = vld [vmem:[%s1 + $0x648] sm:$0xff]
      %v608 = vld [vmem:[%s1 + $0x650] sm:$0xff]
      %v609 = vld [vmem:[%s1 + $0x658] sm:$0xff]
      %v610 = vld [vmem:[%s1 + $0x660] sm:$0xff]
      %v611 = vld [vmem:[%s1 + $0x668] sm:$0xff]
      %v612 = vld [vmem:[%s1 + $0x670] sm:$0xff]
      %v613 = vld [vmem:[%s1 + $0x678] sm:$0xff]
      %v614 = vld [vmem:[%s1 + $0x680] sm:$0xff]
      %v615 = vld [vmem:[%s1 + $0x688] sm:$0xff]
      %v616 = vld [vmem:[%s1 + $0x690] sm:$0xff]
      %v617 = vld [vmem:[%s1 + $0x698] sm:$0xff]
      %v618 = vld [vmem:[%s1 + $0x6a0] sm:$0xff]
      %v619 = vld [vmem:[%s1 + $0x6a8] sm:$0xff]
      %v620 = vld [vmem:[%s1 + $0x6b0] sm:$0xff]
      %v621 = vld [vmem:[%s1 + $0x6b8] sm:$0xff]
      %v622 = vld [vmem:[%s1 + $0x6c0] sm:$0xff]
      %v623 = vld [vmem:[%s1 + $0x6c8] sm:$0xff]
      %v624 = vld [vmem:[%s1 + $0x6d0] sm:$0xff]
      %v625 = vld [vmem:[%s1 + $0x6d8] sm:$0xff]
      %v626 = vld [vmem:[%s1 + $0x6e0] sm:$0xff]
      %v627 = vld [vmem:[%s1 + $0x6e8] sm:$0xff]
      %v628 = vld [vmem:[%s1 + $0x6f0] sm:$0xff]
      %v629 = vld [vmem:[%s1 + $0x6f8] sm:$0xff]
      %v630 = vld [vmem:[%s2] sm:$0xf]
      %v632 = vlaneseq
      %v633 = vshrl.u32 %v632, 7
      %v634 = vsub.s32 0, %v633
      %v635 = vrot.slane %v630, %v634
      %v636 = vlaneseq
      %v637 = vshrl.u32 %v636, 7
      %v638 = vsub.s32 1, %v637
      %v639 = vrot.slane %v630, %v638
      %v640 = vlaneseq
      %v641 = vshrl.u32 %v640, 7
      %v642 = vsub.s32 2, %v641
      %v643 = vrot.slane %v630, %v642
      %v644 = vlaneseq
      %v645 = vshrl.u32 %v644, 7
      %v646 = vsub.s32 3, %v645
      %v647 = vrot.slane %v630, %v646
      %v716 = vunpack.c.l.b16 %v342
      %v717 = vunpack.c.h.b16 %v342
      %v718 = vunpack.c.l.b16 %v343
      %v719 = vunpack.c.h.b16 %v343
      %v720 = vunpack.c.l.b16 %v344
      %v721 = vunpack.c.h.b16 %v344
      %v722 = vunpack.c.l.b16 %v345
      %v723 = vunpack.c.l.b16 %v346
      %v724 = vunpack.c.h.b16 %v346
      %v725 = vunpack.c.l.b16 %v347
      %v726 = vunpack.c.h.b16 %v347
      %v727 = vunpack.c.l.b16 %v348
      %v728 = vunpack.c.h.b16 %v348
      %v729 = vunpack.c.l.b16 %v349
      %v730 = vunpack.c.l.b16 %v350
      %v731 = vunpack.c.h.b16 %v350
      %v732 = vunpack.c.l.b16 %v351
      %v733 = vunpack.c.h.b16 %v351
      %v734 = vunpack.c.l.b16 %v352
      %v735 = vunpack.c.h.b16 %v352
      %v736 = vunpack.c.l.b16 %v353
      %v737 = vunpack.c.l.b16 %v354
      %v738 = vunpack.c.h.b16 %v354
      %v739 = vunpack.c.l.b16 %v355
      %v740 = vunpack.c.h.b16 %v355
      %v741 = vunpack.c.l.b16 %v356
      %v742 = vunpack.c.h.b16 %v356
      %v743 = vunpack.c.l.b16 %v357
      %v744 = vunpack.c.l.b16 %v358
      %v745 = vunpack.c.h.b16 %v358
      %v746 = vunpack.c.l.b16 %v359
      %v747 = vunpack.c.h.b16 %v359
      %v748 = vunpack.c.l.b16 %v360
      %v749 = vunpack.c.h.b16 %v360
      %v750 = vunpack.c.l.b16 %v361
      %v751 = vunpack.c.l.b16 %v362
      %v752 = vunpack.c.h.b16 %v362
      %v753 = vunpack.c.l.b16 %v363
      %v754 = vunpack.c.h.b16 %v363
      %v755 = vunpack.c.l.b16 %v364
      %v756 = vunpack.c.h.b16 %v364
      %v757 = vunpack.c.l.b16 %v365
      %v758 = vunpack.c.l.b16 %v366
      %v759 = vunpack.c.h.b16 %v366
      %v760 = vunpack.c.l.b16 %v367
      %v761 = vunpack.c.h.b16 %v367
      %v762 = vunpack.c.l.b16 %v368
      %v763 = vunpack.c.h.b16 %v368
      %v764 = vunpack.c.l.b16 %v369
      %v765 = vunpack.c.l.b16 %v370
      %v766 = vunpack.c.h.b16 %v370
      %v767 = vunpack.c.l.b16 %v371
      %v768 = vunpack.c.h.b16 %v371
      %v769 = vunpack.c.l.b16 %v372
      %v770 = vunpack.c.h.b16 %v372
      %v771 = vunpack.c.l.b16 %v373
      %v772 = vunpack.c.l.b16 %v374
      %v773 = vunpack.c.h.b16 %v374
      %v774 = vunpack.c.l.b16 %v375
      %v775 = vunpack.c.h.b16 %v375
      %v776 = vunpack.c.l.b16 %v376
      %v777 = vunpack.c.h.b16 %v376
      %v778 = vunpack.c.l.b16 %v377
      %v779 = vunpack.c.l.b16 %v378
      %v780 = vunpack.c.h.b16 %v378
      %v781 = vunpack.c.l.b16 %v379
      %v782 = vunpack.c.h.b16 %v379
      %v783 = vunpack.c.l.b16 %v380
      %v784 = vunpack.c.h.b16 %v380
      %v785 = vunpack.c.l.b16 %v381
      %v786 = vunpack.c.l.b16 %v382
      %v787 = vunpack.c.h.b16 %v382
      %v788 = vunpack.c.l.b16 %v383
      %v789 = vunpack.c.h.b16 %v383
      %v790 = vunpack.c.l.b16 %v384
      %v791 = vunpack.c.h.b16 %v384
      %v792 = vunpack.c.l.b16 %v385
      %v793 = vunpack.c.l.b16 %v386
      %v794 = vunpack.c.h.b16 %v386
      %v795 = vunpack.c.l.b16 %v387
      %v796 = vunpack.c.h.b16 %v387
      %v797 = vunpack.c.l.b16 %v388
      %v798 = vunpack.c.h.b16 %v388
      %v799 = vunpack.c.l.b16 %v389
      %v800 = vunpack.c.l.b16 %v390
      %v801 = vunpack.c.h.b16 %v390
      %v802 = vunpack.c.l.b16 %v391
      %v803 = vunpack.c.h.b16 %v391
      %v804 = vunpack.c.l.b16 %v392
      %v805 = vunpack.c.h.b16 %v392
      %v806 = vunpack.c.l.b16 %v393
      %v807 = vunpack.c.l.b16 %v394
      %v808 = vunpack.c.h.b16 %v394
      %v809 = vunpack.c.l.b16 %v395
      %v810 = vunpack.c.h.b16 %v395
      %v811 = vunpack.c.l.b16 %v396
      %v812 = vunpack.c.h.b16 %v396
      %v813 = vunpack.c.l.b16 %v397
      %v814 = vunpack.c.l.b16 %v398
      %v815 = vunpack.c.h.b16 %v398
      %v816 = vunpack.c.l.b16 %v399
      %v817 = vunpack.c.h.b16 %v399
      %v818 = vunpack.c.l.b16 %v400
      %v819 = vunpack.c.h.b16 %v400
      %v820 = vunpack.c.l.b16 %v401
      %v821 = vunpack.c.l.b16 %v402
      %v822 = vunpack.c.h.b16 %v402
      %v823 = vunpack.c.l.b16 %v403
      %v824 = vunpack.c.h.b16 %v403
      %v825 = vunpack.c.l.b16 %v404
      %v826 = vunpack.c.h.b16 %v404
      %v827 = vunpack.c.l.b16 %v405
      %v828 = vpack.c.b16 %v723, %v716
      %v829 = vpack.c.b16 %v724, %v717
      %v830 = vpack.c.b16 %v725, %v718
      %v831 = vpack.c.b16 %v726, %v719
      %v832 = vpack.c.b16 %v727, %v720
      %v833 = vpack.c.b16 %v728, %v721
      %v834 = vpack.c.b16 %v729, %v722
      %v835 = vpack.c.b16 %v737, %v730
      %v836 = vpack.c.b16 %v738, %v731
      %v837 = vpack.c.b16 %v739, %v732
      %v838 = vpack.c.b16 %v740, %v733
      %v839 = vpack.c.b16 %v741, %v734
      %v840 = vpack.c.b16 %v742, %v735
      %v841 = vpack.c.b16 %v743, %v736
      %v842 = vpack.c.b16 %v751, %v744
      %v843 = vpack.c.b16 %v752, %v745
      %v844 = vpack.c.b16 %v753, %v746
      %v845 = vpack.c.b16 %v754, %v747
      %v846 = vpack.c.b16 %v755, %v748
      %v847 = vpack.c.b16 %v756, %v749
      %v848 = vpack.c.b16 %v757, %v750
      %v849 = vpack.c.b16 %v765, %v758
      %v850 = vpack.c.b16 %v766, %v759
      %v851 = vpack.c.b16 %v767, %v760
      %v852 = vpack.c.b16 %v768, %v761
      %v853 = vpack.c.b16 %v769, %v762
      %v854 = vpack.c.b16 %v770, %v763
      %v855 = vpack.c.b16 %v771, %v764
      %v856 = vpack.c.b16 %v779, %v772
      %v857 = vpack.c.b16 %v780, %v773
      %v858 = vpack.c.b16 %v781, %v774
      %v859 = vpack.c.b16 %v782, %v775
      %v860 = vpack.c.b16 %v783, %v776
      %v861 = vpack.c.b16 %v784, %v777
      %v862 = vpack.c.b16 %v785, %v778
      %v863 = vpack.c.b16 %v793, %v786
      %v864 = vpack.c.b16 %v794, %v787
      %v865 = vpack.c.b16 %v795, %v788
      %v866 = vpack.c.b16 %v796, %v789
      %v867 = vpack.c.b16 %v797, %v790
      %v868 = vpack.c.b16 %v798, %v791
      %v869 = vpack.c.b16 %v799, %v792
      %v870 = vpack.c.b16 %v807, %v800
      %v871 = vpack.c.b16 %v808, %v801
      %v872 = vpack.c.b16 %v809, %v802
      %v873 = vpack.c.b16 %v810, %v803
      %v874 = vpack.c.b16 %v811, %v804
      %v875 = vpack.c.b16 %v812, %v805
      %v876 = vpack.c.b16 %v813, %v806
      %v877 = vpack.c.b16 %v821, %v814
      %v878 = vpack.c.b16 %v822, %v815
      %v879 = vpack.c.b16 %v823, %v816
      %v880 = vpack.c.b16 %v824, %v817
      %v881 = vpack.c.b16 %v825, %v818
      %v882 = vpack.c.b16 %v826, %v819
      %v883 = vpack.c.b16 %v827, %v820
      %v1164 = vunpack.c.l.b16 %v406
      %v1165 = vunpack.c.h.b16 %v406
      %v1166 = vunpack.c.l.b16 %v407
      %v1167 = vunpack.c.h.b16 %v407
      %v1168 = vunpack.c.l.b16 %v408
      %v1169 = vunpack.c.h.b16 %v408
      %v1170 = vunpack.c.l.b16 %v409
      %v1171 = vunpack.c.h.b16 %v409
      %v1172 = vunpack.c.l.b16 %v410
      %v1173 = vunpack.c.h.b16 %v410
      %v1174 = vunpack.c.l.b16 %v411
      %v1175 = vunpack.c.h.b16 %v411
      %v1176 = vunpack.c.l.b16 %v412
      %v1177 = vunpack.c.h.b16 %v412
      %v1178 = vunpack.c.l.b16 %v413
      %v1179 = vunpack.c.h.b16 %v413
      %v1180 = vunpack.c.l.b16 %v414
      %v1181 = vunpack.c.h.b16 %v414
      %v1182 = vunpack.c.l.b16 %v415
      %v1183 = vunpack.c.h.b16 %v415
      %v1184 = vunpack.c.l.b16 %v416
      %v1185 = vunpack.c.h.b16 %v416
      %v1186 = vunpack.c.l.b16 %v417
      %v1187 = vunpack.c.h.b16 %v417
      %v1188 = vunpack.c.l.b16 %v418
      %v1189 = vunpack.c.h.b16 %v418
      %v1190 = vunpack.c.l.b16 %v419
      %v1191 = vunpack.c.h.b16 %v419
      %v1192 = vunpack.c.l.b16 %v420
      %v1193 = vunpack.c.h.b16 %v420
      %v1194 = vunpack.c.l.b16 %v421
      %v1195 = vunpack.c.h.b16 %v421
      %v1196 = vunpack.c.l.b16 %v422
      %v1197 = vunpack.c.h.b16 %v422
      %v1198 = vunpack.c.l.b16 %v423
      %v1199 = vunpack.c.h.b16 %v423
      %v1200 = vunpack.c.l.b16 %v424
      %v1201 = vunpack.c.h.b16 %v424
      %v1202 = vunpack.c.l.b16 %v425
      %v1203 = vunpack.c.h.b16 %v425
      %v1204 = vunpack.c.l.b16 %v426
      %v1205 = vunpack.c.h.b16 %v426
      %v1206 = vunpack.c.l.b16 %v427
      %v1207 = vunpack.c.h.b16 %v427
      %v1208 = vunpack.c.l.b16 %v428
      %v1209 = vunpack.c.h.b16 %v428
      %v1210 = vunpack.c.l.b16 %v429
      %v1211 = vunpack.c.h.b16 %v429
      %v1212 = vunpack.c.l.b16 %v430
      %v1213 = vunpack.c.h.b16 %v430
      %v1214 = vunpack.c.l.b16 %v431
      %v1215 = vunpack.c.h.b16 %v431
      %v1216 = vunpack.c.l.b16 %v432
      %v1217 = vunpack.c.h.b16 %v432
      %v1218 = vunpack.c.l.b16 %v433
      %v1219 = vunpack.c.h.b16 %v433
      %v1220 = vunpack.c.l.b16 %v434
      %v1221 = vunpack.c.h.b16 %v434
      %v1222 = vunpack.c.l.b16 %v435
      %v1223 = vunpack.c.h.b16 %v435
      %v1224 = vunpack.c.l.b16 %v436
      %v1225 = vunpack.c.h.b16 %v436
      %v1226 = vunpack.c.l.b16 %v437
      %v1227 = vunpack.c.h.b16 %v437
      %v1228 = vunpack.c.l.b16 %v438
      %v1229 = vunpack.c.h.b16 %v438
      %v1230 = vunpack.c.l.b16 %v439
      %v1231 = vunpack.c.h.b16 %v439
      %v1232 = vunpack.c.l.b16 %v440
      %v1233 = vunpack.c.h.b16 %v440
      %v1234 = vunpack.c.l.b16 %v441
      %v1235 = vunpack.c.h.b16 %v441
      %v1236 = vunpack.c.l.b16 %v442
      %v1237 = vunpack.c.h.b16 %v442
      %v1238 = vunpack.c.l.b16 %v443
      %v1239 = vunpack.c.h.b16 %v443
      %v1240 = vunpack.c.l.b16 %v444
      %v1241 = vunpack.c.h.b16 %v444
      %v1242 = vunpack.c.l.b16 %v445
      %v1243 = vunpack.c.h.b16 %v445
      %v1244 = vunpack.c.l.b16 %v446
      %v1245 = vunpack.c.h.b16 %v446
      %v1246 = vunpack.c.l.b16 %v447
      %v1247 = vunpack.c.h.b16 %v447
      %v1248 = vunpack.c.l.b16 %v448
      %v1249 = vunpack.c.h.b16 %v448
      %v1250 = vunpack.c.l.b16 %v449
      %v1251 = vunpack.c.h.b16 %v449
      %v1252 = vunpack.c.l.b16 %v450
      %v1253 = vunpack.c.h.b16 %v450
      %v1254 = vunpack.c.l.b16 %v451
      %v1255 = vunpack.c.h.b16 %v451
      %v1256 = vunpack.c.l.b16 %v452
      %v1257 = vunpack.c.h.b16 %v452
      %v1258 = vunpack.c.l.b16 %v453
      %v1259 = vunpack.c.h.b16 %v453
      %v1260 = vunpack.c.l.b16 %v454
      %v1261 = vunpack.c.h.b16 %v454
      %v1262 = vunpack.c.l.b16 %v455
      %v1263 = vunpack.c.h.b16 %v455
      %v1264 = vunpack.c.l.b16 %v456
      %v1265 = vunpack.c.h.b16 %v456
      %v1266 = vunpack.c.l.b16 %v457
      %v1267 = vunpack.c.h.b16 %v457
      %v1268 = vunpack.c.l.b16 %v458
      %v1269 = vunpack.c.h.b16 %v458
      %v1270 = vunpack.c.l.b16 %v459
      %v1271 = vunpack.c.h.b16 %v459
      %v1272 = vunpack.c.l.b16 %v460
      %v1273 = vunpack.c.h.b16 %v460
      %v1274 = vunpack.c.l.b16 %v461
      %v1275 = vunpack.c.h.b16 %v461
      %v1276 = vunpack.c.l.b16 %v462
      %v1277 = vunpack.c.h.b16 %v462
      %v1278 = vunpack.c.l.b16 %v463
      %v1279 = vunpack.c.h.b16 %v463
      %v1280 = vunpack.c.l.b16 %v464
      %v1281 = vunpack.c.h.b16 %v464
      %v1282 = vunpack.c.l.b16 %v465
      %v1283 = vunpack.c.h.b16 %v465
      %v1284 = vunpack.c.l.b16 %v466
      %v1285 = vunpack.c.h.b16 %v466
      %v1286 = vunpack.c.l.b16 %v467
      %v1287 = vunpack.c.h.b16 %v467
      %v1288 = vunpack.c.l.b16 %v468
      %v1289 = vunpack.c.h.b16 %v468
      %v1290 = vunpack.c.l.b16 %v469
      %v1291 = vunpack.c.h.b16 %v469
      %v1292 = vunpack.c.l.b16 %v470
      %v1293 = vunpack.c.h.b16 %v470
      %v1294 = vunpack.c.l.b16 %v471
      %v1295 = vunpack.c.h.b16 %v471
      %v1296 = vunpack.c.l.b16 %v472
      %v1297 = vunpack.c.h.b16 %v472
      %v1298 = vunpack.c.l.b16 %v473
      %v1299 = vunpack.c.h.b16 %v473
      %v1300 = vunpack.c.l.b16 %v474
      %v1301 = vunpack.c.h.b16 %v474
      %v1302 = vunpack.c.l.b16 %v475
      %v1303 = vunpack.c.h.b16 %v475
      %v1304 = vunpack.c.l.b16 %v476
      %v1305 = vunpack.c.h.b16 %v476
      %v1306 = vunpack.c.l.b16 %v477
      %v1307 = vunpack.c.h.b16 %v477
      %v1308 = vunpack.c.l.b16 %v478
      %v1309 = vunpack.c.h.b16 %v478
      %v1310 = vunpack.c.l.b16 %v479
      %v1311 = vunpack.c.h.b16 %v479
      %v1312 = vunpack.c.l.b16 %v480
      %v1313 = vunpack.c.h.b16 %v480
      %v1314 = vunpack.c.l.b16 %v481
      %v1315 = vunpack.c.h.b16 %v481
      %v1316 = vunpack.c.l.b16 %v482
      %v1317 = vunpack.c.h.b16 %v482
      %v1318 = vunpack.c.l.b16 %v483
      %v1319 = vunpack.c.h.b16 %v483
      %v1320 = vunpack.c.l.b16 %v484
      %v1321 = vunpack.c.h.b16 %v484
      %v1322 = vunpack.c.l.b16 %v485
      %v1323 = vunpack.c.h.b16 %v485
      %v1324 = vunpack.c.l.b16 %v486
      %v1325 = vunpack.c.h.b16 %v486
      %v1326 = vunpack.c.l.b16 %v487
      %v1327 = vunpack.c.h.b16 %v487
      %v1328 = vunpack.c.l.b16 %v488
      %v1329 = vunpack.c.h.b16 %v488
      %v1330 = vunpack.c.l.b16 %v489
      %v1331 = vunpack.c.h.b16 %v489
      %v1332 = vunpack.c.l.b16 %v490
      %v1333 = vunpack.c.h.b16 %v490
      %v1334 = vunpack.c.l.b16 %v491
      %v1335 = vunpack.c.h.b16 %v491
      %v1336 = vunpack.c.l.b16 %v492
      %v1337 = vunpack.c.h.b16 %v492
      %v1338 = vunpack.c.l.b16 %v493
      %v1339 = vunpack.c.h.b16 %v493
      %v1340 = vunpack.c.l.b16 %v494
      %v1341 = vunpack.c.h.b16 %v494
      %v1342 = vunpack.c.l.b16 %v495
      %v1343 = vunpack.c.h.b16 %v495
      %v1344 = vunpack.c.l.b16 %v496
      %v1345 = vunpack.c.h.b16 %v496
      %v1346 = vunpack.c.l.b16 %v497
      %v1347 = vunpack.c.h.b16 %v497
      %v1348 = vunpack.c.l.b16 %v498
      %v1349 = vunpack.c.h.b16 %v498
      %v1350 = vunpack.c.l.b16 %v499
      %v1351 = vunpack.c.h.b16 %v499
      %v1352 = vunpack.c.l.b16 %v500
      %v1353 = vunpack.c.h.b16 %v500
      %v1354 = vunpack.c.l.b16 %v501
      %v1355 = vunpack.c.h.b16 %v501
      %v1356 = vunpack.c.l.b16 %v502
      %v1357 = vunpack.c.h.b16 %v502
      %v1358 = vunpack.c.l.b16 %v503
      %v1359 = vunpack.c.h.b16 %v503
      %v1360 = vunpack.c.l.b16 %v504
      %v1361 = vunpack.c.h.b16 %v504
      %v1362 = vunpack.c.l.b16 %v505
      %v1363 = vunpack.c.h.b16 %v505
      %v1364 = vunpack.c.l.b16 %v506
      %v1365 = vunpack.c.h.b16 %v506
      %v1366 = vunpack.c.l.b16 %v507
      %v1367 = vunpack.c.h.b16 %v507
      %v1368 = vunpack.c.l.b16 %v508
      %v1369 = vunpack.c.h.b16 %v508
      %v1370 = vunpack.c.l.b16 %v509
      %v1371 = vunpack.c.h.b16 %v509
      %v1372 = vunpack.c.l.b16 %v510
      %v1373 = vunpack.c.h.b16 %v510
      %v1374 = vunpack.c.l.b16 %v511
      %v1375 = vunpack.c.h.b16 %v511
      %v1376 = vunpack.c.l.b16 %v512
      %v1377 = vunpack.c.h.b16 %v512
      %v1378 = vunpack.c.l.b16 %v513
      %v1379 = vunpack.c.h.b16 %v513
      %v1380 = vunpack.c.l.b16 %v514
      %v1381 = vunpack.c.h.b16 %v514
      %v1382 = vunpack.c.l.b16 %v515
      %v1383 = vunpack.c.h.b16 %v515
      %v1384 = vunpack.c.l.b16 %v516
      %v1385 = vunpack.c.h.b16 %v516
      %v1386 = vunpack.c.l.b16 %v517
      %v1387 = vunpack.c.h.b16 %v517
      %v1388 = vunpack.c.l.b16 %v518
      %v1389 = vunpack.c.h.b16 %v518
      %v1390 = vunpack.c.l.b16 %v519
      %v1391 = vunpack.c.h.b16 %v519
      %v1392 = vunpack.c.l.b16 %v520
      %v1393 = vunpack.c.h.b16 %v520
      %v1394 = vunpack.c.l.b16 %v521
      %v1395 = vunpack.c.h.b16 %v521
      %v1396 = vunpack.c.l.b16 %v522
      %v1397 = vunpack.c.h.b16 %v522
      %v1398 = vunpack.c.l.b16 %v523
      %v1399 = vunpack.c.h.b16 %v523
      %v1400 = vunpack.c.l.b16 %v524
      %v1401 = vunpack.c.h.b16 %v524
      %v1402 = vunpack.c.l.b16 %v525
      %v1403 = vunpack.c.h.b16 %v525
      %v1404 = vunpack.c.l.b16 %v526
      %v1405 = vunpack.c.h.b16 %v526
      %v1406 = vunpack.c.l.b16 %v527
      %v1407 = vunpack.c.h.b16 %v527
      %v1408 = vunpack.c.l.b16 %v528
      %v1409 = vunpack.c.h.b16 %v528
      %v1410 = vunpack.c.l.b16 %v529
      %v1411 = vunpack.c.h.b16 %v529
      %v1412 = vunpack.c.l.b16 %v530
      %v1413 = vunpack.c.h.b16 %v530
      %v1414 = vunpack.c.l.b16 %v531
      %v1415 = vunpack.c.h.b16 %v531
      %v1416 = vunpack.c.l.b16 %v532
      %v1417 = vunpack.c.h.b16 %v532
      %v1418 = vunpack.c.l.b16 %v533
      %v1419 = vunpack.c.h.b16 %v533
      %v1420 = vunpack.c.l.b16 %v534
      %v1421 = vunpack.c.h.b16 %v534
      %v1422 = vunpack.c.l.b16 %v535
      %v1423 = vunpack.c.h.b16 %v535
      %v1424 = vunpack.c.l.b16 %v536
      %v1425 = vunpack.c.h.b16 %v536
      %v1426 = vunpack.c.l.b16 %v537
      %v1427 = vunpack.c.h.b16 %v537
      %v1428 = vunpack.c.l.b16 %v538
      %v1429 = vunpack.c.h.b16 %v538
      %v1430 = vunpack.c.l.b16 %v539
      %v1431 = vunpack.c.h.b16 %v539
      %v1432 = vunpack.c.l.b16 %v540
      %v1433 = vunpack.c.h.b16 %v540
      %v1434 = vunpack.c.l.b16 %v541
      %v1435 = vunpack.c.h.b16 %v541
      %v1436 = vunpack.c.l.b16 %v542
      %v1437 = vunpack.c.h.b16 %v542
      %v1438 = vunpack.c.l.b16 %v543
      %v1439 = vunpack.c.h.b16 %v543
      %v1440 = vunpack.c.l.b16 %v544
      %v1441 = vunpack.c.h.b16 %v544
      %v1442 = vunpack.c.l.b16 %v545
      %v1443 = vunpack.c.h.b16 %v545
      %v1444 = vunpack.c.l.b16 %v546
      %v1445 = vunpack.c.h.b16 %v546
      %v1446 = vunpack.c.l.b16 %v547
      %v1447 = vunpack.c.h.b16 %v547
      %v1448 = vunpack.c.l.b16 %v548
      %v1449 = vunpack.c.h.b16 %v548
      %v1450 = vunpack.c.l.b16 %v549
      %v1451 = vunpack.c.h.b16 %v549
      %v1452 = vunpack.c.l.b16 %v550
      %v1453 = vunpack.c.h.b16 %v550
      %v1454 = vunpack.c.l.b16 %v551
      %v1455 = vunpack.c.h.b16 %v551
      %v1456 = vunpack.c.l.b16 %v552
      %v1457 = vunpack.c.h.b16 %v552
      %v1458 = vunpack.c.l.b16 %v553
      %v1459 = vunpack.c.h.b16 %v553
      %v1460 = vunpack.c.l.b16 %v554
      %v1461 = vunpack.c.h.b16 %v554
      %v1462 = vunpack.c.l.b16 %v555
      %v1463 = vunpack.c.h.b16 %v555
      %v1464 = vunpack.c.l.b16 %v556
      %v1465 = vunpack.c.h.b16 %v556
      %v1466 = vunpack.c.l.b16 %v557
      %v1467 = vunpack.c.h.b16 %v557
      %v1468 = vunpack.c.l.b16 %v558
      %v1469 = vunpack.c.h.b16 %v558
      %v1470 = vunpack.c.l.b16 %v559
      %v1471 = vunpack.c.h.b16 %v559
      %v1472 = vunpack.c.l.b16 %v560
      %v1473 = vunpack.c.h.b16 %v560
      %v1474 = vunpack.c.l.b16 %v561
      %v1475 = vunpack.c.h.b16 %v561
      %v1476 = vunpack.c.l.b16 %v562
      %v1477 = vunpack.c.h.b16 %v562
      %v1478 = vunpack.c.l.b16 %v563
      %v1479 = vunpack.c.h.b16 %v563
      %v1480 = vunpack.c.l.b16 %v564
      %v1481 = vunpack.c.h.b16 %v564
      %v1482 = vunpack.c.l.b16 %v565
      %v1483 = vunpack.c.h.b16 %v565
      %v1484 = vunpack.c.l.b16 %v566
      %v1485 = vunpack.c.h.b16 %v566
      %v1486 = vunpack.c.l.b16 %v567
      %v1487 = vunpack.c.h.b16 %v567
      %v1488 = vunpack.c.l.b16 %v568
      %v1489 = vunpack.c.h.b16 %v568
      %v1490 = vunpack.c.l.b16 %v569
      %v1491 = vunpack.c.h.b16 %v569
      %v1492 = vunpack.c.l.b16 %v570
      %v1493 = vunpack.c.h.b16 %v570
      %v1494 = vunpack.c.l.b16 %v571
      %v1495 = vunpack.c.h.b16 %v571
      %v1496 = vunpack.c.l.b16 %v572
      %v1497 = vunpack.c.h.b16 %v572
      %v1498 = vunpack.c.l.b16 %v573
      %v1499 = vunpack.c.h.b16 %v573
      %v1500 = vunpack.c.l.b16 %v574
      %v1501 = vunpack.c.h.b16 %v574
      %v1502 = vunpack.c.l.b16 %v575
      %v1503 = vunpack.c.h.b16 %v575
      %v1504 = vunpack.c.l.b16 %v576
      %v1505 = vunpack.c.h.b16 %v576
      %v1506 = vunpack.c.l.b16 %v577
      %v1507 = vunpack.c.h.b16 %v577
      %v1508 = vunpack.c.l.b16 %v578
      %v1509 = vunpack.c.h.b16 %v578
      %v1510 = vunpack.c.l.b16 %v579
      %v1511 = vunpack.c.h.b16 %v579
      %v1512 = vunpack.c.l.b16 %v580
      %v1513 = vunpack.c.h.b16 %v580
      %v1514 = vunpack.c.l.b16 %v581
      %v1515 = vunpack.c.h.b16 %v581
      %v1516 = vunpack.c.l.b16 %v582
      %v1517 = vunpack.c.h.b16 %v582
      %v1518 = vunpack.c.l.b16 %v583
      %v1519 = vunpack.c.h.b16 %v583
      %v1520 = vunpack.c.l.b16 %v584
      %v1521 = vunpack.c.h.b16 %v584
      %v1522 = vunpack.c.l.b16 %v585
      %v1523 = vunpack.c.h.b16 %v585
      %v1524 = vunpack.c.l.b16 %v586
      %v1525 = vunpack.c.h.b16 %v586
      %v1526 = vunpack.c.l.b16 %v587
      %v1527 = vunpack.c.h.b16 %v587
      %v1528 = vunpack.c.l.b16 %v588
      %v1529 = vunpack.c.h.b16 %v588
      %v1530 = vunpack.c.l.b16 %v589
      %v1531 = vunpack.c.h.b16 %v589
      %v1532 = vunpack.c.l.b16 %v590
      %v1533 = vunpack.c.h.b16 %v590
      %v1534 = vunpack.c.l.b16 %v591
      %v1535 = vunpack.c.h.b16 %v591
      %v1536 = vunpack.c.l.b16 %v592
      %v1537 = vunpack.c.h.b16 %v592
      %v1538 = vunpack.c.l.b16 %v593
      %v1539 = vunpack.c.h.b16 %v593
      %v1540 = vunpack.c.l.b16 %v594
      %v1541 = vunpack.c.h.b16 %v594
      %v1542 = vunpack.c.l.b16 %v595
      %v1543 = vunpack.c.h.b16 %v595
      %v1544 = vunpack.c.l.b16 %v596
      %v1545 = vunpack.c.h.b16 %v596
      %v1546 = vunpack.c.l.b16 %v597
      %v1547 = vunpack.c.h.b16 %v597
      %v1548 = vunpack.c.l.b16 %v598
      %v1549 = vunpack.c.h.b16 %v598
      %v1550 = vunpack.c.l.b16 %v599
      %v1551 = vunpack.c.h.b16 %v599
      %v1552 = vunpack.c.l.b16 %v600
      %v1553 = vunpack.c.h.b16 %v600
      %v1554 = vunpack.c.l.b16 %v601
      %v1555 = vunpack.c.h.b16 %v601
      %v1556 = vunpack.c.l.b16 %v602
      %v1557 = vunpack.c.h.b16 %v602
      %v1558 = vunpack.c.l.b16 %v603
      %v1559 = vunpack.c.h.b16 %v603
      %v1560 = vunpack.c.l.b16 %v604
      %v1561 = vunpack.c.h.b16 %v604
      %v1562 = vunpack.c.l.b16 %v605
      %v1563 = vunpack.c.h.b16 %v605
      %v1564 = vunpack.c.l.b16 %v606
      %v1565 = vunpack.c.h.b16 %v606
      %v1566 = vunpack.c.l.b16 %v607
      %v1567 = vunpack.c.h.b16 %v607
      %v1568 = vunpack.c.l.b16 %v608
      %v1569 = vunpack.c.h.b16 %v608
      %v1570 = vunpack.c.l.b16 %v609
      %v1571 = vunpack.c.h.b16 %v609
      %v1572 = vunpack.c.l.b16 %v610
      %v1573 = vunpack.c.h.b16 %v610
      %v1574 = vunpack.c.l.b16 %v611
      %v1575 = vunpack.c.h.b16 %v611
      %v1576 = vunpack.c.l.b16 %v612
      %v1577 = vunpack.c.h.b16 %v612
      %v1578 = vunpack.c.l.b16 %v613
      %v1579 = vunpack.c.h.b16 %v613
      %v1580 = vunpack.c.l.b16 %v614
      %v1581 = vunpack.c.h.b16 %v614
      %v1582 = vunpack.c.l.b16 %v615
      %v1583 = vunpack.c.h.b16 %v615
      %v1584 = vunpack.c.l.b16 %v616
      %v1585 = vunpack.c.h.b16 %v616
      %v1586 = vunpack.c.l.b16 %v617
      %v1587 = vunpack.c.h.b16 %v617
      %v1588 = vunpack.c.l.b16 %v618
      %v1589 = vunpack.c.h.b16 %v618
      %v1590 = vunpack.c.l.b16 %v619
      %v1591 = vunpack.c.h.b16 %v619
      %v1592 = vunpack.c.l.b16 %v620
      %v1593 = vunpack.c.h.b16 %v620
      %v1594 = vunpack.c.l.b16 %v621
      %v1595 = vunpack.c.h.b16 %v621
      %v1596 = vunpack.c.l.b16 %v622
      %v1597 = vunpack.c.h.b16 %v622
      %v1598 = vunpack.c.l.b16 %v623
      %v1599 = vunpack.c.h.b16 %v623
      %v1600 = vunpack.c.l.b16 %v624
      %v1601 = vunpack.c.h.b16 %v624
      %v1602 = vunpack.c.l.b16 %v625
      %v1603 = vunpack.c.h.b16 %v625
      %v1604 = vunpack.c.l.b16 %v626
      %v1605 = vunpack.c.h.b16 %v626
      %v1606 = vunpack.c.l.b16 %v627
      %v1607 = vunpack.c.h.b16 %v627
      %v1608 = vunpack.c.l.b16 %v628
      %v1609 = vunpack.c.h.b16 %v628
      %v1610 = vunpack.c.l.b16 %v629
      %v1611 = vunpack.c.h.b16 %v629
      %v1612 = vpack.c.b16 %v1168, %v1164
      %v1613 = vpack.c.b16 %v1169, %v1165
      %v1614 = vpack.c.b16 %v1170, %v1166
      %v1615 = vpack.c.b16 %v1171, %v1167
      %v1616 = vpack.c.b16 %v1176, %v1172
      %v1617 = vpack.c.b16 %v1177, %v1173
      %v1618 = vpack.c.b16 %v1178, %v1174
      %v1619 = vpack.c.b16 %v1179, %v1175
      %v1620 = vpack.c.b16 %v1184, %v1180
      %v1621 = vpack.c.b16 %v1185, %v1181
      %v1622 = vpack.c.b16 %v1186, %v1182
      %v1623 = vpack.c.b16 %v1187, %v1183
      %v1624 = vpack.c.b16 %v1192, %v1188
      %v1625 = vpack.c.b16 %v1193, %v1189
      %v1626 = vpack.c.b16 %v1194, %v1190
      %v1627 = vpack.c.b16 %v1195, %v1191
      %v1628 = vpack.c.b16 %v1200, %v1196
      %v1629 = vpack.c.b16 %v1201, %v1197
      %v1630 = vpack.c.b16 %v1202, %v1198
      %v1631 = vpack.c.b16 %v1203, %v1199
      %v1632 = vpack.c.b16 %v1208, %v1204
      %v1633 = vpack.c.b16 %v1209, %v1205
      %v1634 = vpack.c.b16 %v1210, %v1206
      %v1635 = vpack.c.b16 %v1211, %v1207
      %v1636 = vpack.c.b16 %v1216, %v1212
      %v1637 = vpack.c.b16 %v1217, %v1213
      %v1638 = vpack.c.b16 %v1218, %v1214
      %v1639 = vpack.c.b16 %v1219, %v1215
      %v1640 = vpack.c.b16 %v1224, %v1220
      %v1641 = vpack.c.b16 %v1225, %v1221
      %v1642 = vpack.c.b16 %v1226, %v1222
      %v1643 = vpack.c.b16 %v1227, %v1223
      %v1644 = vpack.c.b16 %v1232, %v1228
      %v1645 = vpack.c.b16 %v1233, %v1229
      %v1646 = vpack.c.b16 %v1234, %v1230
      %v1647 = vpack.c.b16 %v1235, %v1231
      %v1648 = vpack.c.b16 %v1240, %v1236
      %v1649 = vpack.c.b16 %v1241, %v1237
      %v1650 = vpack.c.b16 %v1242, %v1238
      %v1651 = vpack.c.b16 %v1243, %v1239
      %v1652 = vpack.c.b16 %v1248, %v1244
      %v1653 = vpack.c.b16 %v1249, %v1245
      %v1654 = vpack.c.b16 %v1250, %v1246
      %v1655 = vpack.c.b16 %v1251, %v1247
      %v1656 = vpack.c.b16 %v1256, %v1252
      %v1657 = vpack.c.b16 %v1257, %v1253
      %v1658 = vpack.c.b16 %v1258, %v1254
      %v1659 = vpack.c.b16 %v1259, %v1255
      %v1660 = vpack.c.b16 %v1264, %v1260
      %v1661 = vpack.c.b16 %v1265, %v1261
      %v1662 = vpack.c.b16 %v1266, %v1262
      %v1663 = vpack.c.b16 %v1267, %v1263
      %v1664 = vpack.c.b16 %v1272, %v1268
      %v1665 = vpack.c.b16 %v1273, %v1269
      %v1666 = vpack.c.b16 %v1274, %v1270
      %v1667 = vpack.c.b16 %v1275, %v1271
      %v1668 = vpack.c.b16 %v1280, %v1276
      %v1669 = vpack.c.b16 %v1281, %v1277
      %v1670 = vpack.c.b16 %v1282, %v1278
      %v1671 = vpack.c.b16 %v1283, %v1279
      %v1672 = vpack.c.b16 %v1288, %v1284
      %v1673 = vpack.c.b16 %v1289, %v1285
      %v1674 = vpack.c.b16 %v1290, %v1286
      %v1675 = vpack.c.b16 %v1291, %v1287
      %v1676 = vpack.c.b16 %v1296, %v1292
      %v1677 = vpack.c.b16 %v1297, %v1293
      %v1678 = vpack.c.b16 %v1298, %v1294
      %v1679 = vpack.c.b16 %v1299, %v1295
      %v1680 = vpack.c.b16 %v1304, %v1300
      %v1681 = vpack.c.b16 %v1305, %v1301
      %v1682 = vpack.c.b16 %v1306, %v1302
      %v1683 = vpack.c.b16 %v1307, %v1303
      %v1684 = vpack.c.b16 %v1312, %v1308
      %v1685 = vpack.c.b16 %v1313, %v1309
      %v1686 = vpack.c.b16 %v1314, %v1310
      %v1687 = vpack.c.b16 %v1315, %v1311
      %v1688 = vpack.c.b16 %v1320, %v1316
      %v1689 = vpack.c.b16 %v1321, %v1317
      %v1690 = vpack.c.b16 %v1322, %v1318
      %v1691 = vpack.c.b16 %v1323, %v1319
      %v1692 = vpack.c.b16 %v1328, %v1324
      %v1693 = vpack.c.b16 %v1329, %v1325
      %v1694 = vpack.c.b16 %v1330, %v1326
      %v1695 = vpack.c.b16 %v1331, %v1327
      %v1696 = vpack.c.b16 %v1336, %v1332
      %v1697 = vpack.c.b16 %v1337, %v1333
      %v1698 = vpack.c.b16 %v1338, %v1334
      %v1699 = vpack.c.b16 %v1339, %v1335
      %v1700 = vpack.c.b16 %v1344, %v1340
      %v1701 = vpack.c.b16 %v1345, %v1341
      %v1702 = vpack.c.b16 %v1346, %v1342
      %v1703 = vpack.c.b16 %v1347, %v1343
      %v1704 = vpack.c.b16 %v1352, %v1348
      %v1705 = vpack.c.b16 %v1353, %v1349
      %v1706 = vpack.c.b16 %v1354, %v1350
      %v1707 = vpack.c.b16 %v1355, %v1351
      %v1708 = vpack.c.b16 %v1360, %v1356
      %v1709 = vpack.c.b16 %v1361, %v1357
      %v1710 = vpack.c.b16 %v1362, %v1358
      %v1711 = vpack.c.b16 %v1363, %v1359
      %v1712 = vpack.c.b16 %v1368, %v1364
      %v1713 = vpack.c.b16 %v1369, %v1365
      %v1714 = vpack.c.b16 %v1370, %v1366
      %v1715 = vpack.c.b16 %v1371, %v1367
      %v1716 = vpack.c.b16 %v1376, %v1372
      %v1717 = vpack.c.b16 %v1377, %v1373
      %v1718 = vpack.c.b16 %v1378, %v1374
      %v1719 = vpack.c.b16 %v1379, %v1375
      %v1720 = vpack.c.b16 %v1384, %v1380
      %v1721 = vpack.c.b16 %v1385, %v1381
      %v1722 = vpack.c.b16 %v1386, %v1382
      %v1723 = vpack.c.b16 %v1387, %v1383
      %v1724 = vpack.c.b16 %v1392, %v1388
      %v1725 = vpack.c.b16 %v1393, %v1389
      %v1726 = vpack.c.b16 %v1394, %v1390
      %v1727 = vpack.c.b16 %v1395, %v1391
      %v1728 = vpack.c.b16 %v1400, %v1396
      %v1729 = vpack.c.b16 %v1401, %v1397
      %v1730 = vpack.c.b16 %v1402, %v1398
      %v1731 = vpack.c.b16 %v1403, %v1399
      %v1732 = vpack.c.b16 %v1408, %v1404
      %v1733 = vpack.c.b16 %v1409, %v1405
      %v1734 = vpack.c.b16 %v1410, %v1406
      %v1735 = vpack.c.b16 %v1411, %v1407
      %v1736 = vpack.c.b16 %v1416, %v1412
      %v1737 = vpack.c.b16 %v1417, %v1413
      %v1738 = vpack.c.b16 %v1418, %v1414
      %v1739 = vpack.c.b16 %v1419, %v1415
      %v1740 = vpack.c.b16 %v1424, %v1420
      %v1741 = vpack.c.b16 %v1425, %v1421
      %v1742 = vpack.c.b16 %v1426, %v1422
      %v1743 = vpack.c.b16 %v1427, %v1423
      %v1744 = vpack.c.b16 %v1432, %v1428
      %v1745 = vpack.c.b16 %v1433, %v1429
      %v1746 = vpack.c.b16 %v1434, %v1430
      %v1747 = vpack.c.b16 %v1435, %v1431
      %v1748 = vpack.c.b16 %v1440, %v1436
      %v1749 = vpack.c.b16 %v1441, %v1437
      %v1750 = vpack.c.b16 %v1442, %v1438
      %v1751 = vpack.c.b16 %v1443, %v1439
      %v1752 = vpack.c.b16 %v1448, %v1444
      %v1753 = vpack.c.b16 %v1449, %v1445
      %v1754 = vpack.c.b16 %v1450, %v1446
      %v1755 = vpack.c.b16 %v1451, %v1447
      %v1756 = vpack.c.b16 %v1456, %v1452
      %v1757 = vpack.c.b16 %v1457, %v1453
      %v1758 = vpack.c.b16 %v1458, %v1454
      %v1759 = vpack.c.b16 %v1459, %v1455
      %v1760 = vpack.c.b16 %v1464, %v1460
      %v1761 = vpack.c.b16 %v1465, %v1461
      %v1762 = vpack.c.b16 %v1466, %v1462
      %v1763 = vpack.c.b16 %v1467, %v1463
      %v1764 = vpack.c.b16 %v1472, %v1468
      %v1765 = vpack.c.b16 %v1473, %v1469
      %v1766 = vpack.c.b16 %v1474, %v1470
      %v1767 = vpack.c.b16 %v1475, %v1471
      %v1768 = vpack.c.b16 %v1480, %v1476
      %v1769 = vpack.c.b16 %v1481, %v1477
      %v1770 = vpack.c.b16 %v1482, %v1478
      %v1771 = vpack.c.b16 %v1483, %v1479
      %v1772 = vpack.c.b16 %v1488, %v1484
      %v1773 = vpack.c.b16 %v1489, %v1485
      %v1774 = vpack.c.b16 %v1490, %v1486
      %v1775 = vpack.c.b16 %v1491, %v1487
      %v1776 = vpack.c.b16 %v1496, %v1492
      %v1777 = vpack.c.b16 %v1497, %v1493
      %v1778 = vpack.c.b16 %v1498, %v1494
      %v1779 = vpack.c.b16 %v1499, %v1495
      %v1780 = vpack.c.b16 %v1504, %v1500
      %v1781 = vpack.c.b16 %v1505, %v1501
      %v1782 = vpack.c.b16 %v1506, %v1502
      %v1783 = vpack.c.b16 %v1507, %v1503
      %v1784 = vpack.c.b16 %v1512, %v1508
      %v1785 = vpack.c.b16 %v1513, %v1509
      %v1786 = vpack.c.b16 %v1514, %v1510
      %v1787 = vpack.c.b16 %v1515, %v1511
      %v1788 = vpack.c.b16 %v1520, %v1516
      %v1789 = vpack.c.b16 %v1521, %v1517
      %v1790 = vpack.c.b16 %v1522, %v1518
      %v1791 = vpack.c.b16 %v1523, %v1519
      %v1792 = vpack.c.b16 %v1528, %v1524
      %v1793 = vpack.c.b16 %v1529, %v1525
      %v1794 = vpack.c.b16 %v1530, %v1526
      %v1795 = vpack.c.b16 %v1531, %v1527
      %v1796 = vpack.c.b16 %v1536, %v1532
      %v1797 = vpack.c.b16 %v1537, %v1533
      %v1798 = vpack.c.b16 %v1538, %v1534
      %v1799 = vpack.c.b16 %v1539, %v1535
      %v1800 = vpack.c.b16 %v1544, %v1540
      %v1801 = vpack.c.b16 %v1545, %v1541
      %v1802 = vpack.c.b16 %v1546, %v1542
      %v1803 = vpack.c.b16 %v1547, %v1543
      %v1804 = vpack.c.b16 %v1552, %v1548
      %v1805 = vpack.c.b16 %v1553, %v1549
      %v1806 = vpack.c.b16 %v1554, %v1550
      %v1807 = vpack.c.b16 %v1555, %v1551
      %v1808 = vpack.c.b16 %v1560, %v1556
      %v1809 = vpack.c.b16 %v1561, %v1557
      %v1810 = vpack.c.b16 %v1562, %v1558
      %v1811 = vpack.c.b16 %v1563, %v1559
      %v1812 = vpack.c.b16 %v1568, %v1564
      %v1813 = vpack.c.b16 %v1569, %v1565
      %v1814 = vpack.c.b16 %v1570, %v1566
      %v1815 = vpack.c.b16 %v1571, %v1567
      %v1816 = vpack.c.b16 %v1576, %v1572
      %v1817 = vpack.c.b16 %v1577, %v1573
      %v1818 = vpack.c.b16 %v1578, %v1574
      %v1819 = vpack.c.b16 %v1579, %v1575
      %v1820 = vpack.c.b16 %v1584, %v1580
      %v1821 = vpack.c.b16 %v1585, %v1581
      %v1822 = vpack.c.b16 %v1586, %v1582
      %v1823 = vpack.c.b16 %v1587, %v1583
      %v1824 = vpack.c.b16 %v1592, %v1588
      %v1825 = vpack.c.b16 %v1593, %v1589
      %v1826 = vpack.c.b16 %v1594, %v1590
      %v1827 = vpack.c.b16 %v1595, %v1591
      %v1828 = vpack.c.b16 %v1600, %v1596
      %v1829 = vpack.c.b16 %v1601, %v1597
      %v1830 = vpack.c.b16 %v1602, %v1598
      %v1831 = vpack.c.b16 %v1603, %v1599
      %v1832 = vpack.c.b16 %v1608, %v1604
      %v1833 = vpack.c.b16 %v1609, %v1605
      %v1834 = vpack.c.b16 %v1610, %v1606
      %v1835 = vpack.c.b16 %v1611, %v1607
      %2060 = vmatprep.subr.bf16.mxu0 %v1641
      %2061 = vmatpush1.bf16.msra.mxu0 %v1640
      %2062 = vmatprep.subr.bf16.mxu0 %v1637
      %2063 = vmatpush1.bf16.msra.mxu0 %v1636
      %2064 = vmatprep.subr.bf16.mxu0 %v1633
      %2065 = vmatpush1.bf16.msra.mxu0 %v1632
      %2066 = vmatprep.subr.bf16.mxu0 %v1629
      %2067 = vmatpush1.bf16.msra.mxu0 %v1628
      %2068 = vmatprep.subr.bf16.mxu0 %v1625
      %2069 = vmatpush1.bf16.msra.mxu0 %v1624
      %2070 = vmatprep.subr.bf16.mxu0 %v1621
      %2071 = vmatpush1.bf16.msra.mxu0 %v1620
      %2072 = vmatprep.subr.bf16.mxu0 %v1617
      %2073 = vmatpush1.bf16.msra.mxu0 %v1616
      %2074 = vmatprep.subr.bf16.mxu0 %v1613
      %2075 = vmatpush1.bf16.msra.mxu0 %v1612
      %2076 = vmatprep.subr.bf16.mxu0 %v1673
      %2077 = vmatpush2.bf16.msra.mxu0 %v1672
      %2078 = vmatprep.subr.bf16.mxu0 %v1669
      %2079 = vmatpush2.bf16.msra.mxu0 %v1668
      %2080 = vmatprep.subr.bf16.mxu0 %v1665
      %2081 = vmatpush2.bf16.msra.mxu0 %v1664
      %2082 = vmatprep.subr.bf16.mxu0 %v1661
      %2083 = vmatpush2.bf16.msra.mxu0 %v1660
      %2084 = vmatprep.subr.bf16.mxu0 %v1657
      %2085 = vmatpush2.bf16.msra.mxu0 %v1656
      %2086 = vmatprep.subr.bf16.mxu0 %v1653
      %2087 = vmatpush2.bf16.msra.mxu0 %v1652
      %2088 = vmatprep.subr.bf16.mxu0 %v1649
      %2089 = vmatpush2.bf16.msra.mxu0 %v1648
      %2090 = vmatprep.subr.bf16.mxu0 %v1645
      %2091 = vmatpush2.bf16.msra.mxu0 %v1644
      %2092 = vmatprep.mubr.bf16.mxu0 %v829
      %2093 = vmatmul.mubr.bf16.gmra.mxu0 %v828
      %v2094 = vpop.f32.mrf.mxu0
      %v2095 = vadd.f32 %v635, %v2094
      %v2096 = vpop.f32.mrf.mxu0
      %v2097 = vadd.f32 %v639, %v2096
      %v2098 = vpop.f32.mrf.mxu0
      %v2099 = vadd.f32 %v635, %v2098
      %v2100 = vpop.f32.mrf.mxu0
      %v2101 = vadd.f32 %v639, %v2100
      %2102 = vmatprep.mubr.bf16.mxu0 %v836
      %2103 = vmatmul.mubr.bf16.gmra.mxu0 %v835
      %v2104 = vpop.f32.mrf.mxu0
      %v2105 = vadd.f32 %v635, %v2104
      %v2106 = vpop.f32.mrf.mxu0
      %v2107 = vadd.f32 %v639, %v2106
      %v2108 = vpop.f32.mrf.mxu0
      %v2109 = vadd.f32 %v635, %v2108
      %v2110 = vpop.f32.mrf.mxu0
      %v2111 = vadd.f32 %v639, %v2110
      %2112 = vmatprep.mubr.bf16.mxu0 %v843
      %2113 = vmatmul.mubr.bf16.gmra.mxu0 %v842
      %v2114 = vpop.f32.mrf.mxu0
      %v2115 = vadd.f32 %v635, %v2114
      %v2116 = vpop.f32.mrf.mxu0
      %v2117 = vadd.f32 %v639, %v2116
      %v2118 = vpop.f32.mrf.mxu0
      %v2119 = vadd.f32 %v635, %v2118
      %v2120 = vpop.f32.mrf.mxu0
      %v2121 = vadd.f32 %v639, %v2120
      %2122 = vmatprep.mubr.bf16.mxu0 %v850
      %2123 = vmatmul.mubr.bf16.gmra.mxu0 %v849
      %v2124 = vpop.f32.mrf.mxu0
      %v2125 = vadd.f32 %v635, %v2124
      %v2126 = vpop.f32.mrf.mxu0
      %v2127 = vadd.f32 %v639, %v2126
      %v2128 = vpop.f32.mrf.mxu0
      %v2129 = vadd.f32 %v635, %v2128
      %v2130 = vpop.f32.mrf.mxu0
      %v2131 = vadd.f32 %v639, %v2130
      %2132 = vmatprep.mubr.bf16.mxu0 %v857
      %2133 = vmatmul.mubr.bf16.gmra.mxu0 %v856
      %v2134 = vpop.f32.mrf.mxu0
      %v2135 = vadd.f32 %v635, %v2134
      %v2136 = vpop.f32.mrf.mxu0
      %v2137 = vadd.f32 %v639, %v2136
      %v2138 = vpop.f32.mrf.mxu0
      %v2139 = vadd.f32 %v635, %v2138
      %v2140 = vpop.f32.mrf.mxu0
      %v2141 = vadd.f32 %v639, %v2140
      %2142 = vmatprep.mubr.bf16.mxu0 %v864
      %2143 = vmatmul.mubr.bf16.gmra.mxu0 %v863
      %v2144 = vpop.f32.mrf.mxu0
      %v2145 = vadd.f32 %v635, %v2144
      %v2146 = vpop.f32.mrf.mxu0
      %v2147 = vadd.f32 %v639, %v2146
      %v2148 = vpop.f32.mrf.mxu0
      %v2149 = vadd.f32 %v635, %v2148
      %v2150 = vpop.f32.mrf.mxu0
      %v2151 = vadd.f32 %v639, %v2150
      %2152 = vmatprep.mubr.bf16.mxu0 %v871
      %2153 = vmatmul.mubr.bf16.gmra.mxu0 %v870
      %v2154 = vpop.f32.mrf.mxu0
      %v2155 = vadd.f32 %v635, %v2154
      %v2156 = vpop.f32.mrf.mxu0
      %v2157 = vadd.f32 %v639, %v2156
      %v2158 = vpop.f32.mrf.mxu0
      %v2159 = vadd.f32 %v635, %v2158
      %v2160 = vpop.f32.mrf.mxu0
      %v2161 = vadd.f32 %v639, %v2160
      %2162 = vmatprep.mubr.bf16.mxu0 %v878
      %2163 = vmatmul.mubr.bf16.gmra.mxu0 %v877
      %v2164 = vpop.f32.mrf.mxu0
      %v2165 = vadd.f32 %v635, %v2164
      %v2166 = vpop.f32.mrf.mxu0
      %v2167 = vadd.f32 %v639, %v2166
      %v2168 = vpop.f32.mrf.mxu0
      %v2169 = vadd.f32 %v635, %v2168
      %v2170 = vpop.f32.mrf.mxu0
      %v2171 = vadd.f32 %v639, %v2170
      %2172 = vdwg.mxu0
      %2173 = vmatprep.subr.bf16.mxu0 %v1705
      %2174 = vmatpush1.bf16.msra.mxu0 %v1704
      %2175 = vmatprep.subr.bf16.mxu0 %v1701
      %2176 = vmatpush1.bf16.msra.mxu0 %v1700
      %2177 = vmatprep.subr.bf16.mxu0 %v1697
      %2178 = vmatpush1.bf16.msra.mxu0 %v1696
      %2179 = vmatprep.subr.bf16.mxu0 %v1693
      %2180 = vmatpush1.bf16.msra.mxu0 %v1692
      %2181 = vmatprep.subr.bf16.mxu0 %v1689
      %2182 = vmatpush1.bf16.msra.mxu0 %v1688
      %2183 = vmatprep.subr.bf16.mxu0 %v1685
      %2184 = vmatpush1.bf16.msra.mxu0 %v1684
      %2185 = vmatprep.subr.bf16.mxu0 %v1681
      %2186 = vmatpush1.bf16.msra.mxu0 %v1680
      %2187 = vmatprep.subr.bf16.mxu0 %v1677
      %2188 = vmatpush1.bf16.msra.mxu0 %v1676
      %2189 = vmatprep.subr.bf16.mxu0 %v1737
      %2190 = vmatpush2.bf16.msra.mxu0 %v1736
      %2191 = vmatprep.subr.bf16.mxu0 %v1733
      %2192 = vmatpush2.bf16.msra.mxu0 %v1732
      %2193 = vmatprep.subr.bf16.mxu0 %v1729
      %2194 = vmatpush2.bf16.msra.mxu0 %v1728
      %2195 = vmatprep.subr.bf16.mxu0 %v1725
      %2196 = vmatpush2.bf16.msra.mxu0 %v1724
      %2197 = vmatprep.subr.bf16.mxu0 %v1721
      %2198 = vmatpush2.bf16.msra.mxu0 %v1720
      %2199 = vmatprep.subr.bf16.mxu0 %v1717
      %2200 = vmatpush2.bf16.msra.mxu0 %v1716
      %2201 = vmatprep.subr.bf16.mxu0 %v1713
      %2202 = vmatpush2.bf16.msra.mxu0 %v1712
      %2203 = vmatprep.subr.bf16.mxu0 %v1709
      %2204 = vmatpush2.bf16.msra.mxu0 %v1708
      %2205 = vmatprep.mubr.bf16.mxu0 %v831
      %2206 = vmatmul.mubr.bf16.gmra.mxu0 %v830
      %v2207 = vpop.f32.mrf.mxu0
      %v2208 = vadd.f32 %v2095, %v2207
      %v2209 = vpop.f32.mrf.mxu0
      %v2210 = vadd.f32 %v2097, %v2209
      %v2211 = vpop.f32.mrf.mxu0
      %v2212 = vadd.f32 %v2099, %v2211
      %v2213 = vpop.f32.mrf.mxu0
      %v2214 = vadd.f32 %v2101, %v2213
      %2215 = vmatprep.mubr.bf16.mxu0 %v838
      %2216 = vmatmul.mubr.bf16.gmra.mxu0 %v837
      %v2217 = vpop.f32.mrf.mxu0
      %v2218 = vadd.f32 %v2105, %v2217
      %v2219 = vpop.f32.mrf.mxu0
      %v2220 = vadd.f32 %v2107, %v2219
      %v2221 = vpop.f32.mrf.mxu0
      %v2222 = vadd.f32 %v2109, %v2221
      %v2223 = vpop.f32.mrf.mxu0
      %v2224 = vadd.f32 %v2111, %v2223
      %2225 = vmatprep.mubr.bf16.mxu0 %v845
      %2226 = vmatmul.mubr.bf16.gmra.mxu0 %v844
      %v2227 = vpop.f32.mrf.mxu0
      %v2228 = vadd.f32 %v2115, %v2227
      %v2229 = vpop.f32.mrf.mxu0
      %v2230 = vadd.f32 %v2117, %v2229
      %v2231 = vpop.f32.mrf.mxu0
      %v2232 = vadd.f32 %v2119, %v2231
      %v2233 = vpop.f32.mrf.mxu0
      %v2234 = vadd.f32 %v2121, %v2233
      %2235 = vmatprep.mubr.bf16.mxu0 %v852
      %2236 = vmatmul.mubr.bf16.gmra.mxu0 %v851
      %v2237 = vpop.f32.mrf.mxu0
      %v2238 = vadd.f32 %v2125, %v2237
      %v2239 = vpop.f32.mrf.mxu0
      %v2240 = vadd.f32 %v2127, %v2239
      %v2241 = vpop.f32.mrf.mxu0
      %v2242 = vadd.f32 %v2129, %v2241
      %v2243 = vpop.f32.mrf.mxu0
      %v2244 = vadd.f32 %v2131, %v2243
      %2245 = vmatprep.mubr.bf16.mxu0 %v859
      %2246 = vmatmul.mubr.bf16.gmra.mxu0 %v858
      %v2247 = vpop.f32.mrf.mxu0
      %v2248 = vadd.f32 %v2135, %v2247
      %v2249 = vpop.f32.mrf.mxu0
      %v2250 = vadd.f32 %v2137, %v2249
      %v2251 = vpop.f32.mrf.mxu0
      %v2252 = vadd.f32 %v2139, %v2251
      %v2253 = vpop.f32.mrf.mxu0
      %v2254 = vadd.f32 %v2141, %v2253
      %2255 = vmatprep.mubr.bf16.mxu0 %v866
      %2256 = vmatmul.mubr.bf16.gmra.mxu0 %v865
      %v2257 = vpop.f32.mrf.mxu0
      %v2258 = vadd.f32 %v2145, %v2257
      %v2259 = vpop.f32.mrf.mxu0
      %v2260 = vadd.f32 %v2147, %v2259
      %v2261 = vpop.f32.mrf.mxu0
      %v2262 = vadd.f32 %v2149, %v2261
      %v2263 = vpop.f32.mrf.mxu0
      %v2264 = vadd.f32 %v2151, %v2263
      %2265 = vmatprep.mubr.bf16.mxu0 %v873
      %2266 = vmatmul.mubr.bf16.gmra.mxu0 %v872
      %v2267 = vpop.f32.mrf.mxu0
      %v2268 = vadd.f32 %v2155, %v2267
      %v2269 = vpop.f32.mrf.mxu0
      %v2270 = vadd.f32 %v2157, %v2269
      %v2271 = vpop.f32.mrf.mxu0
      %v2272 = vadd.f32 %v2159, %v2271
      %v2273 = vpop.f32.mrf.mxu0
      %v2274 = vadd.f32 %v2161, %v2273
      %2275 = vmatprep.mubr.bf16.mxu0 %v880
      %2276 = vmatmul.mubr.bf16.gmra.mxu0 %v879
      %v2277 = vpop.f32.mrf.mxu0
      %v2278 = vadd.f32 %v2165, %v2277
      %v2279 = vpop.f32.mrf.mxu0
      %v2280 = vadd.f32 %v2167, %v2279
      %v2281 = vpop.f32.mrf.mxu0
      %v2282 = vadd.f32 %v2169, %v2281
      %v2283 = vpop.f32.mrf.mxu0
      %v2284 = vadd.f32 %v2171, %v2283
      %2285 = vdwg.mxu0
      %2286 = vmatprep.subr.bf16.mxu0 %v1769
      %2287 = vmatpush1.bf16.msra.mxu0 %v1768
      %2288 = vmatprep.subr.bf16.mxu0 %v1765
      %2289 = vmatpush1.bf16.msra.mxu0 %v1764
      %2290 = vmatprep.subr.bf16.mxu0 %v1761
      %2291 = vmatpush1.bf16.msra.mxu0 %v1760
      %2292 = vmatprep.subr.bf16.mxu0 %v1757
      %2293 = vmatpush1.bf16.msra.mxu0 %v1756
      %2294 = vmatprep.subr.bf16.mxu0 %v1753
      %2295 = vmatpush1.bf16.msra.mxu0 %v1752
      %2296 = vmatprep.subr.bf16.mxu0 %v1749
      %2297 = vmatpush1.bf16.msra.mxu0 %v1748
      %2298 = vmatprep.subr.bf16.mxu0 %v1745
      %2299 = vmatpush1.bf16.msra.mxu0 %v1744
      %2300 = vmatprep.subr.bf16.mxu0 %v1741
      %2301 = vmatpush1.bf16.msra.mxu0 %v1740
      %2302 = vmatprep.subr.bf16.mxu0 %v1801
      %2303 = vmatpush2.bf16.msra.mxu0 %v1800
      %2304 = vmatprep.subr.bf16.mxu0 %v1797
      %2305 = vmatpush2.bf16.msra.mxu0 %v1796
      %2306 = vmatprep.subr.bf16.mxu0 %v1793
      %2307 = vmatpush2.bf16.msra.mxu0 %v1792
      %2308 = vmatprep.subr.bf16.mxu0 %v1789
      %2309 = vmatpush2.bf16.msra.mxu0 %v1788
      %2310 = vmatprep.subr.bf16.mxu0 %v1785
      %2311 = vmatpush2.bf16.msra.mxu0 %v1784
      %2312 = vmatprep.subr.bf16.mxu0 %v1781
      %2313 = vmatpush2.bf16.msra.mxu0 %v1780
      %2314 = vmatprep.subr.bf16.mxu0 %v1777
      %2315 = vmatpush2.bf16.msra.mxu0 %v1776
      %2316 = vmatprep.subr.bf16.mxu0 %v1773
      %2317 = vmatpush2.bf16.msra.mxu0 %v1772
      %2318 = vmatprep.mubr.bf16.mxu0 %v833
      %2319 = vmatmul.mubr.bf16.gmra.mxu0 %v832
      %v2320 = vpop.f32.mrf.mxu0
      %v2321 = vadd.f32 %v2208, %v2320
      %v2322 = vpop.f32.mrf.mxu0
      %v2323 = vadd.f32 %v2210, %v2322
      %v2324 = vpop.f32.mrf.mxu0
      %v2325 = vadd.f32 %v2212, %v2324
      %v2326 = vpop.f32.mrf.mxu0
      %v2327 = vadd.f32 %v2214, %v2326
      %2328 = vmatprep.mubr.bf16.mxu0 %v840
      %2329 = vmatmul.mubr.bf16.gmra.mxu0 %v839
      %v2330 = vpop.f32.mrf.mxu0
      %v2331 = vadd.f32 %v2218, %v2330
      %v2332 = vpop.f32.mrf.mxu0
      %v2333 = vadd.f32 %v2220, %v2332
      %v2334 = vpop.f32.mrf.mxu0
      %v2335 = vadd.f32 %v2222, %v2334
      %v2336 = vpop.f32.mrf.mxu0
      %v2337 = vadd.f32 %v2224, %v2336
      %2338 = vmatprep.mubr.bf16.mxu0 %v847
      %2339 = vmatmul.mubr.bf16.gmra.mxu0 %v846
      %v2340 = vpop.f32.mrf.mxu0
      %v2341 = vadd.f32 %v2228, %v2340
      %v2342 = vpop.f32.mrf.mxu0
      %v2343 = vadd.f32 %v2230, %v2342
      %v2344 = vpop.f32.mrf.mxu0
      %v2345 = vadd.f32 %v2232, %v2344
      %v2346 = vpop.f32.mrf.mxu0
      %v2347 = vadd.f32 %v2234, %v2346
      %2348 = vmatprep.mubr.bf16.mxu0 %v854
      %2349 = vmatmul.mubr.bf16.gmra.mxu0 %v853
      %v2350 = vpop.f32.mrf.mxu0
      %v2351 = vadd.f32 %v2238, %v2350
      %v2352 = vpop.f32.mrf.mxu0
      %v2353 = vadd.f32 %v2240, %v2352
      %v2354 = vpop.f32.mrf.mxu0
      %v2355 = vadd.f32 %v2242, %v2354
      %v2356 = vpop.f32.mrf.mxu0
      %v2357 = vadd.f32 %v2244, %v2356
      %2358 = vmatprep.mubr.bf16.mxu0 %v861
      %2359 = vmatmul.mubr.bf16.gmra.mxu0 %v860
      %v2360 = vpop.f32.mrf.mxu0
      %v2361 = vadd.f32 %v2248, %v2360
      %v2362 = vpop.f32.mrf.mxu0
      %v2363 = vadd.f32 %v2250, %v2362
      %v2364 = vpop.f32.mrf.mxu0
      %v2365 = vadd.f32 %v2252, %v2364
      %v2366 = vpop.f32.mrf.mxu0
      %v2367 = vadd.f32 %v2254, %v2366
      %2368 = vmatprep.mubr.bf16.mxu0 %v868
      %2369 = vmatmul.mubr.bf16.gmra.mxu0 %v867
      %v2370 = vpop.f32.mrf.mxu0
      %v2371 = vadd.f32 %v2258, %v2370
      %v2372 = vpop.f32.mrf.mxu0
      %v2373 = vadd.f32 %v2260, %v2372
      %v2374 = vpop.f32.mrf.mxu0
      %v2375 = vadd.f32 %v2262, %v2374
      %v2376 = vpop.f32.mrf.mxu0
      %v2377 = vadd.f32 %v2264, %v2376
      %2378 = vmatprep.mubr.bf16.mxu0 %v875
      %2379 = vmatmul.mubr.bf16.gmra.mxu0 %v874
      %v2380 = vpop.f32.mrf.mxu0
      %v2381 = vadd.f32 %v2268, %v2380
      %v2382 = vpop.f32.mrf.mxu0
      %v2383 = vadd.f32 %v2270, %v2382
      %v2384 = vpop.f32.mrf.mxu0
      %v2385 = vadd.f32 %v2272, %v2384
      %v2386 = vpop.f32.mrf.mxu0
      %v2387 = vadd.f32 %v2274, %v2386
      %2388 = vmatprep.mubr.bf16.mxu0 %v882
      %2389 = vmatmul.mubr.bf16.gmra.mxu0 %v881
      %v2390 = vpop.f32.mrf.mxu0
      %v2391 = vadd.f32 %v2278, %v2390
      %v2392 = vpop.f32.mrf.mxu0
      %v2393 = vadd.f32 %v2280, %v2392
      %v2394 = vpop.f32.mrf.mxu0
      %v2395 = vadd.f32 %v2282, %v2394
      %v2396 = vpop.f32.mrf.mxu0
      %v2397 = vadd.f32 %v2284, %v2396
      %2398 = vdwg.mxu0
      %2399 = vmatprep.subr.bf16.mxu0 %v1833
      %2400 = vmatpush1.bf16.msra.mxu0 %v1832
      %2401 = vmatprep.subr.bf16.mxu0 %v1829
      %2402 = vmatpush1.bf16.msra.mxu0 %v1828
      %2403 = vmatprep.subr.bf16.mxu0 %v1825
      %2404 = vmatpush1.bf16.msra.mxu0 %v1824
      %2405 = vmatprep.subr.bf16.mxu0 %v1821
      %2406 = vmatpush1.bf16.msra.mxu0 %v1820
      %2407 = vmatprep.subr.bf16.mxu0 %v1817
      %2408 = vmatpush1.bf16.msra.mxu0 %v1816
      %2409 = vmatprep.subr.bf16.mxu0 %v1813
      %2410 = vmatpush1.bf16.msra.mxu0 %v1812
      %2411 = vmatprep.subr.bf16.mxu0 %v1809
      %2412 = vmatpush1.bf16.msra.mxu0 %v1808
      %2413 = vmatprep.subr.bf16.mxu0 %v1805
      %2414 = vmatpush1.bf16.msra.mxu0 %v1804
      %2415 = vmatprep.subr.bf16.mxu0 0
      %2416 = vmatpush2.bf16.msra.mxu0 0
      %2417 = vmatprep.subr.bf16.mxu0 0
      %2418 = vmatpush2.bf16.msra.mxu0 0
      %2419 = vmatprep.subr.bf16.mxu0 0
      %2420 = vmatpush2.bf16.msra.mxu0 0
      %2421 = vmatprep.subr.bf16.mxu0 0
      %2422 = vmatpush2.bf16.msra.mxu0 0
      %2423 = vmatprep.subr.bf16.mxu0 0
      %2424 = vmatpush2.bf16.msra.mxu0 0
      %2425 = vmatprep.subr.bf16.mxu0 0
      %2426 = vmatpush2.bf16.msra.mxu0 0
      %2427 = vmatprep.subr.bf16.mxu0 0
      %2428 = vmatpush2.bf16.msra.mxu0 0
      %2429 = vmatprep.subr.bf16.mxu0 0
      %2430 = vmatpush2.bf16.msra.mxu0 0
      %2431 = vmatprep.mubr.bf16.mxu0 0
      %2432 = vmatmul.mubr.bf16.gmra.mxu0 %v834
      %v2433 = vpop.f32.mrf.mxu0
      %v2434 = vadd.f32 %v2321, %v2433
      %v2435 = vpop.f32.mrf.mxu0
      %v2436 = vadd.f32 %v2323, %v2435
      %v2437 = vpop.f32.mrf.mxu0
      %v2438 = vadd.f32 %v2325, %v2437
      %v2439 = vpop.f32.mrf.mxu0
      %v2440 = vadd.f32 %v2327, %v2439
      %2441 = vmatprep.mubr.bf16.mxu0 0
      %2442 = vmatmul.mubr.bf16.gmra.mxu0 %v841
      %v2443 = vpop.f32.mrf.mxu0
      %v2444 = vadd.f32 %v2331, %v2443
      %v2445 = vpop.f32.mrf.mxu0
      %v2446 = vadd.f32 %v2333, %v2445
      %v2447 = vpop.f32.mrf.mxu0
      %v2448 = vadd.f32 %v2335, %v2447
      %v2449 = vpop.f32.mrf.mxu0
      %v2450 = vadd.f32 %v2337, %v2449
      %2451 = vmatprep.mubr.bf16.mxu0 0
      %2452 = vmatmul.mubr.bf16.gmra.mxu0 %v848
      %v2453 = vpop.f32.mrf.mxu0
      %v2454 = vadd.f32 %v2341, %v2453
      %v2455 = vpop.f32.mrf.mxu0
      %v2456 = vadd.f32 %v2343, %v2455
      %v2457 = vpop.f32.mrf.mxu0
      %v2458 = vadd.f32 %v2345, %v2457
      %v2459 = vpop.f32.mrf.mxu0
      %v2460 = vadd.f32 %v2347, %v2459
      %2461 = vmatprep.mubr.bf16.mxu0 0
      %2462 = vmatmul.mubr.bf16.gmra.mxu0 %v855
      %v2463 = vpop.f32.mrf.mxu0
      %v2464 = vadd.f32 %v2351, %v2463
      %v2465 = vpop.f32.mrf.mxu0
      %v2466 = vadd.f32 %v2353, %v2465
      %v2467 = vpop.f32.mrf.mxu0
      %v2468 = vadd.f32 %v2355, %v2467
      %v2469 = vpop.f32.mrf.mxu0
      %v2470 = vadd.f32 %v2357, %v2469
      %2471 = vmatprep.mubr.bf16.mxu0 0
      %2472 = vmatmul.mubr.bf16.gmra.mxu0 %v862
      %v2473 = vpop.f32.mrf.mxu0
      %v2474 = vadd.f32 %v2361, %v2473
      %v2475 = vpop.f32.mrf.mxu0
      %v2476 = vadd.f32 %v2363, %v2475
      %v2477 = vpop.f32.mrf.mxu0
      %v2478 = vadd.f32 %v2365, %v2477
      %v2479 = vpop.f32.mrf.mxu0
      %v2480 = vadd.f32 %v2367, %v2479
      %2481 = vmatprep.mubr.bf16.mxu0 0
      %2482 = vmatmul.mubr.bf16.gmra.mxu0 %v869
      %v2483 = vpop.f32.mrf.mxu0
      %v2484 = vadd.f32 %v2371, %v2483
      %v2485 = vpop.f32.mrf.mxu0
      %v2486 = vadd.f32 %v2373, %v2485
      %v2487 = vpop.f32.mrf.mxu0
      %v2488 = vadd.f32 %v2375, %v2487
      %v2489 = vpop.f32.mrf.mxu0
      %v2490 = vadd.f32 %v2377, %v2489
      %2491 = vmatprep.mubr.bf16.mxu0 0
      %2492 = vmatmul.mubr.bf16.gmra.mxu0 %v876
      %v2493 = vpop.f32.mrf.mxu0
      %v2494 = vadd.f32 %v2381, %v2493
      %v2495 = vpop.f32.mrf.mxu0
      %v2496 = vadd.f32 %v2383, %v2495
      %v2497 = vpop.f32.mrf.mxu0
      %v2498 = vadd.f32 %v2385, %v2497
      %v2499 = vpop.f32.mrf.mxu0
      %v2500 = vadd.f32 %v2387, %v2499
      %2501 = vmatprep.mubr.bf16.mxu0 0
      %2502 = vmatmul.mubr.bf16.gmra.mxu0 %v883
      %v2503 = vpop.f32.mrf.mxu0
      %v2504 = vadd.f32 %v2391, %v2503
      %v2505 = vpop.f32.mrf.mxu0
      %v2506 = vadd.f32 %v2393, %v2505
      %v2507 = vpop.f32.mrf.mxu0
      %v2508 = vadd.f32 %v2395, %v2507
      %v2509 = vpop.f32.mrf.mxu0
      %v2510 = vadd.f32 %v2397, %v2509
      %2511 = vdwg.mxu0
      %2512 = vmatprep.subr.bf16.mxu0 %v1643
      %2513 = vmatpush1.bf16.msra.mxu0 %v1642
      %2514 = vmatprep.subr.bf16.mxu0 %v1639
      %2515 = vmatpush1.bf16.msra.mxu0 %v1638
      %2516 = vmatprep.subr.bf16.mxu0 %v1635
      %2517 = vmatpush1.bf16.msra.mxu0 %v1634
      %2518 = vmatprep.subr.bf16.mxu0 %v1631
      %2519 = vmatpush1.bf16.msra.mxu0 %v1630
      %2520 = vmatprep.subr.bf16.mxu0 %v1627
      %2521 = vmatpush1.bf16.msra.mxu0 %v1626
      %2522 = vmatprep.subr.bf16.mxu0 %v1623
      %2523 = vmatpush1.bf16.msra.mxu0 %v1622
      %2524 = vmatprep.subr.bf16.mxu0 %v1619
      %2525 = vmatpush1.bf16.msra.mxu0 %v1618
      %2526 = vmatprep.subr.bf16.mxu0 %v1615
      %2527 = vmatpush1.bf16.msra.mxu0 %v1614
      %2528 = vmatprep.subr.bf16.mxu0 %v1675
      %2529 = vmatpush2.bf16.msra.mxu0 %v1674
      %2530 = vmatprep.subr.bf16.mxu0 %v1671
      %2531 = vmatpush2.bf16.msra.mxu0 %v1670
      %2532 = vmatprep.subr.bf16.mxu0 %v1667
      %2533 = vmatpush2.bf16.msra.mxu0 %v1666
      %2534 = vmatprep.subr.bf16.mxu0 %v1663
      %2535 = vmatpush2.bf16.msra.mxu0 %v1662
      %2536 = vmatprep.subr.bf16.mxu0 %v1659
      %2537 = vmatpush2.bf16.msra.mxu0 %v1658
      %2538 = vmatprep.subr.bf16.mxu0 %v1655
      %2539 = vmatpush2.bf16.msra.mxu0 %v1654
      %2540 = vmatprep.subr.bf16.mxu0 %v1651
      %2541 = vmatpush2.bf16.msra.mxu0 %v1650
      %2542 = vmatprep.subr.bf16.mxu0 %v1647
      %2543 = vmatpush2.bf16.msra.mxu0 %v1646
      %2544 = vmatprep.mubr.bf16.mxu0 %v829
      %2545 = vmatmul.mubr.bf16.gmra.mxu0 %v828
      %v2546 = vpop.f32.mrf.mxu0
      %v2547 = vadd.f32 %v643, %v2546
      %v2548 = vpop.f32.mrf.mxu0
      %v2549 = vadd.f32 %v647, %v2548
      %v2550 = vpop.f32.mrf.mxu0
      %v2551 = vadd.f32 %v643, %v2550
      %v2552 = vpop.f32.mrf.mxu0
      %v2553 = vadd.f32 %v647, %v2552
      %2554 = vmatprep.mubr.bf16.mxu0 %v836
      %2555 = vmatmul.mubr.bf16.gmra.mxu0 %v835
      %v2556 = vpop.f32.mrf.mxu0
      %v2557 = vadd.f32 %v643, %v2556
      %v2558 = vpop.f32.mrf.mxu0
      %v2559 = vadd.f32 %v647, %v2558
      %v2560 = vpop.f32.mrf.mxu0
      %v2561 = vadd.f32 %v643, %v2560
      %v2562 = vpop.f32.mrf.mxu0
      %v2563 = vadd.f32 %v647, %v2562
      %2564 = vmatprep.mubr.bf16.mxu0 %v843
      %2565 = vmatmul.mubr.bf16.gmra.mxu0 %v842
      %v2566 = vpop.f32.mrf.mxu0
      %v2567 = vadd.f32 %v643, %v2566
      %v2568 = vpop.f32.mrf.mxu0
      %v2569 = vadd.f32 %v647, %v2568
      %v2570 = vpop.f32.mrf.mxu0
      %v2571 = vadd.f32 %v643, %v2570
      %v2572 = vpop.f32.mrf.mxu0
      %v2573 = vadd.f32 %v647, %v2572
      %2574 = vmatprep.mubr.bf16.mxu0 %v850
      %2575 = vmatmul.mubr.bf16.gmra.mxu0 %v849
      %v2576 = vpop.f32.mrf.mxu0
      %v2577 = vadd.f32 %v643, %v2576
      %v2578 = vpop.f32.mrf.mxu0
      %v2579 = vadd.f32 %v647, %v2578
      %v2580 = vpop.f32.mrf.mxu0
      %v2581 = vadd.f32 %v643, %v2580
      %v2582 = vpop.f32.mrf.mxu0
      %v2583 = vadd.f32 %v647, %v2582
      %2584 = vmatprep.mubr.bf16.mxu0 %v857
      %2585 = vmatmul.mubr.bf16.gmra.mxu0 %v856
      %v2586 = vpop.f32.mrf.mxu0
      %v2587 = vadd.f32 %v643, %v2586
      %v2588 = vpop.f32.mrf.mxu0
      %v2589 = vadd.f32 %v647, %v2588
      %v2590 = vpop.f32.mrf.mxu0
      %v2591 = vadd.f32 %v643, %v2590
      %v2592 = vpop.f32.mrf.mxu0
      %v2593 = vadd.f32 %v647, %v2592
      %2594 = vmatprep.mubr.bf16.mxu0 %v864
      %2595 = vmatmul.mubr.bf16.gmra.mxu0 %v863
      %v2596 = vpop.f32.mrf.mxu0
      %v2597 = vadd.f32 %v643, %v2596
      %v2598 = vpop.f32.mrf.mxu0
      %v2599 = vadd.f32 %v647, %v2598
      %v2600 = vpop.f32.mrf.mxu0
      %v2601 = vadd.f32 %v643, %v2600
      %v2602 = vpop.f32.mrf.mxu0
      %v2603 = vadd.f32 %v647, %v2602
      %2604 = vmatprep.mubr.bf16.mxu0 %v871
      %2605 = vmatmul.mubr.bf16.gmra.mxu0 %v870
      %v2606 = vpop.f32.mrf.mxu0
      %v2607 = vadd.f32 %v643, %v2606
      %v2608 = vpop.f32.mrf.mxu0
      %v2609 = vadd.f32 %v647, %v2608
      %v2610 = vpop.f32.mrf.mxu0
      %v2611 = vadd.f32 %v643, %v2610
      %v2612 = vpop.f32.mrf.mxu0
      %v2613 = vadd.f32 %v647, %v2612
      %2614 = vmatprep.mubr.bf16.mxu0 %v878
      %2615 = vmatmul.mubr.bf16.gmra.mxu0 %v877
      %v2616 = vpop.f32.mrf.mxu0
      %v2617 = vadd.f32 %v643, %v2616
      %v2618 = vpop.f32.mrf.mxu0
      %v2619 = vadd.f32 %v647, %v2618
      %v2620 = vpop.f32.mrf.mxu0
      %v2621 = vadd.f32 %v643, %v2620
      %v2622 = vpop.f32.mrf.mxu0
      %v2623 = vadd.f32 %v647, %v2622
      %2624 = vdwg.mxu0
      %2625 = vmatprep.subr.bf16.mxu0 %v1707
      %2626 = vmatpush1.bf16.msra.mxu0 %v1706
      %2627 = vmatprep.subr.bf16.mxu0 %v1703
      %2628 = vmatpush1.bf16.msra.mxu0 %v1702
      %2629 = vmatprep.subr.bf16.mxu0 %v1699
      %2630 = vmatpush1.bf16.msra.mxu0 %v1698
      %2631 = vmatprep.subr.bf16.mxu0 %v1695
      %2632 = vmatpush1.bf16.msra.mxu0 %v1694
      %2633 = vmatprep.subr.bf16.mxu0 %v1691
      %2634 = vmatpush1.bf16.msra.mxu0 %v1690
      %2635 = vmatprep.subr.bf16.mxu0 %v1687
      %2636 = vmatpush1.bf16.msra.mxu0 %v1686
      %2637 = vmatprep.subr.bf16.mxu0 %v1683
      %2638 = vmatpush1.bf16.msra.mxu0 %v1682
      %2639 = vmatprep.subr.bf16.mxu0 %v1679
      %2640 = vmatpush1.bf16.msra.mxu0 %v1678
      %2641 = vmatprep.subr.bf16.mxu0 %v1739
      %2642 = vmatpush2.bf16.msra.mxu0 %v1738
      %2643 = vmatprep.subr.bf16.mxu0 %v1735
      %2644 = vmatpush2.bf16.msra.mxu0 %v1734
      %2645 = vmatprep.subr.bf16.mxu0 %v1731
      %2646 = vmatpush2.bf16.msra.mxu0 %v1730
      %2647 = vmatprep.subr.bf16.mxu0 %v1727
      %2648 = vmatpush2.bf16.msra.mxu0 %v1726
      %2649 = vmatprep.subr.bf16.mxu0 %v1723
      %2650 = vmatpush2.bf16.msra.mxu0 %v1722
      %2651 = vmatprep.subr.bf16.mxu0 %v1719
      %2652 = vmatpush2.bf16.msra.mxu0 %v1718
      %2653 = vmatprep.subr.bf16.mxu0 %v1715
      %2654 = vmatpush2.bf16.msra.mxu0 %v1714
      %2655 = vmatprep.subr.bf16.mxu0 %v1711
      %2656 = vmatpush2.bf16.msra.mxu0 %v1710
      %2657 = vmatprep.mubr.bf16.mxu0 %v831
      %2658 = vmatmul.mubr.bf16.gmra.mxu0 %v830
      %v2659 = vpop.f32.mrf.mxu0
      %v2660 = vadd.f32 %v2547, %v2659
      %v2661 = vpop.f32.mrf.mxu0
      %v2662 = vadd.f32 %v2549, %v2661
      %v2663 = vpop.f32.mrf.mxu0
      %v2664 = vadd.f32 %v2551, %v2663
      %v2665 = vpop.f32.mrf.mxu0
      %v2666 = vadd.f32 %v2553, %v2665
      %2667 = vmatprep.mubr.bf16.mxu0 %v838
      %2668 = vmatmul.mubr.bf16.gmra.mxu0 %v837
      %v2669 = vpop.f32.mrf.mxu0
      %v2670 = vadd.f32 %v2557, %v2669
      %v2671 = vpop.f32.mrf.mxu0
      %v2672 = vadd.f32 %v2559, %v2671
      %v2673 = vpop.f32.mrf.mxu0
      %v2674 = vadd.f32 %v2561, %v2673
      %v2675 = vpop.f32.mrf.mxu0
      %v2676 = vadd.f32 %v2563, %v2675
      %2677 = vmatprep.mubr.bf16.mxu0 %v845
      %2678 = vmatmul.mubr.bf16.gmra.mxu0 %v844
      %v2679 = vpop.f32.mrf.mxu0
      %v2680 = vadd.f32 %v2567, %v2679
      %v2681 = vpop.f32.mrf.mxu0
      %v2682 = vadd.f32 %v2569, %v2681
      %v2683 = vpop.f32.mrf.mxu0
      %v2684 = vadd.f32 %v2571, %v2683
      %v2685 = vpop.f32.mrf.mxu0
      %v2686 = vadd.f32 %v2573, %v2685
      %2687 = vmatprep.mubr.bf16.mxu0 %v852
      %2688 = vmatmul.mubr.bf16.gmra.mxu0 %v851
      %v2689 = vpop.f32.mrf.mxu0
      %v2690 = vadd.f32 %v2577, %v2689
      %v2691 = vpop.f32.mrf.mxu0
      %v2692 = vadd.f32 %v2579, %v2691
      %v2693 = vpop.f32.mrf.mxu0
      %v2694 = vadd.f32 %v2581, %v2693
      %v2695 = vpop.f32.mrf.mxu0
      %v2696 = vadd.f32 %v2583, %v2695
      %2697 = vmatprep.mubr.bf16.mxu0 %v859
      %2698 = vmatmul.mubr.bf16.gmra.mxu0 %v858
      %v2699 = vpop.f32.mrf.mxu0
      %v2700 = vadd.f32 %v2587, %v2699
      %v2701 = vpop.f32.mrf.mxu0
      %v2702 = vadd.f32 %v2589, %v2701
      %v2703 = vpop.f32.mrf.mxu0
      %v2704 = vadd.f32 %v2591, %v2703
      %v2705 = vpop.f32.mrf.mxu0
      %v2706 = vadd.f32 %v2593, %v2705
      %2707 = vmatprep.mubr.bf16.mxu0 %v866
      %2708 = vmatmul.mubr.bf16.gmra.mxu0 %v865
      %v2709 = vpop.f32.mrf.mxu0
      %v2710 = vadd.f32 %v2597, %v2709
      %v2711 = vpop.f32.mrf.mxu0
      %v2712 = vadd.f32 %v2599, %v2711
      %v2713 = vpop.f32.mrf.mxu0
      %v2714 = vadd.f32 %v2601, %v2713
      %v2715 = vpop.f32.mrf.mxu0
      %v2716 = vadd.f32 %v2603, %v2715
      %2717 = vmatprep.mubr.bf16.mxu0 %v873
      %2718 = vmatmul.mubr.bf16.gmra.mxu0 %v872
      %v2719 = vpop.f32.mrf.mxu0
      %v2720 = vadd.f32 %v2607, %v2719
      %v2721 = vpop.f32.mrf.mxu0
      %v2722 = vadd.f32 %v2609, %v2721
      %v2723 = vpop.f32.mrf.mxu0
      %v2724 = vadd.f32 %v2611, %v2723
      %v2725 = vpop.f32.mrf.mxu0
      %v2726 = vadd.f32 %v2613, %v2725
      %2727 = vmatprep.mubr.bf16.mxu0 %v880
      %2728 = vmatmul.mubr.bf16.gmra.mxu0 %v879
      %v2729 = vpop.f32.mrf.mxu0
      %v2730 = vadd.f32 %v2617, %v2729
      %v2731 = vpop.f32.mrf.mxu0
      %v2732 = vadd.f32 %v2619, %v2731
      %v2733 = vpop.f32.mrf.mxu0
      %v2734 = vadd.f32 %v2621, %v2733
      %v2735 = vpop.f32.mrf.mxu0
      %v2736 = vadd.f32 %v2623, %v2735
      %2737 = vdwg.mxu0
      %2738 = vmatprep.subr.bf16.mxu0 %v1771
      %2739 = vmatpush1.bf16.msra.mxu0 %v1770
      %2740 = vmatprep.subr.bf16.mxu0 %v1767
      %2741 = vmatpush1.bf16.msra.mxu0 %v1766
      %2742 = vmatprep.subr.bf16.mxu0 %v1763
      %2743 = vmatpush1.bf16.msra.mxu0 %v1762
      %2744 = vmatprep.subr.bf16.mxu0 %v1759
      %2745 = vmatpush1.bf16.msra.mxu0 %v1758
      %2746 = vmatprep.subr.bf16.mxu0 %v1755
      %2747 = vmatpush1.bf16.msra.mxu0 %v1754
      %2748 = vmatprep.subr.bf16.mxu0 %v1751
      %2749 = vmatpush1.bf16.msra.mxu0 %v1750
      %2750 = vmatprep.subr.bf16.mxu0 %v1747
      %2751 = vmatpush1.bf16.msra.mxu0 %v1746
      %2752 = vmatprep.subr.bf16.mxu0 %v1743
      %2753 = vmatpush1.bf16.msra.mxu0 %v1742
      %2754 = vmatprep.subr.bf16.mxu0 %v1803
      %2755 = vmatpush2.bf16.msra.mxu0 %v1802
      %2756 = vmatprep.subr.bf16.mxu0 %v1799
      %2757 = vmatpush2.bf16.msra.mxu0 %v1798
      %2758 = vmatprep.subr.bf16.mxu0 %v1795
      %2759 = vmatpush2.bf16.msra.mxu0 %v1794
      %2760 = vmatprep.subr.bf16.mxu0 %v1791
      %2761 = vmatpush2.bf16.msra.mxu0 %v1790
      %2762 = vmatprep.subr.bf16.mxu0 %v1787
      %2763 = vmatpush2.bf16.msra.mxu0 %v1786
      %2764 = vmatprep.subr.bf16.mxu0 %v1783
      %2765 = vmatpush2.bf16.msra.mxu0 %v1782
      %2766 = vmatprep.subr.bf16.mxu0 %v1779
      %2767 = vmatpush2.bf16.msra.mxu0 %v1778
      %2768 = vmatprep.subr.bf16.mxu0 %v1775
      %2769 = vmatpush2.bf16.msra.mxu0 %v1774
      %2770 = vmatprep.mubr.bf16.mxu0 %v833
      %2771 = vmatmul.mubr.bf16.gmra.mxu0 %v832
      %v2772 = vpop.f32.mrf.mxu0
      %v2773 = vadd.f32 %v2660, %v2772
      %v2774 = vpop.f32.mrf.mxu0
      %v2775 = vadd.f32 %v2662, %v2774
      %v2776 = vpop.f32.mrf.mxu0
      %v2777 = vadd.f32 %v2664, %v2776
      %v2778 = vpop.f32.mrf.mxu0
      %v2779 = vadd.f32 %v2666, %v2778
      %2780 = vmatprep.mubr.bf16.mxu0 %v840
      %2781 = vmatmul.mubr.bf16.gmra.mxu0 %v839
      %v2782 = vpop.f32.mrf.mxu0
      %v2783 = vadd.f32 %v2670, %v2782
      %v2784 = vpop.f32.mrf.mxu0
      %v2785 = vadd.f32 %v2672, %v2784
      %v2786 = vpop.f32.mrf.mxu0
      %v2787 = vadd.f32 %v2674, %v2786
      %v2788 = vpop.f32.mrf.mxu0
      %v2789 = vadd.f32 %v2676, %v2788
      %2790 = vmatprep.mubr.bf16.mxu0 %v847
      %2791 = vmatmul.mubr.bf16.gmra.mxu0 %v846
      %v2792 = vpop.f32.mrf.mxu0
      %v2793 = vadd.f32 %v2680, %v2792
      %v2794 = vpop.f32.mrf.mxu0
      %v2795 = vadd.f32 %v2682, %v2794
      %v2796 = vpop.f32.mrf.mxu0
      %v2797 = vadd.f32 %v2684, %v2796
      %v2798 = vpop.f32.mrf.mxu0
      %v2799 = vadd.f32 %v2686, %v2798
      %2800 = vmatprep.mubr.bf16.mxu0 %v854
      %2801 = vmatmul.mubr.bf16.gmra.mxu0 %v853
      %v2802 = vpop.f32.mrf.mxu0
      %v2803 = vadd.f32 %v2690, %v2802
      %v2804 = vpop.f32.mrf.mxu0
      %v2805 = vadd.f32 %v2692, %v2804
      %v2806 = vpop.f32.mrf.mxu0
      %v2807 = vadd.f32 %v2694, %v2806
      %v2808 = vpop.f32.mrf.mxu0
      %v2809 = vadd.f32 %v2696, %v2808
      %2810 = vmatprep.mubr.bf16.mxu0 %v861
      %2811 = vmatmul.mubr.bf16.gmra.mxu0 %v860
      %v2812 = vpop.f32.mrf.mxu0
      %v2813 = vadd.f32 %v2700, %v2812
      %v2814 = vpop.f32.mrf.mxu0
      %v2815 = vadd.f32 %v2702, %v2814
      %v2816 = vpop.f32.mrf.mxu0
      %v2817 = vadd.f32 %v2704, %v2816
      %v2818 = vpop.f32.mrf.mxu0
      %v2819 = vadd.f32 %v2706, %v2818
      %2820 = vmatprep.mubr.bf16.mxu0 %v868
      %2821 = vmatmul.mubr.bf16.gmra.mxu0 %v867
      %v2822 = vpop.f32.mrf.mxu0
      %v2823 = vadd.f32 %v2710, %v2822
      %v2824 = vpop.f32.mrf.mxu0
      %v2825 = vadd.f32 %v2712, %v2824
      %v2826 = vpop.f32.mrf.mxu0
      %v2827 = vadd.f32 %v2714, %v2826
      %v2828 = vpop.f32.mrf.mxu0
      %v2829 = vadd.f32 %v2716, %v2828
      %2830 = vmatprep.mubr.bf16.mxu0 %v875
      %2831 = vmatmul.mubr.bf16.gmra.mxu0 %v874
      %v2832 = vpop.f32.mrf.mxu0
      %v2833 = vadd.f32 %v2720, %v2832
      %v2834 = vpop.f32.mrf.mxu0
      %v2835 = vadd.f32 %v2722, %v2834
      %v2836 = vpop.f32.mrf.mxu0
      %v2837 = vadd.f32 %v2724, %v2836
      %v2838 = vpop.f32.mrf.mxu0
      %v2839 = vadd.f32 %v2726, %v2838
      %2840 = vmatprep.mubr.bf16.mxu0 %v882
      %2841 = vmatmul.mubr.bf16.gmra.mxu0 %v881
      %v2842 = vpop.f32.mrf.mxu0
      %v2843 = vadd.f32 %v2730, %v2842
      %v2844 = vpop.f32.mrf.mxu0
      %v2845 = vadd.f32 %v2732, %v2844
      %v2846 = vpop.f32.mrf.mxu0
      %v2847 = vadd.f32 %v2734, %v2846
      %v2848 = vpop.f32.mrf.mxu0
      %v2849 = vadd.f32 %v2736, %v2848
      %2850 = vdwg.mxu0
      %2851 = vmatprep.subr.bf16.mxu0 %v1835
      %2852 = vmatpush1.bf16.msra.mxu0 %v1834
      %2853 = vmatprep.subr.bf16.mxu0 %v1831
      %2854 = vmatpush1.bf16.msra.mxu0 %v1830
      %2855 = vmatprep.subr.bf16.mxu0 %v1827
      %2856 = vmatpush1.bf16.msra.mxu0 %v1826
      %2857 = vmatprep.subr.bf16.mxu0 %v1823
      %2858 = vmatpush1.bf16.msra.mxu0 %v1822
      %2859 = vmatprep.subr.bf16.mxu0 %v1819
      %2860 = vmatpush1.bf16.msra.mxu0 %v1818
      %2861 = vmatprep.subr.bf16.mxu0 %v1815
      %2862 = vmatpush1.bf16.msra.mxu0 %v1814
      %2863 = vmatprep.subr.bf16.mxu0 %v1811
      %2864 = vmatpush1.bf16.msra.mxu0 %v1810
      %2865 = vmatprep.subr.bf16.mxu0 %v1807
      %2866 = vmatpush1.bf16.msra.mxu0 %v1806
      %2867 = vmatprep.subr.bf16.mxu0 0
      %2868 = vmatpush2.bf16.msra.mxu0 0
      %2869 = vmatprep.subr.bf16.mxu0 0
      %2870 = vmatpush2.bf16.msra.mxu0 0
      %2871 = vmatprep.subr.bf16.mxu0 0
      %2872 = vmatpush2.bf16.msra.mxu0 0
      %2873 = vmatprep.subr.bf16.mxu0 0
      %2874 = vmatpush2.bf16.msra.mxu0 0
      %2875 = vmatprep.subr.bf16.mxu0 0
      %2876 = vmatpush2.bf16.msra.mxu0 0
      %2877 = vmatprep.subr.bf16.mxu0 0
      %2878 = vmatpush2.bf16.msra.mxu0 0
      %2879 = vmatprep.subr.bf16.mxu0 0
      %2880 = vmatpush2.bf16.msra.mxu0 0
      %2881 = vmatprep.subr.bf16.mxu0 0
      %2882 = vmatpush2.bf16.msra.mxu0 0
      %2883 = vmatprep.mubr.bf16.mxu0 0
      %2884 = vmatmul.mubr.bf16.gmra.mxu0 %v834
      %v2885 = vpop.f32.mrf.mxu0
      %v2886 = vadd.f32 %v2773, %v2885
      %v2887 = vpop.f32.mrf.mxu0
      %v2888 = vadd.f32 %v2775, %v2887
      %v2889 = vpop.f32.mrf.mxu0
      %v2890 = vadd.f32 %v2777, %v2889
      %v2891 = vpop.f32.mrf.mxu0
      %v2892 = vadd.f32 %v2779, %v2891
      %2893 = vmatprep.mubr.bf16.mxu0 0
      %2894 = vmatmul.mubr.bf16.gmra.mxu0 %v841
      %v2895 = vpop.f32.mrf.mxu0
      %v2896 = vadd.f32 %v2783, %v2895
      %v2897 = vpop.f32.mrf.mxu0
      %v2898 = vadd.f32 %v2785, %v2897
      %v2899 = vpop.f32.mrf.mxu0
      %v2900 = vadd.f32 %v2787, %v2899
      %v2901 = vpop.f32.mrf.mxu0
      %v2902 = vadd.f32 %v2789, %v2901
      %2903 = vmatprep.mubr.bf16.mxu0 0
      %2904 = vmatmul.mubr.bf16.gmra.mxu0 %v848
      %v2905 = vpop.f32.mrf.mxu0
      %v2906 = vadd.f32 %v2793, %v2905
      %v2907 = vpop.f32.mrf.mxu0
      %v2908 = vadd.f32 %v2795, %v2907
      %v2909 = vpop.f32.mrf.mxu0
      %v2910 = vadd.f32 %v2797, %v2909
      %v2911 = vpop.f32.mrf.mxu0
      %v2912 = vadd.f32 %v2799, %v2911
      %2913 = vmatprep.mubr.bf16.mxu0 0
      %2914 = vmatmul.mubr.bf16.gmra.mxu0 %v855
      %v2915 = vpop.f32.mrf.mxu0
      %v2916 = vadd.f32 %v2803, %v2915
      %v2917 = vpop.f32.mrf.mxu0
      %v2918 = vadd.f32 %v2805, %v2917
      %v2919 = vpop.f32.mrf.mxu0
      %v2920 = vadd.f32 %v2807, %v2919
      %v2921 = vpop.f32.mrf.mxu0
      %v2922 = vadd.f32 %v2809, %v2921
      %2923 = vmatprep.mubr.bf16.mxu0 0
      %2924 = vmatmul.mubr.bf16.gmra.mxu0 %v862
      %v2925 = vpop.f32.mrf.mxu0
      %v2926 = vadd.f32 %v2813, %v2925
      %v2927 = vpop.f32.mrf.mxu0
      %v2928 = vadd.f32 %v2815, %v2927
      %v2929 = vpop.f32.mrf.mxu0
      %v2930 = vadd.f32 %v2817, %v2929
      %v2931 = vpop.f32.mrf.mxu0
      %v2932 = vadd.f32 %v2819, %v2931
      %2933 = vmatprep.mubr.bf16.mxu0 0
      %2934 = vmatmul.mubr.bf16.gmra.mxu0 %v869
      %v2935 = vpop.f32.mrf.mxu0
      %v2936 = vadd.f32 %v2823, %v2935
      %v2937 = vpop.f32.mrf.mxu0
      %v2938 = vadd.f32 %v2825, %v2937
      %v2939 = vpop.f32.mrf.mxu0
      %v2940 = vadd.f32 %v2827, %v2939
      %v2941 = vpop.f32.mrf.mxu0
      %v2942 = vadd.f32 %v2829, %v2941
      %2943 = vmatprep.mubr.bf16.mxu0 0
      %2944 = vmatmul.mubr.bf16.gmra.mxu0 %v876
      %v2945 = vpop.f32.mrf.mxu0
      %v2946 = vadd.f32 %v2833, %v2945
      %v2947 = vpop.f32.mrf.mxu0
      %v2948 = vadd.f32 %v2835, %v2947
      %v2949 = vpop.f32.mrf.mxu0
      %v2950 = vadd.f32 %v2837, %v2949
      %v2951 = vpop.f32.mrf.mxu0
      %v2952 = vadd.f32 %v2839, %v2951
      %2953 = vmatprep.mubr.bf16.mxu0 0
      %2954 = vmatmul.mubr.bf16.gmra.mxu0 %v883
      %v2955 = vpop.f32.mrf.mxu0
      %v2956 = vadd.f32 %v2843, %v2955
      %v2957 = vpop.f32.mrf.mxu0
      %v2958 = vadd.f32 %v2845, %v2957
      %v2959 = vpop.f32.mrf.mxu0
      %v2960 = vadd.f32 %v2847, %v2959
      %v2961 = vpop.f32.mrf.mxu0
      %v2962 = vadd.f32 %v2849, %v2961
      %2963 = vdwg.mxu0
      %vm2964 = vcmp.gt.f32.partialorder %v2434, 0.0
      %vm2965 = vcmp.gt.f32.partialorder %v2436, 0.0
      %vm2966 = vcmp.gt.f32.partialorder %v2886, 0.0
      %vm2967 = vcmp.gt.f32.partialorder %v2888, 0.0
      %vm2968 = vcmp.gt.f32.partialorder %v2438, 0.0
      %vm2969 = vcmp.gt.f32.partialorder %v2440, 0.0
      %vm2970 = vcmp.gt.f32.partialorder %v2890, 0.0
      %vm2971 = vcmp.gt.f32.partialorder %v2892, 0.0
      %vm2972 = vcmp.gt.f32.partialorder %v2444, 0.0
      %vm2973 = vcmp.gt.f32.partialorder %v2446, 0.0
      %vm2974 = vcmp.gt.f32.partialorder %v2896, 0.0
      %vm2975 = vcmp.gt.f32.partialorder %v2898, 0.0
      %vm2976 = vcmp.gt.f32.partialorder %v2448, 0.0
      %vm2977 = vcmp.gt.f32.partialorder %v2450, 0.0
      %vm2978 = vcmp.gt.f32.partialorder %v2900, 0.0
      %vm2979 = vcmp.gt.f32.partialorder %v2902, 0.0
      %vm2980 = vcmp.gt.f32.partialorder %v2454, 0.0
      %vm2981 = vcmp.gt.f32.partialorder %v2456, 0.0
      %vm2982 = vcmp.gt.f32.partialorder %v2906, 0.0
      %vm2983 = vcmp.gt.f32.partialorder %v2908, 0.0
      %vm2984 = vcmp.gt.f32.partialorder %v2458, 0.0
      %vm2985 = vcmp.gt.f32.partialorder %v2460, 0.0
      %vm2986 = vcmp.gt.f32.partialorder %v2910, 0.0
      %vm2987 = vcmp.gt.f32.partialorder %v2912, 0.0
      %vm2988 = vcmp.gt.f32.partialorder %v2464, 0.0
      %vm2989 = vcmp.gt.f32.partialorder %v2466, 0.0
      %vm2990 = vcmp.gt.f32.partialorder %v2916, 0.0
      %vm2991 = vcmp.gt.f32.partialorder %v2918, 0.0
      %vm2992 = vcmp.gt.f32.partialorder %v2468, 0.0
      %vm2993 = vcmp.gt.f32.partialorder %v2470, 0.0
      %vm2994 = vcmp.gt.f32.partialorder %v2920, 0.0
      %vm2995 = vcmp.gt.f32.partialorder %v2922, 0.0
      %vm2996 = vcmp.gt.f32.partialorder %v2474, 0.0
      %vm2997 = vcmp.gt.f32.partialorder %v2476, 0.0
      %vm2998 = vcmp.gt.f32.partialorder %v2926, 0.0
      %vm2999 = vcmp.gt.f32.partialorder %v2928, 0.0
      %vm3000 = vcmp.gt.f32.partialorder %v2478, 0.0
      %vm3001 = vcmp.gt.f32.partialorder %v2480, 0.0
      %vm3002 = vcmp.gt.f32.partialorder %v2930, 0.0
      %vm3003 = vcmp.gt.f32.partialorder %v2932, 0.0
      %vm3004 = vcmp.gt.f32.partialorder %v2484, 0.0
      %vm3005 = vcmp.gt.f32.partialorder %v2486, 0.0
      %vm3006 = vcmp.gt.f32.partialorder %v2936, 0.0
      %vm3007 = vcmp.gt.f32.partialorder %v2938, 0.0
      %vm3008 = vcmp.gt.f32.partialorder %v2488, 0.0
      %vm3009 = vcmp.gt.f32.partialorder %v2490, 0.0
      %vm3010 = vcmp.gt.f32.partialorder %v2940, 0.0
      %vm3011 = vcmp.gt.f32.partialorder %v2942, 0.0
      %vm3012 = vcmp.gt.f32.partialorder %v2494, 0.0
      %vm3013 = vcmp.gt.f32.partialorder %v2496, 0.0
      %vm3014 = vcmp.gt.f32.partialorder %v2946, 0.0
      %vm3015 = vcmp.gt.f32.partialorder %v2948, 0.0
      %vm3016 = vcmp.gt.f32.partialorder %v2498, 0.0
      %vm3017 = vcmp.gt.f32.partialorder %v2500, 0.0
      %vm3018 = vcmp.gt.f32.partialorder %v2950, 0.0
      %vm3019 = vcmp.gt.f32.partialorder %v2952, 0.0
      %vm3020 = vcmp.gt.f32.partialorder %v2504, 0.0
      %vm3021 = vcmp.gt.f32.partialorder %v2506, 0.0
      %vm3022 = vcmp.gt.f32.partialorder %v2956, 0.0
      %vm3023 = vcmp.gt.f32.partialorder %v2958, 0.0
      %vm3024 = vcmp.gt.f32.partialorder %v2508, 0.0
      %vm3025 = vcmp.gt.f32.partialorder %v2510, 0.0
      %vm3026 = vcmp.gt.f32.partialorder %v2960, 0.0
      %vm3027 = vcmp.gt.f32.partialorder %v2962, 0.0
      %v3028 = vmul.f32 %v2434, 0.2
      %v3029 = vmul.f32 %v2436, 0.2
      %v3030 = vmul.f32 %v2886, 0.2
      %v3031 = vmul.f32 %v2888, 0.2
      %v3032 = vmul.f32 %v2438, 0.2
      %v3033 = vmul.f32 %v2440, 0.2
      %v3034 = vmul.f32 %v2890, 0.2
      %v3035 = vmul.f32 %v2892, 0.2
      %v3036 = vmul.f32 %v2444, 0.2
      %v3037 = vmul.f32 %v2446, 0.2
      %v3038 = vmul.f32 %v2896, 0.2
      %v3039 = vmul.f32 %v2898, 0.2
      %v3040 = vmul.f32 %v2448, 0.2
      %v3041 = vmul.f32 %v2450, 0.2
      %v3042 = vmul.f32 %v2900, 0.2
      %v3043 = vmul.f32 %v2902, 0.2
      %v3044 = vmul.f32 %v2454, 0.2
      %v3045 = vmul.f32 %v2456, 0.2
      %v3046 = vmul.f32 %v2906, 0.2
      %v3047 = vmul.f32 %v2908, 0.2
      %v3048 = vmul.f32 %v2458, 0.2
      %v3049 = vmul.f32 %v2460, 0.2
      %v3050 = vmul.f32 %v2910, 0.2
      %v3051 = vmul.f32 %v2912, 0.2
      %v3052 = vmul.f32 %v2464, 0.2
      %v3053 = vmul.f32 %v2466, 0.2
      %v3054 = vmul.f32 %v2916, 0.2
      %v3055 = vmul.f32 %v2918, 0.2
      %v3056 = vmul.f32 %v2468, 0.2
      %v3057 = vmul.f32 %v2470, 0.2
      %v3058 = vmul.f32 %v2920, 0.2
      %v3059 = vmul.f32 %v2922, 0.2
      %v3060 = vmul.f32 %v2474, 0.2
      %v3061 = vmul.f32 %v2476, 0.2
      %v3062 = vmul.f32 %v2926, 0.2
      %v3063 = vmul.f32 %v2928, 0.2
      %v3064 = vmul.f32 %v2478, 0.2
      %v3065 = vmul.f32 %v2480, 0.2
      %v3066 = vmul.f32 %v2930, 0.2
      %v3067 = vmul.f32 %v2932, 0.2
      %v3068 = vmul.f32 %v2484, 0.2
      %v3069 = vmul.f32 %v2486, 0.2
      %v3070 = vmul.f32 %v2936, 0.2
      %v3071 = vmul.f32 %v2938, 0.2
      %v3072 = vmul.f32 %v2488, 0.2
      %v3073 = vmul.f32 %v2490, 0.2
      %v3074 = vmul.f32 %v2940, 0.2
      %v3075 = vmul.f32 %v2942, 0.2
      %v3076 = vmul.f32 %v2494, 0.2
      %v3077 = vmul.f32 %v2496, 0.2
      %v3078 = vmul.f32 %v2946, 0.2
      %v3079 = vmul.f32 %v2948, 0.2
      %v3080 = vmul.f32 %v2498, 0.2
      %v3081 = vmul.f32 %v2500, 0.2
      %v3082 = vmul.f32 %v2950, 0.2
      %v3083 = vmul.f32 %v2952, 0.2
      %v3084 = vmul.f32 %v2504, 0.2
      %v3085 = vmul.f32 %v2506, 0.2
      %v3086 = vmul.f32 %v2956, 0.2
      %v3087 = vmul.f32 %v2958, 0.2
      %v3088 = vmul.f32 %v2508, 0.2
      %v3089 = vmul.f32 %v2510, 0.2
      %v3090 = vmul.f32 %v2960, 0.2
      %v3091 = vmul.f32 %v2962, 0.2
      %v3092 = vsel %vm2964, %v2434, %v3028
      %v3093 = vsel %vm2965, %v2436, %v3029
      %v3094 = vsel %vm2966, %v2886, %v3030
      %v3095 = vsel %vm2967, %v2888, %v3031
      %v3096 = vsel %vm2968, %v2438, %v3032
      %v3097 = vsel %vm2969, %v2440, %v3033
      %v3098 = vsel %vm2970, %v2890, %v3034
      %v3099 = vsel %vm2971, %v2892, %v3035
      %v3100 = vsel %vm2972, %v2444, %v3036
      %v3101 = vsel %vm2973, %v2446, %v3037
      %v3102 = vsel %vm2974, %v2896, %v3038
      %v3103 = vsel %vm2975, %v2898, %v3039
      %v3104 = vsel %vm2976, %v2448, %v3040
      %v3105 = vsel %vm2977, %v2450, %v3041
      %v3106 = vsel %vm2978, %v2900, %v3042
      %v3107 = vsel %vm2979, %v2902, %v3043
      %v3108 = vsel %vm2980, %v2454, %v3044
      %v3109 = vsel %vm2981, %v2456, %v3045
      %v3110 = vsel %vm2982, %v2906, %v3046
      %v3111 = vsel %vm2983, %v2908, %v3047
      %v3112 = vsel %vm2984, %v2458, %v3048
      %v3113 = vsel %vm2985, %v2460, %v3049
      %v3114 = vsel %vm2986, %v2910, %v3050
      %v3115 = vsel %vm2987, %v2912, %v3051
      %v3116 = vsel %vm2988, %v2464, %v3052
      %v3117 = vsel %vm2989, %v2466, %v3053
      %v3118 = vsel %vm2990, %v2916, %v3054
      %v3119 = vsel %vm2991, %v2918, %v3055
      %v3120 = vsel %vm2992, %v2468, %v3056
      %v3121 = vsel %vm2993, %v2470, %v3057
      %v3122 = vsel %vm2994, %v2920, %v3058
      %v3123 = vsel %vm2995, %v2922, %v3059
      %v3124 = vsel %vm2996, %v2474, %v3060
      %v3125 = vsel %vm2997, %v2476, %v3061
      %v3126 = vsel %vm2998, %v2926, %v3062
      %v3127 = vsel %vm2999, %v2928, %v3063
      %v3128 = vsel %vm3000, %v2478, %v3064
      %v3129 = vsel %vm3001, %v2480, %v3065
      %v3130 = vsel %vm3002, %v2930, %v3066
      %v3131 = vsel %vm3003, %v2932, %v3067
      %v3132 = vsel %vm3004, %v2484, %v3068
      %v3133 = vsel %vm3005, %v2486, %v3069
      %v3134 = vsel %vm3006, %v2936, %v3070
      %v3135 = vsel %vm3007, %v2938, %v3071
      %v3136 = vsel %vm3008, %v2488, %v3072
      %v3137 = vsel %vm3009, %v2490, %v3073
      %v3138 = vsel %vm3010, %v2940, %v3074
      %v3139 = vsel %vm3011, %v2942, %v3075
      %v3140 = vsel %vm3012, %v2494, %v3076
      %v3141 = vsel %vm3013, %v2496, %v3077
      %v3142 = vsel %vm3014, %v2946, %v3078
      %v3143 = vsel %vm3015, %v2948, %v3079
      %v3144 = vsel %vm3016, %v2498, %v3080
      %v3145 = vsel %vm3017, %v2500, %v3081
      %v3146 = vsel %vm3018, %v2950, %v3082
      %v3147 = vsel %vm3019, %v2952, %v3083
      %v3148 = vsel %vm3020, %v2504, %v3084
      %v3149 = vsel %vm3021, %v2506, %v3085
      %v3150 = vsel %vm3022, %v2956, %v3086
      %v3151 = vsel %vm3023, %v2958, %v3087
      %v3152 = vsel %vm3024, %v2508, %v3088
      %v3153 = vsel %vm3025, %v2510, %v3089
      %v3154 = vsel %vm3026, %v2960, %v3090
      %v3155 = vsel %vm3027, %v2962, %v3091
      %v3156 = vpack.c.bf16 %v3096, %v3092
      %v3157 = vpack.c.bf16 %v3097, %v3093
      %v3158 = vpack.c.bf16 %v3098, %v3094
      %v3159 = vpack.c.bf16 %v3099, %v3095
      %v3160 = vpack.c.bf16 %v3104, %v3100
      %v3161 = vpack.c.bf16 %v3105, %v3101
      %v3162 = vpack.c.bf16 %v3106, %v3102
      %v3163 = vpack.c.bf16 %v3107, %v3103
      %v3164 = vpack.c.bf16 %v3112, %v3108
      %v3165 = vpack.c.bf16 %v3113, %v3109
      %v3166 = vpack.c.bf16 %v3114, %v3110
      %v3167 = vpack.c.bf16 %v3115, %v3111
      %v3168 = vpack.c.bf16 %v3120, %v3116
      %v3169 = vpack.c.bf16 %v3121, %v3117
      %v3170 = vpack.c.bf16 %v3122, %v3118
      %v3171 = vpack.c.bf16 %v3123, %v3119
      %v3172 = vpack.c.bf16 %v3128, %v3124
      %v3173 = vpack.c.bf16 %v3129, %v3125
      %v3174 = vpack.c.bf16 %v3130, %v3126
      %v3175 = vpack.c.bf16 %v3131, %v3127
      %v3176 = vpack.c.bf16 %v3136, %v3132
      %v3177 = vpack.c.bf16 %v3137, %v3133
      %v3178 = vpack.c.bf16 %v3138, %v3134
      %v3179 = vpack.c.bf16 %v3139, %v3135
      %v3180 = vpack.c.bf16 %v3144, %v3140
      %v3181 = vpack.c.bf16 %v3145, %v3141
      %v3182 = vpack.c.bf16 %v3146, %v3142
      %v3183 = vpack.c.bf16 %v3147, %v3143
      %v3184 = vpack.c.bf16 %v3152, %v3148
      %v3185 = vpack.c.bf16 %v3153, %v3149
      %v3186 = vpack.c.bf16 %v3154, %v3150
      %v3187 = vpack.c.bf16 %v3155, %v3151
      %v3188 = vld [vmem:[%s3] sm:$0xf]
      %v3189 = vld [vmem:[%s3 + $0x4] sm:$0xf]
      %v3190 = vld [vmem:[%s3 + $0x8] sm:$0xf]
      %v3191 = vld [vmem:[%s3 + $0xc] sm:$0xf]
      %v3192 = vld [vmem:[%s3 + $0x10] sm:$0xf]
      %v3193 = vld [vmem:[%s3 + $0x14] sm:$0xf]
      %v3194 = vld [vmem:[%s3 + $0x18] sm:$0xf]
      %v3195 = vld [vmem:[%s3 + $0x1c] sm:$0xf]
      %v3196 = vld [vmem:[%s3 + $0x20] sm:$0xf]
      %v3197 = vld [vmem:[%s3 + $0x24] sm:$0xf]
      %v3198 = vld [vmem:[%s3 + $0x28] sm:$0xf]
      %v3199 = vld [vmem:[%s3 + $0x2c] sm:$0xf]
      %v3200 = vld [vmem:[%s3 + $0x30] sm:$0xf]
      %v3201 = vld [vmem:[%s3 + $0x34] sm:$0xf]
      %v3202 = vld [vmem:[%s3 + $0x38] sm:$0xf]
      %v3203 = vld [vmem:[%s3 + $0x3c] sm:$0xf]
      %v3204 = vld [vmem:[%s3 + $0x40] sm:$0xf]
      %v3205 = vld [vmem:[%s3 + $0x44] sm:$0xf]
      %v3206 = vld [vmem:[%s3 + $0x48] sm:$0xf]
      %v3207 = vld [vmem:[%s3 + $0x4c] sm:$0xf]
      %v3208 = vld [vmem:[%s3 + $0x50] sm:$0xf]
      %v3209 = vld [vmem:[%s3 + $0x54] sm:$0xf]
      %v3210 = vld [vmem:[%s3 + $0x58] sm:$0xf]
      %v3211 = vld [vmem:[%s3 + $0x5c] sm:$0xf]
      %v3212 = vld [vmem:[%s3 + $0x60] sm:$0xf]
      %v3213 = vld [vmem:[%s3 + $0x64] sm:$0xf]
      %v3214 = vld [vmem:[%s3 + $0x68] sm:$0xf]
      %v3215 = vld [vmem:[%s3 + $0x6c] sm:$0xf]
      %v3216 = vld [vmem:[%s3 + $0x70] sm:$0xf]
      %v3217 = vld [vmem:[%s3 + $0x74] sm:$0xf]
      %v3218 = vld [vmem:[%s3 + $0x78] sm:$0xf]
      %v3219 = vld [vmem:[%s3 + $0x7c] sm:$0xf]
      %v3220 = vld [vmem:[%s3 + $0x80] sm:$0xf]
      %v3221 = vld [vmem:[%s3 + $0x84] sm:$0xf]
      %v3222 = vld [vmem:[%s3 + $0x88] sm:$0xf]
      %v3223 = vld [vmem:[%s3 + $0x8c] sm:$0xf]
      %v3224 = vld [vmem:[%s3 + $0x90] sm:$0xf]
      %v3225 = vld [vmem:[%s3 + $0x94] sm:$0xf]
      %v3226 = vld [vmem:[%s3 + $0x98] sm:$0xf]
      %v3227 = vld [vmem:[%s3 + $0x9c] sm:$0xf]
      %v3228 = vld [vmem:[%s3 + $0xa0] sm:$0xf]
      %v3229 = vld [vmem:[%s3 + $0xa4] sm:$0xf]
      %v3230 = vld [vmem:[%s3 + $0xa8] sm:$0xf]
      %v3231 = vld [vmem:[%s3 + $0xac] sm:$0xf]
      %v3232 = vld [vmem:[%s3 + $0xb0] sm:$0xf]
      %v3233 = vld [vmem:[%s3 + $0xb4] sm:$0xf]
      %v3234 = vld [vmem:[%s3 + $0xb8] sm:$0xf]
      %v3235 = vld [vmem:[%s3 + $0xbc] sm:$0xf]
      %v3236 = vld [vmem:[%s3 + $0xc0] sm:$0xf]
      %v3237 = vld [vmem:[%s3 + $0xc4] sm:$0xf]
      %v3238 = vld [vmem:[%s4] sm:$0x1]
      %v3240 = vlaneseq
      %v3241 = vshrl.u32 %v3240, 7
      %v3242 = vsub.s32 0, %v3241
      %v3243 = vrot.slane %v3238, %v3242
      %v3295 = vunpack.c.l.b16 %v3188
      %v3296 = vunpack.c.l.b16 %v3189
      %v3297 = vunpack.c.l.b16 %v3190
      %v3298 = vunpack.c.l.b16 %v3191
      %v3299 = vunpack.c.l.b16 %v3192
      %v3300 = vunpack.c.l.b16 %v3193
      %v3301 = vunpack.c.l.b16 %v3194
      %v3302 = vunpack.c.l.b16 %v3195
      %v3303 = vunpack.c.l.b16 %v3196
      %v3304 = vunpack.c.l.b16 %v3197
      %v3305 = vunpack.c.l.b16 %v3198
      %v3306 = vunpack.c.l.b16 %v3199
      %v3307 = vunpack.c.l.b16 %v3200
      %v3308 = vunpack.c.l.b16 %v3201
      %v3309 = vunpack.c.l.b16 %v3202
      %v3310 = vunpack.c.l.b16 %v3203
      %v3311 = vunpack.c.l.b16 %v3204
      %v3312 = vunpack.c.l.b16 %v3205
      %v3313 = vunpack.c.l.b16 %v3206
      %v3314 = vunpack.c.l.b16 %v3207
      %v3315 = vunpack.c.l.b16 %v3208
      %v3316 = vunpack.c.l.b16 %v3209
      %v3317 = vunpack.c.l.b16 %v3210
      %v3318 = vunpack.c.l.b16 %v3211
      %v3319 = vunpack.c.l.b16 %v3212
      %v3320 = vunpack.c.l.b16 %v3213
      %v3321 = vunpack.c.l.b16 %v3214
      %v3322 = vunpack.c.l.b16 %v3215
      %v3323 = vunpack.c.l.b16 %v3216
      %v3324 = vunpack.c.l.b16 %v3217
      %v3325 = vunpack.c.l.b16 %v3218
      %v3326 = vunpack.c.l.b16 %v3219
      %v3327 = vunpack.c.l.b16 %v3220
      %v3328 = vunpack.c.l.b16 %v3221
      %v3329 = vunpack.c.l.b16 %v3222
      %v3330 = vunpack.c.l.b16 %v3223
      %v3331 = vunpack.c.l.b16 %v3224
      %v3332 = vunpack.c.l.b16 %v3225
      %v3333 = vunpack.c.l.b16 %v3226
      %v3334 = vunpack.c.l.b16 %v3227
      %v3335 = vunpack.c.l.b16 %v3228
      %v3336 = vunpack.c.l.b16 %v3229
      %v3337 = vunpack.c.l.b16 %v3230
      %v3338 = vunpack.c.l.b16 %v3231
      %v3339 = vunpack.c.l.b16 %v3232
      %v3340 = vunpack.c.l.b16 %v3233
      %v3341 = vunpack.c.l.b16 %v3234
      %v3342 = vunpack.c.l.b16 %v3235
      %v3343 = vunpack.c.l.b16 %v3236
      %v3344 = vunpack.c.l.b16 %v3237
      %v3345 = vpack.c.b16 %v3296, %v3295
      %v3346 = vpack.c.b16 %v3298, %v3297
      %v3347 = vpack.c.b16 %v3300, %v3299
      %v3348 = vpack.c.b16 %v3302, %v3301
      %v3349 = vpack.c.b16 %v3304, %v3303
      %v3350 = vpack.c.b16 %v3306, %v3305
      %v3351 = vpack.c.b16 %v3308, %v3307
      %v3352 = vpack.c.b16 %v3310, %v3309
      %v3353 = vpack.c.b16 %v3312, %v3311
      %v3354 = vpack.c.b16 %v3314, %v3313
      %v3355 = vpack.c.b16 %v3316, %v3315
      %v3356 = vpack.c.b16 %v3318, %v3317
      %v3357 = vpack.c.b16 %v3320, %v3319
      %v3358 = vpack.c.b16 %v3322, %v3321
      %v3359 = vpack.c.b16 %v3324, %v3323
      %v3360 = vpack.c.b16 %v3326, %v3325
      %v3361 = vpack.c.b16 %v3328, %v3327
      %v3362 = vpack.c.b16 %v3330, %v3329
      %v3363 = vpack.c.b16 %v3332, %v3331
      %v3364 = vpack.c.b16 %v3334, %v3333
      %v3365 = vpack.c.b16 %v3336, %v3335
      %v3366 = vpack.c.b16 %v3338, %v3337
      %v3367 = vpack.c.b16 %v3340, %v3339
      %v3368 = vpack.c.b16 %v3342, %v3341
      %v3369 = vpack.c.b16 %v3344, %v3343
      %vm3395 = vcmask 130048
      %v3397 = vsel %vm3395, %v3159, 0
      %v3400 = vsel %vm3395, %v3163, 0
      %v3403 = vsel %vm3395, %v3167, 0
      %v3406 = vsel %vm3395, %v3171, 0
      %v3409 = vsel %vm3395, %v3175, 0
      %v3412 = vsel %vm3395, %v3179, 0
      %v3415 = vsel %vm3395, %v3183, 0
      %v3418 = vsel %vm3395, %v3187, 0
      %3420 = vmatprep.subr.bf16.mxu0 0
      %3421 = vmatpush1.bf16.msra.mxu0 %v3352
      %3422 = vmatprep.subr.bf16.mxu0 0
      %3423 = vmatpush1.bf16.msra.mxu0 %v3351
      %3424 = vmatprep.subr.bf16.mxu0 0
      %3425 = vmatpush1.bf16.msra.mxu0 %v3350
      %3426 = vmatprep.subr.bf16.mxu0 0
      %3427 = vmatpush1.bf16.msra.mxu0 %v3349
      %3428 = vmatprep.subr.bf16.mxu0 0
      %3429 = vmatpush1.bf16.msra.mxu0 %v3348
      %3430 = vmatprep.subr.bf16.mxu0 0
      %3431 = vmatpush1.bf16.msra.mxu0 %v3347
      %3432 = vmatprep.subr.bf16.mxu0 0
      %3433 = vmatpush1.bf16.msra.mxu0 %v3346
      %3434 = vmatprep.subr.bf16.mxu0 0
      %3435 = vmatpush1.bf16.msra.mxu0 %v3345
      %3436 = vmatprep.subr.bf16.mxu0 0
      %3437 = vmatpush2.bf16.msra.mxu0 %v3360
      %3438 = vmatprep.subr.bf16.mxu0 0
      %3439 = vmatpush2.bf16.msra.mxu0 %v3359
      %3440 = vmatprep.subr.bf16.mxu0 0
      %3441 = vmatpush2.bf16.msra.mxu0 %v3358
      %3442 = vmatprep.subr.bf16.mxu0 0
      %3443 = vmatpush2.bf16.msra.mxu0 %v3357
      %3444 = vmatprep.subr.bf16.mxu0 0
      %3445 = vmatpush2.bf16.msra.mxu0 %v3356
      %3446 = vmatprep.subr.bf16.mxu0 0
      %3447 = vmatpush2.bf16.msra.mxu0 %v3355
      %3448 = vmatprep.subr.bf16.mxu0 0
      %3449 = vmatpush2.bf16.msra.mxu0 %v3354
      %3450 = vmatprep.subr.bf16.mxu0 0
      %3451 = vmatpush2.bf16.msra.mxu0 %v3353
      %3452 = vmatprep.mubr.bf16.mxu0 %v3157
      %3453 = vmatmul.mubr.bf16.gmra.mxu0 %v3156
      %v3454 = vpop.f32.mrf.mxu0
      %v3455 = vadd.f32 %v3243, %v3454
      %v3456 = vpop.f32.mrf.mxu0
      %v3457 = vpop.f32.mrf.mxu0
      %v3458 = vadd.f32 %v3243, %v3457
      %v3459 = vpop.f32.mrf.mxu0
      %3460 = vmatprep.mubr.bf16.mxu0 %v3161
      %3461 = vmatmul.mubr.bf16.gmra.mxu0 %v3160
      %v3462 = vpop.f32.mrf.mxu0
      %v3463 = vadd.f32 %v3243, %v3462
      %v3464 = vpop.f32.mrf.mxu0
      %v3465 = vpop.f32.mrf.mxu0
      %v3466 = vadd.f32 %v3243, %v3465
      %v3467 = vpop.f32.mrf.mxu0
      %3468 = vmatprep.mubr.bf16.mxu0 %v3165
      %3469 = vmatmul.mubr.bf16.gmra.mxu0 %v3164
      %v3470 = vpop.f32.mrf.mxu0
      %v3471 = vadd.f32 %v3243, %v3470
      %v3472 = vpop.f32.mrf.mxu0
      %v3473 = vpop.f32.mrf.mxu0
      %v3474 = vadd.f32 %v3243, %v3473
      %v3475 = vpop.f32.mrf.mxu0
      %3476 = vmatprep.mubr.bf16.mxu0 %v3169
      %3477 = vmatmul.mubr.bf16.gmra.mxu0 %v3168
      %v3478 = vpop.f32.mrf.mxu0
      %v3479 = vadd.f32 %v3243, %v3478
      %v3480 = vpop.f32.mrf.mxu0
      %v3481 = vpop.f32.mrf.mxu0
      %v3482 = vadd.f32 %v3243, %v3481
      %v3483 = vpop.f32.mrf.mxu0
      %3484 = vmatprep.mubr.bf16.mxu0 %v3173
      %3485 = vmatmul.mubr.bf16.gmra.mxu0 %v3172
      %v3486 = vpop.f32.mrf.mxu0
      %v3487 = vadd.f32 %v3243, %v3486
      %v3488 = vpop.f32.mrf.mxu0
      %v3489 = vpop.f32.mrf.mxu0
      %v3490 = vadd.f32 %v3243, %v3489
      %v3491 = vpop.f32.mrf.mxu0
      %3492 = vmatprep.mubr.bf16.mxu0 %v3177
      %3493 = vmatmul.mubr.bf16.gmra.mxu0 %v3176
      %v3494 = vpop.f32.mrf.mxu0
      %v3495 = vadd.f32 %v3243, %v3494
      %v3496 = vpop.f32.mrf.mxu0
      %v3497 = vpop.f32.mrf.mxu0
      %v3498 = vadd.f32 %v3243, %v3497
      %v3499 = vpop.f32.mrf.mxu0
      %3500 = vmatprep.mubr.bf16.mxu0 %v3181
      %3501 = vmatmul.mubr.bf16.gmra.mxu0 %v3180
      %v3502 = vpop.f32.mrf.mxu0
      %v3503 = vadd.f32 %v3243, %v3502
      %v3504 = vpop.f32.mrf.mxu0
      %v3505 = vpop.f32.mrf.mxu0
      %v3506 = vadd.f32 %v3243, %v3505
      %v3507 = vpop.f32.mrf.mxu0
      %3508 = vmatprep.mubr.bf16.mxu0 %v3185
      %3509 = vmatmul.mubr.bf16.gmra.mxu0 %v3184
      %v3510 = vpop.f32.mrf.mxu0
      %v3511 = vadd.f32 %v3243, %v3510
      %v3512 = vpop.f32.mrf.mxu0
      %v3513 = vpop.f32.mrf.mxu0
      %v3514 = vadd.f32 %v3243, %v3513
      %v3515 = vpop.f32.mrf.mxu0
      %3516 = vdwg.mxu0
      %3517 = vmatprep.subr.bf16.mxu0 0
      %3518 = vmatpush1.bf16.msra.mxu0 %v3368
      %3519 = vmatprep.subr.bf16.mxu0 0
      %3520 = vmatpush1.bf16.msra.mxu0 %v3367
      %3521 = vmatprep.subr.bf16.mxu0 0
      %3522 = vmatpush1.bf16.msra.mxu0 %v3366
      %3523 = vmatprep.subr.bf16.mxu0 0
      %3524 = vmatpush1.bf16.msra.mxu0 %v3365
      %3525 = vmatprep.subr.bf16.mxu0 0
      %3526 = vmatpush1.bf16.msra.mxu0 %v3364
      %3527 = vmatprep.subr.bf16.mxu0 0
      %3528 = vmatpush1.bf16.msra.mxu0 %v3363
      %3529 = vmatprep.subr.bf16.mxu0 0
      %3530 = vmatpush1.bf16.msra.mxu0 %v3362
      %3531 = vmatprep.subr.bf16.mxu0 0
      %3532 = vmatpush1.bf16.msra.mxu0 %v3361
      %3533 = vmatprep.subr.bf16.mxu0 0
      %3534 = vmatpush2.bf16.msra.mxu0 0
      %3535 = vmatprep.subr.bf16.mxu0 0
      %3536 = vmatpush2.bf16.msra.mxu0 0
      %3537 = vmatprep.subr.bf16.mxu0 0
      %3538 = vmatpush2.bf16.msra.mxu0 0
      %3539 = vmatprep.subr.bf16.mxu0 0
      %3540 = vmatpush2.bf16.msra.mxu0 0
      %3541 = vmatprep.subr.bf16.mxu0 0
      %3542 = vmatpush2.bf16.msra.mxu0 0
      %3543 = vmatprep.subr.bf16.mxu0 0
      %3544 = vmatpush2.bf16.msra.mxu0 0
      %3545 = vmatprep.subr.bf16.mxu0 0
      %3546 = vmatpush2.bf16.msra.mxu0 0
      %3547 = vmatprep.subr.bf16.mxu0 0
      %3548 = vmatpush2.bf16.msra.mxu0 %v3369
      %3549 = vmatprep.mubr.bf16.mxu0 %v3397
      %3550 = vmatmul.mubr.bf16.gmra.mxu0 %v3158
      %v3551 = vpop.f32.mrf.mxu0
      %v3552 = vadd.f32 %v3455, %v3551
      %v3553 = vpop.f32.mrf.mxu0
      %v3554 = vpop.f32.mrf.mxu0
      %v3555 = vadd.f32 %v3458, %v3554
      %v3556 = vpop.f32.mrf.mxu0
      %3557 = vmatprep.mubr.bf16.mxu0 %v3400
      %3558 = vmatmul.mubr.bf16.gmra.mxu0 %v3162
      %v3559 = vpop.f32.mrf.mxu0
      %v3560 = vadd.f32 %v3463, %v3559
      %v3561 = vpop.f32.mrf.mxu0
      %v3562 = vpop.f32.mrf.mxu0
      %v3563 = vadd.f32 %v3466, %v3562
      %v3564 = vpop.f32.mrf.mxu0
      %3565 = vmatprep.mubr.bf16.mxu0 %v3403
      %3566 = vmatmul.mubr.bf16.gmra.mxu0 %v3166
      %v3567 = vpop.f32.mrf.mxu0
      %v3568 = vadd.f32 %v3471, %v3567
      %v3569 = vpop.f32.mrf.mxu0
      %v3570 = vpop.f32.mrf.mxu0
      %v3571 = vadd.f32 %v3474, %v3570
      %v3572 = vpop.f32.mrf.mxu0
      %3573 = vmatprep.mubr.bf16.mxu0 %v3406
      %3574 = vmatmul.mubr.bf16.gmra.mxu0 %v3170
      %v3575 = vpop.f32.mrf.mxu0
      %v3576 = vadd.f32 %v3479, %v3575
      %v3577 = vpop.f32.mrf.mxu0
      %v3578 = vpop.f32.mrf.mxu0
      %v3579 = vadd.f32 %v3482, %v3578
      %v3580 = vpop.f32.mrf.mxu0
      %3581 = vmatprep.mubr.bf16.mxu0 %v3409
      %3582 = vmatmul.mubr.bf16.gmra.mxu0 %v3174
      %v3583 = vpop.f32.mrf.mxu0
      %v3584 = vadd.f32 %v3487, %v3583
      %v3585 = vpop.f32.mrf.mxu0
      %v3586 = vpop.f32.mrf.mxu0
      %v3587 = vadd.f32 %v3490, %v3586
      %v3588 = vpop.f32.mrf.mxu0
      %3589 = vmatprep.mubr.bf16.mxu0 %v3412
      %3590 = vmatmul.mubr.bf16.gmra.mxu0 %v3178
      %v3591 = vpop.f32.mrf.mxu0
      %v3592 = vadd.f32 %v3495, %v3591
      %v3593 = vpop.f32.mrf.mxu0
      %v3594 = vpop.f32.mrf.mxu0
      %v3595 = vadd.f32 %v3498, %v3594
      %v3596 = vpop.f32.mrf.mxu0
      %3597 = vmatprep.mubr.bf16.mxu0 %v3415
      %3598 = vmatmul.mubr.bf16.gmra.mxu0 %v3182
      %v3599 = vpop.f32.mrf.mxu0
      %v3600 = vadd.f32 %v3503, %v3599
      %v3601 = vpop.f32.mrf.mxu0
      %v3602 = vpop.f32.mrf.mxu0
      %v3603 = vadd.f32 %v3506, %v3602
      %v3604 = vpop.f32.mrf.mxu0
      %3605 = vmatprep.mubr.bf16.mxu0 %v3418
      %3606 = vmatmul.mubr.bf16.gmra.mxu0 %v3186
      %v3607 = vpop.f32.mrf.mxu0
      %v3608 = vadd.f32 %v3511, %v3607
      %v3609 = vpop.f32.mrf.mxu0
      %v3610 = vpop.f32.mrf.mxu0
      %v3611 = vadd.f32 %v3514, %v3610
      %v3612 = vpop.f32.mrf.mxu0
      %3613 = vdwg.mxu0
      %vm3614 = vcmp.gt.f32.partialorder %v3552, 0.0
      %vm3615 = vcmp.gt.f32.partialorder %v3555, 0.0
      %vm3616 = vcmp.gt.f32.partialorder %v3560, 0.0
      %vm3617 = vcmp.gt.f32.partialorder %v3563, 0.0
      %vm3618 = vcmp.gt.f32.partialorder %v3568, 0.0
      %vm3619 = vcmp.gt.f32.partialorder %v3571, 0.0
      %vm3620 = vcmp.gt.f32.partialorder %v3576, 0.0
      %vm3621 = vcmp.gt.f32.partialorder %v3579, 0.0
      %vm3622 = vcmp.gt.f32.partialorder %v3584, 0.0
      %vm3623 = vcmp.gt.f32.partialorder %v3587, 0.0
      %vm3624 = vcmp.gt.f32.partialorder %v3592, 0.0
      %vm3625 = vcmp.gt.f32.partialorder %v3595, 0.0
      %vm3626 = vcmp.gt.f32.partialorder %v3600, 0.0
      %vm3627 = vcmp.gt.f32.partialorder %v3603, 0.0
      %vm3628 = vcmp.gt.f32.partialorder %v3608, 0.0
      %vm3629 = vcmp.gt.f32.partialorder %v3611, 0.0
      %v3630 = vmul.f32 %v3552, 0.2
      %v3631 = vmul.f32 %v3555, 0.2
      %v3632 = vmul.f32 %v3560, 0.2
      %v3633 = vmul.f32 %v3563, 0.2
      %v3634 = vmul.f32 %v3568, 0.2
      %v3635 = vmul.f32 %v3571, 0.2
      %v3636 = vmul.f32 %v3576, 0.2
      %v3637 = vmul.f32 %v3579, 0.2
      %v3638 = vmul.f32 %v3584, 0.2
      %v3639 = vmul.f32 %v3587, 0.2
      %v3640 = vmul.f32 %v3592, 0.2
      %v3641 = vmul.f32 %v3595, 0.2
      %v3642 = vmul.f32 %v3600, 0.2
      %v3643 = vmul.f32 %v3603, 0.2
      %v3644 = vmul.f32 %v3608, 0.2
      %v3645 = vmul.f32 %v3611, 0.2
      %v3646 = vsel %vm3614, %v3552, %v3630
      %v3647 = vsel %vm3615, %v3555, %v3631
      %v3648 = vsel %vm3616, %v3560, %v3632
      %v3649 = vsel %vm3617, %v3563, %v3633
      %v3650 = vsel %vm3618, %v3568, %v3634
      %v3651 = vsel %vm3619, %v3571, %v3635
      %v3652 = vsel %vm3620, %v3576, %v3636
      %v3653 = vsel %vm3621, %v3579, %v3637
      %v3654 = vsel %vm3622, %v3584, %v3638
      %v3655 = vsel %vm3623, %v3587, %v3639
      %v3656 = vsel %vm3624, %v3592, %v3640
      %v3657 = vsel %vm3625, %v3595, %v3641
      %v3658 = vsel %vm3626, %v3600, %v3642
      %v3659 = vsel %vm3627, %v3603, %v3643
      %v3660 = vsel %vm3628, %v3608, %v3644
      %v3661 = vsel %vm3629, %v3611, %v3645
      %v3662 = vpack.c.bf16 %v3647, %v3646
      %v3663 = vpack.c.bf16 %v3649, %v3648
      %v3664 = vpack.c.bf16 %v3651, %v3650
      %v3665 = vpack.c.bf16 %v3653, %v3652
      %v3666 = vpack.c.bf16 %v3655, %v3654
      %v3667 = vpack.c.bf16 %v3657, %v3656
      %v3668 = vpack.c.bf16 %v3659, %v3658
      %v3669 = vpack.c.bf16 %v3661, %v3660
      %v3670 = vld [vmem:[%s5] sm:$0xff]
      %v3671 = vld [vmem:[%s5 + $0x8] sm:$0xff]
      %v3672 = vld [vmem:[%s5 + $0x10] sm:$0xff]
      %v3673 = vld [vmem:[%s5 + $0x18] sm:$0xff]
      %v3674 = vld [vmem:[%s5 + $0x20] sm:$0xff]
      %v3675 = vld [vmem:[%s5 + $0x28] sm:$0xff]
      %v3676 = vld [vmem:[%s5 + $0x30] sm:$0xff]
      %v3677 = vld [vmem:[%s5 + $0x38] sm:$0xff]
      %v3678 = vld [vmem:[%s5 + $0x40] sm:$0xff]
      %v3679 = vld [vmem:[%s5 + $0x48] sm:$0xff]
      %v3680 = vld [vmem:[%s5 + $0x50] sm:$0xff]
      %v3681 = vld [vmem:[%s5 + $0x58] sm:$0xff]
      %v3682 = vld [vmem:[%s5 + $0x60] sm:$0xff]
      %v3683 = vld [vmem:[%s5 + $0x68] sm:$0xff]
      %v3684 = vld [vmem:[%s5 + $0x70] sm:$0xff]
      %v3685 = vld [vmem:[%s5 + $0x78] sm:$0xff]
      %v3686 = vld [vmem:[%s5 + $0x80] sm:$0xff]
      %v3687 = vld [vmem:[%s5 + $0x88] sm:$0xff]
      %v3688 = vld [vmem:[%s5 + $0x90] sm:$0xff]
      %v3689 = vld [vmem:[%s5 + $0x98] sm:$0xff]
      %v3690 = vld [vmem:[%s5 + $0xa0] sm:$0xff]
      %v3691 = vld [vmem:[%s5 + $0xa8] sm:$0xff]
      %v3692 = vld [vmem:[%s5 + $0xb0] sm:$0xff]
      %v3693 = vld [vmem:[%s5 + $0xb8] sm:$0xff]
      %v3694 = vld [vmem:[%s5 + $0xc0] sm:$0xff]
      %v3695 = vld [vmem:[%s5 + $0xc8] sm:$0xff]
      %v3696 = vld [vmem:[%s5 + $0xd0] sm:$0xff]
      %v3697 = vld [vmem:[%s5 + $0xd8] sm:$0xff]
      %v3698 = vld [vmem:[%s5 + $0xe0] sm:$0xff]
      %v3699 = vld [vmem:[%s5 + $0xe8] sm:$0xff]
      %v3700 = vld [vmem:[%s5 + $0xf0] sm:$0xff]
      %v3701 = vld [vmem:[%s5 + $0xf8] sm:$0xff]
      %v3702 = vld [vmem:[%s6] sm:$0xf]
      %v3704 = vlaneseq
      %v3705 = vshrl.u32 %v3704, 7
      %v3706 = vsub.s32 0, %v3705
      %v3707 = vrot.slane %v3702, %v3706
      %v3708 = vlaneseq
      %v3709 = vshrl.u32 %v3708, 7
      %v3710 = vsub.s32 1, %v3709
      %v3711 = vrot.slane %v3702, %v3710
      %v3712 = vlaneseq
      %v3713 = vshrl.u32 %v3712, 7
      %v3714 = vsub.s32 2, %v3713
      %v3715 = vrot.slane %v3702, %v3714
      %v3716 = vlaneseq
      %v3717 = vshrl.u32 %v3716, 7
      %v3718 = vsub.s32 3, %v3717
      %v3719 = vrot.slane %v3702, %v3718
      %v3756 = vunpack.c.l.b16 %v3670
      %v3757 = vunpack.c.h.b16 %v3670
      %v3758 = vunpack.c.l.b16 %v3671
      %v3759 = vunpack.c.h.b16 %v3671
      %v3760 = vunpack.c.l.b16 %v3672
      %v3761 = vunpack.c.h.b16 %v3672
      %v3762 = vunpack.c.l.b16 %v3673
      %v3763 = vunpack.c.h.b16 %v3673
      %v3764 = vunpack.c.l.b16 %v3674
      %v3765 = vunpack.c.h.b16 %v3674
      %v3766 = vunpack.c.l.b16 %v3675
      %v3767 = vunpack.c.h.b16 %v3675
      %v3768 = vunpack.c.l.b16 %v3676
      %v3769 = vunpack.c.h.b16 %v3676
      %v3770 = vunpack.c.l.b16 %v3677
      %v3771 = vunpack.c.h.b16 %v3677
      %v3772 = vunpack.c.l.b16 %v3678
      %v3773 = vunpack.c.h.b16 %v3678
      %v3774 = vunpack.c.l.b16 %v3679
      %v3775 = vunpack.c.h.b16 %v3679
      %v3776 = vunpack.c.l.b16 %v3680
      %v3777 = vunpack.c.h.b16 %v3680
      %v3778 = vunpack.c.l.b16 %v3681
      %v3779 = vunpack.c.h.b16 %v3681
      %v3780 = vunpack.c.l.b16 %v3682
      %v3781 = vunpack.c.h.b16 %v3682
      %v3782 = vunpack.c.l.b16 %v3683
      %v3783 = vunpack.c.h.b16 %v3683
      %v3784 = vunpack.c.l.b16 %v3684
      %v3785 = vunpack.c.h.b16 %v3684
      %v3786 = vunpack.c.l.b16 %v3685
      %v3787 = vunpack.c.h.b16 %v3685
      %v3788 = vunpack.c.l.b16 %v3686
      %v3789 = vunpack.c.h.b16 %v3686
      %v3790 = vunpack.c.l.b16 %v3687
      %v3791 = vunpack.c.h.b16 %v3687
      %v3792 = vunpack.c.l.b16 %v3688
      %v3793 = vunpack.c.h.b16 %v3688
      %v3794 = vunpack.c.l.b16 %v3689
      %v3795 = vunpack.c.h.b16 %v3689
      %v3796 = vunpack.c.l.b16 %v3690
      %v3797 = vunpack.c.h.b16 %v3690
      %v3798 = vunpack.c.l.b16 %v3691
      %v3799 = vunpack.c.h.b16 %v3691
      %v3800 = vunpack.c.l.b16 %v3692
      %v3801 = vunpack.c.h.b16 %v3692
      %v3802 = vunpack.c.l.b16 %v3693
      %v3803 = vunpack.c.h.b16 %v3693
      %v3804 = vunpack.c.l.b16 %v3694
      %v3805 = vunpack.c.h.b16 %v3694
      %v3806 = vunpack.c.l.b16 %v3695
      %v3807 = vunpack.c.h.b16 %v3695
      %v3808 = vunpack.c.l.b16 %v3696
      %v3809 = vunpack.c.h.b16 %v3696
      %v3810 = vunpack.c.l.b16 %v3697
      %v3811 = vunpack.c.h.b16 %v3697
      %v3812 = vunpack.c.l.b16 %v3698
      %v3813 = vunpack.c.h.b16 %v3698
      %v3814 = vunpack.c.l.b16 %v3699
      %v3815 = vunpack.c.h.b16 %v3699
      %v3816 = vunpack.c.l.b16 %v3700
      %v3817 = vunpack.c.h.b16 %v3700
      %v3818 = vunpack.c.l.b16 %v3701
      %v3819 = vunpack.c.h.b16 %v3701
      %v3820 = vpack.c.b16 %v3760, %v3756
      %v3821 = vpack.c.b16 %v3761, %v3757
      %v3822 = vpack.c.b16 %v3762, %v3758
      %v3823 = vpack.c.b16 %v3763, %v3759
      %v3824 = vpack.c.b16 %v3768, %v3764
      %v3825 = vpack.c.b16 %v3769, %v3765
      %v3826 = vpack.c.b16 %v3770, %v3766
      %v3827 = vpack.c.b16 %v3771, %v3767
      %v3828 = vpack.c.b16 %v3776, %v3772
      %v3829 = vpack.c.b16 %v3777, %v3773
      %v3830 = vpack.c.b16 %v3778, %v3774
      %v3831 = vpack.c.b16 %v3779, %v3775
      %v3832 = vpack.c.b16 %v3784, %v3780
      %v3833 = vpack.c.b16 %v3785, %v3781
      %v3834 = vpack.c.b16 %v3786, %v3782
      %v3835 = vpack.c.b16 %v3787, %v3783
      %v3836 = vpack.c.b16 %v3792, %v3788
      %v3837 = vpack.c.b16 %v3793, %v3789
      %v3838 = vpack.c.b16 %v3794, %v3790
      %v3839 = vpack.c.b16 %v3795, %v3791
      %v3840 = vpack.c.b16 %v3800, %v3796
      %v3841 = vpack.c.b16 %v3801, %v3797
      %v3842 = vpack.c.b16 %v3802, %v3798
      %v3843 = vpack.c.b16 %v3803, %v3799
      %v3844 = vpack.c.b16 %v3808, %v3804
      %v3845 = vpack.c.b16 %v3809, %v3805
      %v3846 = vpack.c.b16 %v3810, %v3806
      %v3847 = vpack.c.b16 %v3811, %v3807
      %v3848 = vpack.c.b16 %v3816, %v3812
      %v3849 = vpack.c.b16 %v3817, %v3813
      %v3850 = vpack.c.b16 %v3818, %v3814
      %v3851 = vpack.c.b16 %v3819, %v3815
      %3884 = vmatprep.subr.bf16.mxu0 %v3849
      %3885 = vmatpush1.bf16.msra.mxu0 %v3848
      %3886 = vmatprep.subr.bf16.mxu0 %v3845
      %3887 = vmatpush1.bf16.msra.mxu0 %v3844
      %3888 = vmatprep.subr.bf16.mxu0 %v3841
      %3889 = vmatpush1.bf16.msra.mxu0 %v3840
      %3890 = vmatprep.subr.bf16.mxu0 %v3837
      %3891 = vmatpush1.bf16.msra.mxu0 %v3836
      %3892 = vmatprep.subr.bf16.mxu0 %v3833
      %3893 = vmatpush1.bf16.msra.mxu0 %v3832
      %3894 = vmatprep.subr.bf16.mxu0 %v3829
      %3895 = vmatpush1.bf16.msra.mxu0 %v3828
      %3896 = vmatprep.subr.bf16.mxu0 %v3825
      %3897 = vmatpush1.bf16.msra.mxu0 %v3824
      %3898 = vmatprep.subr.bf16.mxu0 %v3821
      %3899 = vmatpush1.bf16.msra.mxu0 %v3820
      %3900 = vmatprep.subr.bf16.mxu0 0
      %3901 = vmatpush2.bf16.msra.mxu0 0
      %3902 = vmatprep.subr.bf16.mxu0 0
      %3903 = vmatpush2.bf16.msra.mxu0 0
      %3904 = vmatprep.subr.bf16.mxu0 0
      %3905 = vmatpush2.bf16.msra.mxu0 0
      %3906 = vmatprep.subr.bf16.mxu0 0
      %3907 = vmatpush2.bf16.msra.mxu0 0
      %3908 = vmatprep.subr.bf16.mxu0 0
      %3909 = vmatpush2.bf16.msra.mxu0 0
      %3910 = vmatprep.subr.bf16.mxu0 0
      %3911 = vmatpush2.bf16.msra.mxu0 0
      %3912 = vmatprep.subr.bf16.mxu0 0
      %3913 = vmatpush2.bf16.msra.mxu0 0
      %3914 = vmatprep.subr.bf16.mxu0 0
      %3915 = vmatpush2.bf16.msra.mxu0 0
      %3916 = vmatprep.mubr.bf16.mxu0 0
      %3917 = vmatmul.mubr.bf16.gmra.mxu0 %v3662
      %v3918 = vpop.f32.mrf.mxu0
      %v3919 = vadd.f32 %v3707, %v3918
      %v3920 = vpop.f32.mrf.mxu0
      %v3921 = vadd.f32 %v3711, %v3920
      %v3922 = vpop.f32.mrf.mxu0
      %v3923 = vadd.f32 %v3707, %v3922
      %v3924 = vpop.f32.mrf.mxu0
      %v3925 = vadd.f32 %v3711, %v3924
      %3926 = vmatprep.mubr.bf16.mxu0 0
      %3927 = vmatmul.mubr.bf16.gmra.mxu0 %v3663
      %v3928 = vpop.f32.mrf.mxu0
      %v3929 = vadd.f32 %v3707, %v3928
      %v3930 = vpop.f32.mrf.mxu0
      %v3931 = vadd.f32 %v3711, %v3930
      %v3932 = vpop.f32.mrf.mxu0
      %v3933 = vadd.f32 %v3707, %v3932
      %v3934 = vpop.f32.mrf.mxu0
      %v3935 = vadd.f32 %v3711, %v3934
      %3936 = vmatprep.mubr.bf16.mxu0 0
      %3937 = vmatmul.mubr.bf16.gmra.mxu0 %v3664
      %v3938 = vpop.f32.mrf.mxu0
      %v3939 = vadd.f32 %v3707, %v3938
      %v3940 = vpop.f32.mrf.mxu0
      %v3941 = vadd.f32 %v3711, %v3940
      %v3942 = vpop.f32.mrf.mxu0
      %v3943 = vadd.f32 %v3707, %v3942
      %v3944 = vpop.f32.mrf.mxu0
      %v3945 = vadd.f32 %v3711, %v3944
      %3946 = vmatprep.mubr.bf16.mxu0 0
      %3947 = vmatmul.mubr.bf16.gmra.mxu0 %v3665
      %v3948 = vpop.f32.mrf.mxu0
      %v3949 = vadd.f32 %v3707, %v3948
      %v3950 = vpop.f32.mrf.mxu0
      %v3951 = vadd.f32 %v3711, %v3950
      %v3952 = vpop.f32.mrf.mxu0
      %v3953 = vadd.f32 %v3707, %v3952
      %v3954 = vpop.f32.mrf.mxu0
      %v3955 = vadd.f32 %v3711, %v3954
      %3956 = vmatprep.mubr.bf16.mxu0 0
      %3957 = vmatmul.mubr.bf16.gmra.mxu0 %v3666
      %v3958 = vpop.f32.mrf.mxu0
      %v3959 = vadd.f32 %v3707, %v3958
      %v3960 = vpop.f32.mrf.mxu0
      %v3961 = vadd.f32 %v3711, %v3960
      %v3962 = vpop.f32.mrf.mxu0
      %v3963 = vadd.f32 %v3707, %v3962
      %v3964 = vpop.f32.mrf.mxu0
      %v3965 = vadd.f32 %v3711, %v3964
      %3966 = vmatprep.mubr.bf16.mxu0 0
      %3967 = vmatmul.mubr.bf16.gmra.mxu0 %v3667
      %v3968 = vpop.f32.mrf.mxu0
      %v3969 = vadd.f32 %v3707, %v3968
      %v3970 = vpop.f32.mrf.mxu0
      %v3971 = vadd.f32 %v3711, %v3970
      %v3972 = vpop.f32.mrf.mxu0
      %v3973 = vadd.f32 %v3707, %v3972
      %v3974 = vpop.f32.mrf.mxu0
      %v3975 = vadd.f32 %v3711, %v3974
      %3976 = vmatprep.mubr.bf16.mxu0 0
      %3977 = vmatmul.mubr.bf16.gmra.mxu0 %v3668
      %v3978 = vpop.f32.mrf.mxu0
      %v3979 = vadd.f32 %v3707, %v3978
      %v3980 = vpop.f32.mrf.mxu0
      %v3981 = vadd.f32 %v3711, %v3980
      %v3982 = vpop.f32.mrf.mxu0
      %v3983 = vadd.f32 %v3707, %v3982
      %v3984 = vpop.f32.mrf.mxu0
      %v3985 = vadd.f32 %v3711, %v3984
      %3986 = vmatprep.mubr.bf16.mxu0 0
      %3987 = vmatmul.mubr.bf16.gmra.mxu0 %v3669
      %v3988 = vpop.f32.mrf.mxu0
      %v3989 = vadd.f32 %v3707, %v3988
      %v3990 = vpop.f32.mrf.mxu0
      %v3991 = vadd.f32 %v3711, %v3990
      %v3992 = vpop.f32.mrf.mxu0
      %v3993 = vadd.f32 %v3707, %v3992
      %v3994 = vpop.f32.mrf.mxu0
      %v3995 = vadd.f32 %v3711, %v3994
      %3996 = vdwg.mxu0
      %3997 = vmatprep.subr.bf16.mxu0 %v3851
      %3998 = vmatpush1.bf16.msra.mxu0 %v3850
      %3999 = vmatprep.subr.bf16.mxu0 %v3847
      %4000 = vmatpush1.bf16.msra.mxu0 %v3846
      %4001 = vmatprep.subr.bf16.mxu0 %v3843
      %4002 = vmatpush1.bf16.msra.mxu0 %v3842
      %4003 = vmatprep.subr.bf16.mxu0 %v3839
      %4004 = vmatpush1.bf16.msra.mxu0 %v3838
      %4005 = vmatprep.subr.bf16.mxu0 %v3835
      %4006 = vmatpush1.bf16.msra.mxu0 %v3834
      %4007 = vmatprep.subr.bf16.mxu0 %v3831
      %4008 = vmatpush1.bf16.msra.mxu0 %v3830
      %4009 = vmatprep.subr.bf16.mxu0 %v3827
      %4010 = vmatpush1.bf16.msra.mxu0 %v3826
      %4011 = vmatprep.subr.bf16.mxu0 %v3823
      %4012 = vmatpush1.bf16.msra.mxu0 %v3822
      %4013 = vmatprep.subr.bf16.mxu0 0
      %4014 = vmatpush2.bf16.msra.mxu0 0
      %4015 = vmatprep.subr.bf16.mxu0 0
      %4016 = vmatpush2.bf16.msra.mxu0 0
      %4017 = vmatprep.subr.bf16.mxu0 0
      %4018 = vmatpush2.bf16.msra.mxu0 0
      %4019 = vmatprep.subr.bf16.mxu0 0
      %4020 = vmatpush2.bf16.msra.mxu0 0
      %4021 = vmatprep.subr.bf16.mxu0 0
      %4022 = vmatpush2.bf16.msra.mxu0 0
      %4023 = vmatprep.subr.bf16.mxu0 0
      %4024 = vmatpush2.bf16.msra.mxu0 0
      %4025 = vmatprep.subr.bf16.mxu0 0
      %4026 = vmatpush2.bf16.msra.mxu0 0
      %4027 = vmatprep.subr.bf16.mxu0 0
      %4028 = vmatpush2.bf16.msra.mxu0 0
      %4029 = vmatprep.mubr.bf16.mxu0 0
      %4030 = vmatmul.mubr.bf16.gmra.mxu0 %v3662
      %v4031 = vpop.f32.mrf.mxu0
      %v4032 = vadd.f32 %v3715, %v4031
      %v4033 = vpop.f32.mrf.mxu0
      %v4034 = vadd.f32 %v3719, %v4033
      %v4035 = vpop.f32.mrf.mxu0
      %v4036 = vadd.f32 %v3715, %v4035
      %v4037 = vpop.f32.mrf.mxu0
      %v4038 = vadd.f32 %v3719, %v4037
      %4039 = vmatprep.mubr.bf16.mxu0 0
      %4040 = vmatmul.mubr.bf16.gmra.mxu0 %v3663
      %v4041 = vpop.f32.mrf.mxu0
      %v4042 = vadd.f32 %v3715, %v4041
      %v4043 = vpop.f32.mrf.mxu0
      %v4044 = vadd.f32 %v3719, %v4043
      %v4045 = vpop.f32.mrf.mxu0
      %v4046 = vadd.f32 %v3715, %v4045
      %v4047 = vpop.f32.mrf.mxu0
      %v4048 = vadd.f32 %v3719, %v4047
      %4049 = vmatprep.mubr.bf16.mxu0 0
      %4050 = vmatmul.mubr.bf16.gmra.mxu0 %v3664
      %v4051 = vpop.f32.mrf.mxu0
      %v4052 = vadd.f32 %v3715, %v4051
      %v4053 = vpop.f32.mrf.mxu0
      %v4054 = vadd.f32 %v3719, %v4053
      %v4055 = vpop.f32.mrf.mxu0
      %v4056 = vadd.f32 %v3715, %v4055
      %v4057 = vpop.f32.mrf.mxu0
      %v4058 = vadd.f32 %v3719, %v4057
      %4059 = vmatprep.mubr.bf16.mxu0 0
      %4060 = vmatmul.mubr.bf16.gmra.mxu0 %v3665
      %v4061 = vpop.f32.mrf.mxu0
      %v4062 = vadd.f32 %v3715, %v4061
      %v4063 = vpop.f32.mrf.mxu0
      %v4064 = vadd.f32 %v3719, %v4063
      %v4065 = vpop.f32.mrf.mxu0
      %v4066 = vadd.f32 %v3715, %v4065
      %v4067 = vpop.f32.mrf.mxu0
      %v4068 = vadd.f32 %v3719, %v4067
      %4069 = vmatprep.mubr.bf16.mxu0 0
      %4070 = vmatmul.mubr.bf16.gmra.mxu0 %v3666
      %v4071 = vpop.f32.mrf.mxu0
      %v4072 = vadd.f32 %v3715, %v4071
      %v4073 = vpop.f32.mrf.mxu0
      %v4074 = vadd.f32 %v3719, %v4073
      %v4075 = vpop.f32.mrf.mxu0
      %v4076 = vadd.f32 %v3715, %v4075
      %v4077 = vpop.f32.mrf.mxu0
      %v4078 = vadd.f32 %v3719, %v4077
      %4079 = vmatprep.mubr.bf16.mxu0 0
      %4080 = vmatmul.mubr.bf16.gmra.mxu0 %v3667
      %v4081 = vpop.f32.mrf.mxu0
      %v4082 = vadd.f32 %v3715, %v4081
      %v4083 = vpop.f32.mrf.mxu0
      %v4084 = vadd.f32 %v3719, %v4083
      %v4085 = vpop.f32.mrf.mxu0
      %v4086 = vadd.f32 %v3715, %v4085
      %v4087 = vpop.f32.mrf.mxu0
      %v4088 = vadd.f32 %v3719, %v4087
      %4089 = vmatprep.mubr.bf16.mxu0 0
      %4090 = vmatmul.mubr.bf16.gmra.mxu0 %v3668
      %v4091 = vpop.f32.mrf.mxu0
      %v4092 = vadd.f32 %v3715, %v4091
      %v4093 = vpop.f32.mrf.mxu0
      %v4094 = vadd.f32 %v3719, %v4093
      %v4095 = vpop.f32.mrf.mxu0
      %v4096 = vadd.f32 %v3715, %v4095
      %v4097 = vpop.f32.mrf.mxu0
      %v4098 = vadd.f32 %v3719, %v4097
      %4099 = vmatprep.mubr.bf16.mxu0 0
      %4100 = vmatmul.mubr.bf16.gmra.mxu0 %v3669
      %v4101 = vpop.f32.mrf.mxu0
      %v4102 = vadd.f32 %v3715, %v4101
      %v4103 = vpop.f32.mrf.mxu0
      %v4104 = vadd.f32 %v3719, %v4103
      %v4105 = vpop.f32.mrf.mxu0
      %v4106 = vadd.f32 %v3715, %v4105
      %v4107 = vpop.f32.mrf.mxu0
      %v4108 = vadd.f32 %v3719, %v4107
      %4109 = vdwg.mxu0
      %vm4110 = vcmp.gt.f32.partialorder %v3919, 0.0
      %vm4111 = vcmp.gt.f32.partialorder %v3921, 0.0
      %vm4112 = vcmp.gt.f32.partialorder %v4032, 0.0
      %vm4113 = vcmp.gt.f32.partialorder %v4034, 0.0
      %vm4114 = vcmp.gt.f32.partialorder %v3923, 0.0
      %vm4115 = vcmp.gt.f32.partialorder %v3925, 0.0
      %vm4116 = vcmp.gt.f32.partialorder %v4036, 0.0
      %vm4117 = vcmp.gt.f32.partialorder %v4038, 0.0
      %vm4118 = vcmp.gt.f32.partialorder %v3929, 0.0
      %vm4119 = vcmp.gt.f32.partialorder %v3931, 0.0
      %vm4120 = vcmp.gt.f32.partialorder %v4042, 0.0
      %vm4121 = vcmp.gt.f32.partialorder %v4044, 0.0
      %vm4122 = vcmp.gt.f32.partialorder %v3933, 0.0
      %vm4123 = vcmp.gt.f32.partialorder %v3935, 0.0
      %vm4124 = vcmp.gt.f32.partialorder %v4046, 0.0
      %vm4125 = vcmp.gt.f32.partialorder %v4048, 0.0
      %vm4126 = vcmp.gt.f32.partialorder %v3939, 0.0
      %vm4127 = vcmp.gt.f32.partialorder %v3941, 0.0
      %vm4128 = vcmp.gt.f32.partialorder %v4052, 0.0
      %vm4129 = vcmp.gt.f32.partialorder %v4054, 0.0
      %vm4130 = vcmp.gt.f32.partialorder %v3943, 0.0
      %vm4131 = vcmp.gt.f32.partialorder %v3945, 0.0
      %vm4132 = vcmp.gt.f32.partialorder %v4056, 0.0
      %vm4133 = vcmp.gt.f32.partialorder %v4058, 0.0
      %vm4134 = vcmp.gt.f32.partialorder %v3949, 0.0
      %vm4135 = vcmp.gt.f32.partialorder %v3951, 0.0
      %vm4136 = vcmp.gt.f32.partialorder %v4062, 0.0
      %vm4137 = vcmp.gt.f32.partialorder %v4064, 0.0
      %vm4138 = vcmp.gt.f32.partialorder %v3953, 0.0
      %vm4139 = vcmp.gt.f32.partialorder %v3955, 0.0
      %vm4140 = vcmp.gt.f32.partialorder %v4066, 0.0
      %vm4141 = vcmp.gt.f32.partialorder %v4068, 0.0
      %vm4142 = vcmp.gt.f32.partialorder %v3959, 0.0
      %vm4143 = vcmp.gt.f32.partialorder %v3961, 0.0
      %vm4144 = vcmp.gt.f32.partialorder %v4072, 0.0
      %vm4145 = vcmp.gt.f32.partialorder %v4074, 0.0
      %vm4146 = vcmp.gt.f32.partialorder %v3963, 0.0
      %vm4147 = vcmp.gt.f32.partialorder %v3965, 0.0
      %vm4148 = vcmp.gt.f32.partialorder %v4076, 0.0
      %vm4149 = vcmp.gt.f32.partialorder %v4078, 0.0
      %vm4150 = vcmp.gt.f32.partialorder %v3969, 0.0
      %vm4151 = vcmp.gt.f32.partialorder %v3971, 0.0
      %vm4152 = vcmp.gt.f32.partialorder %v4082, 0.0
      %vm4153 = vcmp.gt.f32.partialorder %v4084, 0.0
      %vm4154 = vcmp.gt.f32.partialorder %v3973, 0.0
      %vm4155 = vcmp.gt.f32.partialorder %v3975, 0.0
      %vm4156 = vcmp.gt.f32.partialorder %v4086, 0.0
      %vm4157 = vcmp.gt.f32.partialorder %v4088, 0.0
      %vm4158 = vcmp.gt.f32.partialorder %v3979, 0.0
      %vm4159 = vcmp.gt.f32.partialorder %v3981, 0.0
      %vm4160 = vcmp.gt.f32.partialorder %v4092, 0.0
      %vm4161 = vcmp.gt.f32.partialorder %v4094, 0.0
      %vm4162 = vcmp.gt.f32.partialorder %v3983, 0.0
      %vm4163 = vcmp.gt.f32.partialorder %v3985, 0.0
      %vm4164 = vcmp.gt.f32.partialorder %v4096, 0.0
      %vm4165 = vcmp.gt.f32.partialorder %v4098, 0.0
      %vm4166 = vcmp.gt.f32.partialorder %v3989, 0.0
      %vm4167 = vcmp.gt.f32.partialorder %v3991, 0.0
      %vm4168 = vcmp.gt.f32.partialorder %v4102, 0.0
      %vm4169 = vcmp.gt.f32.partialorder %v4104, 0.0
      %vm4170 = vcmp.gt.f32.partialorder %v3993, 0.0
      %vm4171 = vcmp.gt.f32.partialorder %v3995, 0.0
      %vm4172 = vcmp.gt.f32.partialorder %v4106, 0.0
      %vm4173 = vcmp.gt.f32.partialorder %v4108, 0.0
      %v4174 = vmul.f32 %v3919, 0.2
      %v4175 = vmul.f32 %v3921, 0.2
      %v4176 = vmul.f32 %v4032, 0.2
      %v4177 = vmul.f32 %v4034, 0.2
      %v4178 = vmul.f32 %v3923, 0.2
      %v4179 = vmul.f32 %v3925, 0.2
      %v4180 = vmul.f32 %v4036, 0.2
      %v4181 = vmul.f32 %v4038, 0.2
      %v4182 = vmul.f32 %v3929, 0.2
      %v4183 = vmul.f32 %v3931, 0.2
      %v4184 = vmul.f32 %v4042, 0.2
      %v4185 = vmul.f32 %v4044, 0.2
      %v4186 = vmul.f32 %v3933, 0.2
      %v4187 = vmul.f32 %v3935, 0.2
      %v4188 = vmul.f32 %v4046, 0.2
      %v4189 = vmul.f32 %v4048, 0.2
      %v4190 = vmul.f32 %v3939, 0.2
      %v4191 = vmul.f32 %v3941, 0.2
      %v4192 = vmul.f32 %v4052, 0.2
      %v4193 = vmul.f32 %v4054, 0.2
      %v4194 = vmul.f32 %v3943, 0.2
      %v4195 = vmul.f32 %v3945, 0.2
      %v4196 = vmul.f32 %v4056, 0.2
      %v4197 = vmul.f32 %v4058, 0.2
      %v4198 = vmul.f32 %v3949, 0.2
      %v4199 = vmul.f32 %v3951, 0.2
      %v4200 = vmul.f32 %v4062, 0.2
      %v4201 = vmul.f32 %v4064, 0.2
      %v4202 = vmul.f32 %v3953, 0.2
      %v4203 = vmul.f32 %v3955, 0.2
      %v4204 = vmul.f32 %v4066, 0.2
      %v4205 = vmul.f32 %v4068, 0.2
      %v4206 = vmul.f32 %v3959, 0.2
      %v4207 = vmul.f32 %v3961, 0.2
      %v4208 = vmul.f32 %v4072, 0.2
      %v4209 = vmul.f32 %v4074, 0.2
      %v4210 = vmul.f32 %v3963, 0.2
      %v4211 = vmul.f32 %v3965, 0.2
      %v4212 = vmul.f32 %v4076, 0.2
      %v4213 = vmul.f32 %v4078, 0.2
      %v4214 = vmul.f32 %v3969, 0.2
      %v4215 = vmul.f32 %v3971, 0.2
      %v4216 = vmul.f32 %v4082, 0.2
      %v4217 = vmul.f32 %v4084, 0.2
      %v4218 = vmul.f32 %v3973, 0.2
      %v4219 = vmul.f32 %v3975, 0.2
      %v4220 = vmul.f32 %v4086, 0.2
      %v4221 = vmul.f32 %v4088, 0.2
      %v4222 = vmul.f32 %v3979, 0.2
      %v4223 = vmul.f32 %v3981, 0.2
      %v4224 = vmul.f32 %v4092, 0.2
      %v4225 = vmul.f32 %v4094, 0.2
      %v4226 = vmul.f32 %v3983, 0.2
      %v4227 = vmul.f32 %v3985, 0.2
      %v4228 = vmul.f32 %v4096, 0.2
      %v4229 = vmul.f32 %v4098, 0.2
      %v4230 = vmul.f32 %v3989, 0.2
      %v4231 = vmul.f32 %v3991, 0.2
      %v4232 = vmul.f32 %v4102, 0.2
      %v4233 = vmul.f32 %v4104, 0.2
      %v4234 = vmul.f32 %v3993, 0.2
      %v4235 = vmul.f32 %v3995, 0.2
      %v4236 = vmul.f32 %v4106, 0.2
      %v4237 = vmul.f32 %v4108, 0.2
      %v4238 = vsel %vm4110, %v3919, %v4174
      %v4239 = vsel %vm4111, %v3921, %v4175
      %v4240 = vsel %vm4112, %v4032, %v4176
      %v4241 = vsel %vm4113, %v4034, %v4177
      %v4242 = vsel %vm4114, %v3923, %v4178
      %v4243 = vsel %vm4115, %v3925, %v4179
      %v4244 = vsel %vm4116, %v4036, %v4180
      %v4245 = vsel %vm4117, %v4038, %v4181
      %v4246 = vsel %vm4118, %v3929, %v4182
      %v4247 = vsel %vm4119, %v3931, %v4183
      %v4248 = vsel %vm4120, %v4042, %v4184
      %v4249 = vsel %vm4121, %v4044, %v4185
      %v4250 = vsel %vm4122, %v3933, %v4186
      %v4251 = vsel %vm4123, %v3935, %v4187
      %v4252 = vsel %vm4124, %v4046, %v4188
      %v4253 = vsel %vm4125, %v4048, %v4189
      %v4254 = vsel %vm4126, %v3939, %v4190
      %v4255 = vsel %vm4127, %v3941, %v4191
      %v4256 = vsel %vm4128, %v4052, %v4192
      %v4257 = vsel %vm4129, %v4054, %v4193
      %v4258 = vsel %vm4130, %v3943, %v4194
      %v4259 = vsel %vm4131, %v3945, %v4195
      %v4260 = vsel %vm4132, %v4056, %v4196
      %v4261 = vsel %vm4133, %v4058, %v4197
      %v4262 = vsel %vm4134, %v3949, %v4198
      %v4263 = vsel %vm4135, %v3951, %v4199
      %v4264 = vsel %vm4136, %v4062, %v4200
      %v4265 = vsel %vm4137, %v4064, %v4201
      %v4266 = vsel %vm4138, %v3953, %v4202
      %v4267 = vsel %vm4139, %v3955, %v4203
      %v4268 = vsel %vm4140, %v4066, %v4204
      %v4269 = vsel %vm4141, %v4068, %v4205
      %v4270 = vsel %vm4142, %v3959, %v4206
      %v4271 = vsel %vm4143, %v3961, %v4207
      %v4272 = vsel %vm4144, %v4072, %v4208
      %v4273 = vsel %vm4145, %v4074, %v4209
      %v4274 = vsel %vm4146, %v3963, %v4210
      %v4275 = vsel %vm4147, %v3965, %v4211
      %v4276 = vsel %vm4148, %v4076, %v4212
      %v4277 = vsel %vm4149, %v4078, %v4213
      %v4278 = vsel %vm4150, %v3969, %v4214
      %v4279 = vsel %vm4151, %v3971, %v4215
      %v4280 = vsel %vm4152, %v4082, %v4216
      %v4281 = vsel %vm4153, %v4084, %v4217
      %v4282 = vsel %vm4154, %v3973, %v4218
      %v4283 = vsel %vm4155, %v3975, %v4219
      %v4284 = vsel %vm4156, %v4086, %v4220
      %v4285 = vsel %vm4157, %v4088, %v4221
      %v4286 = vsel %vm4158, %v3979, %v4222
      %v4287 = vsel %vm4159, %v3981, %v4223
      %v4288 = vsel %vm4160, %v4092, %v4224
      %v4289 = vsel %vm4161, %v4094, %v4225
      %v4290 = vsel %vm4162, %v3983, %v4226
      %v4291 = vsel %vm4163, %v3985, %v4227
      %v4292 = vsel %vm4164, %v4096, %v4228
      %v4293 = vsel %vm4165, %v4098, %v4229
      %v4294 = vsel %vm4166, %v3989, %v4230
      %v4295 = vsel %vm4167, %v3991, %v4231
      %v4296 = vsel %vm4168, %v4102, %v4232
      %v4297 = vsel %vm4169, %v4104, %v4233
      %v4298 = vsel %vm4170, %v3993, %v4234
      %v4299 = vsel %vm4171, %v3995, %v4235
      %v4300 = vsel %vm4172, %v4106, %v4236
      %v4301 = vsel %vm4173, %v4108, %v4237
      %v4302 = vpack.c.bf16 %v4242, %v4238
      %v4303 = vpack.c.bf16 %v4243, %v4239
      %v4304 = vpack.c.bf16 %v4244, %v4240
      %v4305 = vpack.c.bf16 %v4245, %v4241
      %v4306 = vpack.c.bf16 %v4250, %v4246
      %v4307 = vpack.c.bf16 %v4251, %v4247
      %v4308 = vpack.c.bf16 %v4252, %v4248
      %v4309 = vpack.c.bf16 %v4253, %v4249
      %v4310 = vpack.c.bf16 %v4258, %v4254
      %v4311 = vpack.c.bf16 %v4259, %v4255
      %v4312 = vpack.c.bf16 %v4260, %v4256
      %v4313 = vpack.c.bf16 %v4261, %v4257
      %v4314 = vpack.c.bf16 %v4266, %v4262
      %v4315 = vpack.c.bf16 %v4267, %v4263
      %v4316 = vpack.c.bf16 %v4268, %v4264
      %v4317 = vpack.c.bf16 %v4269, %v4265
      %v4318 = vpack.c.bf16 %v4274, %v4270
      %v4319 = vpack.c.bf16 %v4275, %v4271
      %v4320 = vpack.c.bf16 %v4276, %v4272
      %v4321 = vpack.c.bf16 %v4277, %v4273
      %v4322 = vpack.c.bf16 %v4282, %v4278
      %v4323 = vpack.c.bf16 %v4283, %v4279
      %v4324 = vpack.c.bf16 %v4284, %v4280
      %v4325 = vpack.c.bf16 %v4285, %v4281
      %v4326 = vpack.c.bf16 %v4290, %v4286
      %v4327 = vpack.c.bf16 %v4291, %v4287
      %v4328 = vpack.c.bf16 %v4292, %v4288
      %v4329 = vpack.c.bf16 %v4293, %v4289
      %v4330 = vpack.c.bf16 %v4298, %v4294
      %v4331 = vpack.c.bf16 %v4299, %v4295
      %v4332 = vpack.c.bf16 %v4300, %v4296
      %v4333 = vpack.c.bf16 %v4301, %v4297
      %v4334 = vld [vmem:[%s7] sm:$0xff]
      %v4335 = vld [vmem:[%s7 + $0x8] sm:$0xff]
      %v4336 = vld [vmem:[%s7 + $0x10] sm:$0xff]
      %v4337 = vld [vmem:[%s7 + $0x18] sm:$0xf]
      %v4338 = vld [vmem:[%s7 + $0x1c] sm:$0xff]
      %v4339 = vld [vmem:[%s7 + $0x24] sm:$0xff]
      %v4340 = vld [vmem:[%s7 + $0x2c] sm:$0xff]
      %v4341 = vld [vmem:[%s7 + $0x34] sm:$0xf]
      %v4342 = vld [vmem:[%s7 + $0x38] sm:$0xff]
      %v4343 = vld [vmem:[%s7 + $0x40] sm:$0xff]
      %v4344 = vld [vmem:[%s7 + $0x48] sm:$0xff]
      %v4345 = vld [vmem:[%s7 + $0x50] sm:$0xf]
      %v4346 = vld [vmem:[%s7 + $0x54] sm:$0xff]
      %v4347 = vld [vmem:[%s7 + $0x5c] sm:$0xff]
      %v4348 = vld [vmem:[%s7 + $0x64] sm:$0xff]
      %v4349 = vld [vmem:[%s7 + $0x6c] sm:$0xf]
      %v4350 = vld [vmem:[%s7 + $0x70] sm:$0xff]
      %v4351 = vld [vmem:[%s7 + $0x78] sm:$0xff]
      %v4352 = vld [vmem:[%s7 + $0x80] sm:$0xff]
      %v4353 = vld [vmem:[%s7 + $0x88] sm:$0xf]
      %v4354 = vld [vmem:[%s7 + $0x8c] sm:$0xff]
      %v4355 = vld [vmem:[%s7 + $0x94] sm:$0xff]
      %v4356 = vld [vmem:[%s7 + $0x9c] sm:$0xff]
      %v4357 = vld [vmem:[%s7 + $0xa4] sm:$0xf]
      %v4358 = vld [vmem:[%s7 + $0xa8] sm:$0xff]
      %v4359 = vld [vmem:[%s7 + $0xb0] sm:$0xff]
      %v4360 = vld [vmem:[%s7 + $0xb8] sm:$0xff]
      %v4361 = vld [vmem:[%s7 + $0xc0] sm:$0xf]
      %v4362 = vld [vmem:[%s7 + $0xc4] sm:$0xff]
      %v4363 = vld [vmem:[%s7 + $0xcc] sm:$0xff]
      %v4364 = vld [vmem:[%s7 + $0xd4] sm:$0xff]
      %v4365 = vld [vmem:[%s7 + $0xdc] sm:$0xf]
      %v4366 = vld [vmem:[%s7 + $0xe0] sm:$0xff]
      %v4367 = vld [vmem:[%s7 + $0xe8] sm:$0xff]
      %v4368 = vld [vmem:[%s7 + $0xf0] sm:$0xff]
      %v4369 = vld [vmem:[%s7 + $0xf8] sm:$0xf]
      %v4370 = vld [vmem:[%s7 + $0xfc] sm:$0xff]
      %v4371 = vld [vmem:[%s7 + $0x104] sm:$0xff]
      %v4372 = vld [vmem:[%s7 + $0x10c] sm:$0xff]
      %v4373 = vld [vmem:[%s7 + $0x114] sm:$0xf]
      %v4374 = vld [vmem:[%s7 + $0x118] sm:$0xff]
      %v4375 = vld [vmem:[%s7 + $0x120] sm:$0xff]
      %v4376 = vld [vmem:[%s7 + $0x128] sm:$0xff]
      %v4377 = vld [vmem:[%s7 + $0x130] sm:$0xf]
      %v4378 = vld [vmem:[%s7 + $0x134] sm:$0xff]
      %v4379 = vld [vmem:[%s7 + $0x13c] sm:$0xff]
      %v4380 = vld [vmem:[%s7 + $0x144] sm:$0xff]
      %v4381 = vld [vmem:[%s7 + $0x14c] sm:$0xf]
      %v4382 = vld [vmem:[%s7 + $0x150] sm:$0xff]
      %v4383 = vld [vmem:[%s7 + $0x158] sm:$0xff]
      %v4384 = vld [vmem:[%s7 + $0x160] sm:$0xff]
      %v4385 = vld [vmem:[%s7 + $0x168] sm:$0xf]
      %v4386 = vld [vmem:[%s7 + $0x16c] sm:$0xff]
      %v4387 = vld [vmem:[%s7 + $0x174] sm:$0xff]
      %v4388 = vld [vmem:[%s7 + $0x17c] sm:$0xff]
      %v4389 = vld [vmem:[%s7 + $0x184] sm:$0xf]
      %v4390 = vld [vmem:[%s7 + $0x188] sm:$0xff]
      %v4391 = vld [vmem:[%s7 + $0x190] sm:$0xff]
      %v4392 = vld [vmem:[%s7 + $0x198] sm:$0xff]
      %v4393 = vld [vmem:[%s7 + $0x1a0] sm:$0xf]
      %v4394 = vld [vmem:[%s7 + $0x1a4] sm:$0xff]
      %v4395 = vld [vmem:[%s7 + $0x1ac] sm:$0xff]
      %v4396 = vld [vmem:[%s7 + $0x1b4] sm:$0xff]
      %v4397 = vld [vmem:[%s7 + $0x1bc] sm:$0xf]
      %v4398 = vld [vmem:[%s7 + $0x1c0] sm:$0xff]
      %v4399 = vld [vmem:[%s7 + $0x1c8] sm:$0xff]
      %v4400 = vld [vmem:[%s7 + $0x1d0] sm:$0xff]
      %v4401 = vld [vmem:[%s7 + $0x1d8] sm:$0xf]
      %v4402 = vld [vmem:[%s7 + $0x1dc] sm:$0xff]
      %v4403 = vld [vmem:[%s7 + $0x1e4] sm:$0xff]
      %v4404 = vld [vmem:[%s7 + $0x1ec] sm:$0xff]
      %v4405 = vld [vmem:[%s7 + $0x1f4] sm:$0xf]
      %v4406 = vld [vmem:[%s7 + $0x1f8] sm:$0xff]
      %v4407 = vld [vmem:[%s7 + $0x200] sm:$0xff]
      %v4408 = vld [vmem:[%s7 + $0x208] sm:$0xff]
      %v4409 = vld [vmem:[%s7 + $0x210] sm:$0xf]
      %v4410 = vld [vmem:[%s7 + $0x214] sm:$0xff]
      %v4411 = vld [vmem:[%s7 + $0x21c] sm:$0xff]
      %v4412 = vld [vmem:[%s7 + $0x224] sm:$0xff]
      %v4413 = vld [vmem:[%s7 + $0x22c] sm:$0xf]
      %v4414 = vld [vmem:[%s7 + $0x230] sm:$0xff]
      %v4415 = vld [vmem:[%s7 + $0x238] sm:$0xff]
      %v4416 = vld [vmem:[%s7 + $0x240] sm:$0xff]
      %v4417 = vld [vmem:[%s7 + $0x248] sm:$0xf]
      %v4418 = vld [vmem:[%s7 + $0x24c] sm:$0xff]
      %v4419 = vld [vmem:[%s7 + $0x254] sm:$0xff]
      %v4420 = vld [vmem:[%s7 + $0x25c] sm:$0xff]
      %v4421 = vld [vmem:[%s7 + $0x264] sm:$0xf]
      %v4422 = vld [vmem:[%s7 + $0x268] sm:$0xff]
      %v4423 = vld [vmem:[%s7 + $0x270] sm:$0xff]
      %v4424 = vld [vmem:[%s7 + $0x278] sm:$0xff]
      %v4425 = vld [vmem:[%s7 + $0x280] sm:$0xf]
      %v4426 = vld [vmem:[%s7 + $0x284] sm:$0xff]
      %v4427 = vld [vmem:[%s7 + $0x28c] sm:$0xff]
      %v4428 = vld [vmem:[%s7 + $0x294] sm:$0xff]
      %v4429 = vld [vmem:[%s7 + $0x29c] sm:$0xf]
      %v4430 = vld [vmem:[%s7 + $0x2a0] sm:$0xff]
      %v4431 = vld [vmem:[%s7 + $0x2a8] sm:$0xff]
      %v4432 = vld [vmem:[%s7 + $0x2b0] sm:$0xff]
      %v4433 = vld [vmem:[%s7 + $0x2b8] sm:$0xf]
      %v4434 = vld [vmem:[%s7 + $0x2bc] sm:$0xff]
      %v4435 = vld [vmem:[%s7 + $0x2c4] sm:$0xff]
      %v4436 = vld [vmem:[%s7 + $0x2cc] sm:$0xff]
      %v4437 = vld [vmem:[%s7 + $0x2d4] sm:$0xf]
      %v4438 = vld [vmem:[%s7 + $0x2d8] sm:$0xff]
      %v4439 = vld [vmem:[%s7 + $0x2e0] sm:$0xff]
      %v4440 = vld [vmem:[%s7 + $0x2e8] sm:$0xff]
      %v4441 = vld [vmem:[%s7 + $0x2f0] sm:$0xf]
      %v4442 = vld [vmem:[%s7 + $0x2f4] sm:$0xff]
      %v4443 = vld [vmem:[%s7 + $0x2fc] sm:$0xff]
      %v4444 = vld [vmem:[%s7 + $0x304] sm:$0xff]
      %v4445 = vld [vmem:[%s7 + $0x30c] sm:$0xf]
      %v4446 = vld [vmem:[%s7 + $0x310] sm:$0xff]
      %v4447 = vld [vmem:[%s7 + $0x318] sm:$0xff]
      %v4448 = vld [vmem:[%s7 + $0x320] sm:$0xff]
      %v4449 = vld [vmem:[%s7 + $0x328] sm:$0xf]
      %v4450 = vld [vmem:[%s7 + $0x32c] sm:$0xff]
      %v4451 = vld [vmem:[%s7 + $0x334] sm:$0xff]
      %v4452 = vld [vmem:[%s7 + $0x33c] sm:$0xff]
      %v4453 = vld [vmem:[%s7 + $0x344] sm:$0xf]
      %v4454 = vld [vmem:[%s7 + $0x348] sm:$0xff]
      %v4455 = vld [vmem:[%s7 + $0x350] sm:$0xff]
      %v4456 = vld [vmem:[%s7 + $0x358] sm:$0xff]
      %v4457 = vld [vmem:[%s7 + $0x360] sm:$0xf]
      %v4458 = vld [vmem:[%s7 + $0x364] sm:$0xff]
      %v4459 = vld [vmem:[%s7 + $0x36c] sm:$0xff]
      %v4460 = vld [vmem:[%s7 + $0x374] sm:$0xff]
      %v4461 = vld [vmem:[%s7 + $0x37c] sm:$0xf]
      %v4462 = vld [vmem:[%s7 + $0x380] sm:$0xff]
      %v4463 = vld [vmem:[%s7 + $0x388] sm:$0xff]
      %v4464 = vld [vmem:[%s7 + $0x390] sm:$0xff]
      %v4465 = vld [vmem:[%s7 + $0x398] sm:$0xf]
      %v4466 = vld [vmem:[%s7 + $0x39c] sm:$0xff]
      %v4467 = vld [vmem:[%s7 + $0x3a4] sm:$0xff]
      %v4468 = vld [vmem:[%s7 + $0x3ac] sm:$0xff]
      %v4469 = vld [vmem:[%s7 + $0x3b4] sm:$0xf]
      %v4470 = vld [vmem:[%s7 + $0x3b8] sm:$0xff]
      %v4471 = vld [vmem:[%s7 + $0x3c0] sm:$0xff]
      %v4472 = vld [vmem:[%s7 + $0x3c8] sm:$0xff]
      %v4473 = vld [vmem:[%s7 + $0x3d0] sm:$0xf]
      %v4474 = vld [vmem:[%s7 + $0x3d4] sm:$0xff]
      %v4475 = vld [vmem:[%s7 + $0x3dc] sm:$0xff]
      %v4476 = vld [vmem:[%s7 + $0x3e4] sm:$0xff]
      %v4477 = vld [vmem:[%s7 + $0x3ec] sm:$0xf]
      %v4478 = vld [vmem:[%s7 + $0x3f0] sm:$0xff]
      %v4479 = vld [vmem:[%s7 + $0x3f8] sm:$0xff]
      %v4480 = vld [vmem:[%s7 + $0x400] sm:$0xff]
      %v4481 = vld [vmem:[%s7 + $0x408] sm:$0xf]
      %v4482 = vld [vmem:[%s7 + $0x40c] sm:$0xff]
      %v4483 = vld [vmem:[%s7 + $0x414] sm:$0xff]
      %v4484 = vld [vmem:[%s7 + $0x41c] sm:$0xff]
      %v4485 = vld [vmem:[%s7 + $0x424] sm:$0xf]
      %v4486 = vld [vmem:[%s7 + $0x428] sm:$0xff]
      %v4487 = vld [vmem:[%s7 + $0x430] sm:$0xff]
      %v4488 = vld [vmem:[%s7 + $0x438] sm:$0xff]
      %v4489 = vld [vmem:[%s7 + $0x440] sm:$0xf]
      %v4490 = vld [vmem:[%s7 + $0x444] sm:$0xff]
      %v4491 = vld [vmem:[%s7 + $0x44c] sm:$0xff]
      %v4492 = vld [vmem:[%s7 + $0x454] sm:$0xff]
      %v4493 = vld [vmem:[%s7 + $0x45c] sm:$0xf]
      %v4494 = vld [vmem:[%s7 + $0x460] sm:$0xff]
      %v4495 = vld [vmem:[%s7 + $0x468] sm:$0xff]
      %v4496 = vld [vmem:[%s7 + $0x470] sm:$0xff]
      %v4497 = vld [vmem:[%s7 + $0x478] sm:$0xf]
      %v4498 = vld [vmem:[%s7 + $0x47c] sm:$0xff]
      %v4499 = vld [vmem:[%s7 + $0x484] sm:$0xff]
      %v4500 = vld [vmem:[%s7 + $0x48c] sm:$0xff]
      %v4501 = vld [vmem:[%s7 + $0x494] sm:$0xf]
      %v4502 = vld [vmem:[%s7 + $0x498] sm:$0xff]
      %v4503 = vld [vmem:[%s7 + $0x4a0] sm:$0xff]
      %v4504 = vld [vmem:[%s7 + $0x4a8] sm:$0xff]
      %v4505 = vld [vmem:[%s7 + $0x4b0] sm:$0xf]
      %v4506 = vld [vmem:[%s7 + $0x4b4] sm:$0xff]
      %v4507 = vld [vmem:[%s7 + $0x4bc] sm:$0xff]
      %v4508 = vld [vmem:[%s7 + $0x4c4] sm:$0xff]
      %v4509 = vld [vmem:[%s7 + $0x4cc] sm:$0xf]
      %v4510 = vld [vmem:[%s7 + $0x4d0] sm:$0xff]
      %v4511 = vld [vmem:[%s7 + $0x4d8] sm:$0xff]
      %v4512 = vld [vmem:[%s7 + $0x4e0] sm:$0xff]
      %v4513 = vld [vmem:[%s7 + $0x4e8] sm:$0xf]
      %v4514 = vld [vmem:[%s7 + $0x4ec] sm:$0xff]
      %v4515 = vld [vmem:[%s7 + $0x4f4] sm:$0xff]
      %v4516 = vld [vmem:[%s7 + $0x4fc] sm:$0xff]
      %v4517 = vld [vmem:[%s7 + $0x504] sm:$0xf]
      %v4518 = vld [vmem:[%s7 + $0x508] sm:$0xff]
      %v4519 = vld [vmem:[%s7 + $0x510] sm:$0xff]
      %v4520 = vld [vmem:[%s7 + $0x518] sm:$0xff]
      %v4521 = vld [vmem:[%s7 + $0x520] sm:$0xf]
      %v4522 = vld [vmem:[%s7 + $0x524] sm:$0xff]
      %v4523 = vld [vmem:[%s7 + $0x52c] sm:$0xff]
      %v4524 = vld [vmem:[%s7 + $0x534] sm:$0xff]
      %v4525 = vld [vmem:[%s7 + $0x53c] sm:$0xf]
      %v4526 = vld [vmem:[%s7 + $0x540] sm:$0xff]
      %v4527 = vld [vmem:[%s7 + $0x548] sm:$0xff]
      %v4528 = vld [vmem:[%s7 + $0x550] sm:$0xff]
      %v4529 = vld [vmem:[%s7 + $0x558] sm:$0xf]
      %v4530 = vld [vmem:[%s7 + $0x55c] sm:$0xff]
      %v4531 = vld [vmem:[%s7 + $0x564] sm:$0xff]
      %v4532 = vld [vmem:[%s7 + $0x56c] sm:$0xff]
      %v4533 = vld [vmem:[%s7 + $0x574] sm:$0xf]
      %v4534 = vld [vmem:[%s8] sm:$0xff]
      %v4536 = vlaneseq
      %v4537 = vshrl.u32 %v4536, 7
      %v4538 = vsub.s32 0, %v4537
      %v4539 = vrot.slane %v4534, %v4538
      %v4540 = vlaneseq
      %v4541 = vshrl.u32 %v4540, 7
      %v4542 = vsub.s32 1, %v4541
      %v4543 = vrot.slane %v4534, %v4542
      %v4544 = vlaneseq
      %v4545 = vshrl.u32 %v4544, 7
      %v4546 = vsub.s32 2, %v4545
      %v4547 = vrot.slane %v4534, %v4546
      %v4548 = vlaneseq
      %v4549 = vshrl.u32 %v4548, 7
      %v4550 = vsub.s32 3, %v4549
      %v4551 = vrot.slane %v4534, %v4550
      %v4552 = vlaneseq
      %v4553 = vshrl.u32 %v4552, 7
      %v4554 = vsub.s32 4, %v4553
      %v4555 = vrot.slane %v4534, %v4554
      %v4556 = vlaneseq
      %v4557 = vshrl.u32 %v4556, 7
      %v4558 = vsub.s32 5, %v4557
      %v4559 = vrot.slane %v4534, %v4558
      %v4560 = vlaneseq
      %v4561 = vshrl.u32 %v4560, 7
      %v4562 = vsub.s32 6, %v4561
      %v4563 = vrot.slane %v4534, %v4562
      %v4771 = vunpack.c.l.b16 %v4334
      %v4772 = vunpack.c.h.b16 %v4334
      %v4773 = vunpack.c.l.b16 %v4335
      %v4774 = vunpack.c.h.b16 %v4335
      %v4775 = vunpack.c.l.b16 %v4336
      %v4776 = vunpack.c.h.b16 %v4336
      %v4777 = vunpack.c.l.b16 %v4337
      %v4778 = vunpack.c.l.b16 %v4338
      %v4779 = vunpack.c.h.b16 %v4338
      %v4780 = vunpack.c.l.b16 %v4339
      %v4781 = vunpack.c.h.b16 %v4339
      %v4782 = vunpack.c.l.b16 %v4340
      %v4783 = vunpack.c.h.b16 %v4340
      %v4784 = vunpack.c.l.b16 %v4341
      %v4785 = vunpack.c.l.b16 %v4342
      %v4786 = vunpack.c.h.b16 %v4342
      %v4787 = vunpack.c.l.b16 %v4343
      %v4788 = vunpack.c.h.b16 %v4343
      %v4789 = vunpack.c.l.b16 %v4344
      %v4790 = vunpack.c.h.b16 %v4344
      %v4791 = vunpack.c.l.b16 %v4345
      %v4792 = vunpack.c.l.b16 %v4346
      %v4793 = vunpack.c.h.b16 %v4346
      %v4794 = vunpack.c.l.b16 %v4347
      %v4795 = vunpack.c.h.b16 %v4347
      %v4796 = vunpack.c.l.b16 %v4348
      %v4797 = vunpack.c.h.b16 %v4348
      %v4798 = vunpack.c.l.b16 %v4349
      %v4799 = vunpack.c.l.b16 %v4350
      %v4800 = vunpack.c.h.b16 %v4350
      %v4801 = vunpack.c.l.b16 %v4351
      %v4802 = vunpack.c.h.b16 %v4351
      %v4803 = vunpack.c.l.b16 %v4352
      %v4804 = vunpack.c.h.b16 %v4352
      %v4805 = vunpack.c.l.b16 %v4353
      %v4806 = vunpack.c.l.b16 %v4354
      %v4807 = vunpack.c.h.b16 %v4354
      %v4808 = vunpack.c.l.b16 %v4355
      %v4809 = vunpack.c.h.b16 %v4355
      %v4810 = vunpack.c.l.b16 %v4356
      %v4811 = vunpack.c.h.b16 %v4356
      %v4812 = vunpack.c.l.b16 %v4357
      %v4813 = vunpack.c.l.b16 %v4358
      %v4814 = vunpack.c.h.b16 %v4358
      %v4815 = vunpack.c.l.b16 %v4359
      %v4816 = vunpack.c.h.b16 %v4359
      %v4817 = vunpack.c.l.b16 %v4360
      %v4818 = vunpack.c.h.b16 %v4360
      %v4819 = vunpack.c.l.b16 %v4361
      %v4820 = vunpack.c.l.b16 %v4362
      %v4821 = vunpack.c.h.b16 %v4362
      %v4822 = vunpack.c.l.b16 %v4363
      %v4823 = vunpack.c.h.b16 %v4363
      %v4824 = vunpack.c.l.b16 %v4364
      %v4825 = vunpack.c.h.b16 %v4364
      %v4826 = vunpack.c.l.b16 %v4365
      %v4827 = vunpack.c.l.b16 %v4366
      %v4828 = vunpack.c.h.b16 %v4366
      %v4829 = vunpack.c.l.b16 %v4367
      %v4830 = vunpack.c.h.b16 %v4367
      %v4831 = vunpack.c.l.b16 %v4368
      %v4832 = vunpack.c.h.b16 %v4368
      %v4833 = vunpack.c.l.b16 %v4369
      %v4834 = vunpack.c.l.b16 %v4370
      %v4835 = vunpack.c.h.b16 %v4370
      %v4836 = vunpack.c.l.b16 %v4371
      %v4837 = vunpack.c.h.b16 %v4371
      %v4838 = vunpack.c.l.b16 %v4372
      %v4839 = vunpack.c.h.b16 %v4372
      %v4840 = vunpack.c.l.b16 %v4373
      %v4841 = vunpack.c.l.b16 %v4374
      %v4842 = vunpack.c.h.b16 %v4374
      %v4843 = vunpack.c.l.b16 %v4375
      %v4844 = vunpack.c.h.b16 %v4375
      %v4845 = vunpack.c.l.b16 %v4376
      %v4846 = vunpack.c.h.b16 %v4376
      %v4847 = vunpack.c.l.b16 %v4377
      %v4848 = vunpack.c.l.b16 %v4378
      %v4849 = vunpack.c.h.b16 %v4378
      %v4850 = vunpack.c.l.b16 %v4379
      %v4851 = vunpack.c.h.b16 %v4379
      %v4852 = vunpack.c.l.b16 %v4380
      %v4853 = vunpack.c.h.b16 %v4380
      %v4854 = vunpack.c.l.b16 %v4381
      %v4855 = vunpack.c.l.b16 %v4382
      %v4856 = vunpack.c.h.b16 %v4382
      %v4857 = vunpack.c.l.b16 %v4383
      %v4858 = vunpack.c.h.b16 %v4383
      %v4859 = vunpack.c.l.b16 %v4384
      %v4860 = vunpack.c.h.b16 %v4384
      %v4861 = vunpack.c.l.b16 %v4385
      %v4862 = vunpack.c.l.b16 %v4386
      %v4863 = vunpack.c.h.b16 %v4386
      %v4864 = vunpack.c.l.b16 %v4387
      %v4865 = vunpack.c.h.b16 %v4387
      %v4866 = vunpack.c.l.b16 %v4388
      %v4867 = vunpack.c.h.b16 %v4388
      %v4868 = vunpack.c.l.b16 %v4389
      %v4869 = vunpack.c.l.b16 %v4390
      %v4870 = vunpack.c.h.b16 %v4390
      %v4871 = vunpack.c.l.b16 %v4391
      %v4872 = vunpack.c.h.b16 %v4391
      %v4873 = vunpack.c.l.b16 %v4392
      %v4874 = vunpack.c.h.b16 %v4392
      %v4875 = vunpack.c.l.b16 %v4393
      %v4876 = vunpack.c.l.b16 %v4394
      %v4877 = vunpack.c.h.b16 %v4394
      %v4878 = vunpack.c.l.b16 %v4395
      %v4879 = vunpack.c.h.b16 %v4395
      %v4880 = vunpack.c.l.b16 %v4396
      %v4881 = vunpack.c.h.b16 %v4396
      %v4882 = vunpack.c.l.b16 %v4397
      %v4883 = vunpack.c.l.b16 %v4398
      %v4884 = vunpack.c.h.b16 %v4398
      %v4885 = vunpack.c.l.b16 %v4399
      %v4886 = vunpack.c.h.b16 %v4399
      %v4887 = vunpack.c.l.b16 %v4400
      %v4888 = vunpack.c.h.b16 %v4400
      %v4889 = vunpack.c.l.b16 %v4401
      %v4890 = vunpack.c.l.b16 %v4402
      %v4891 = vunpack.c.h.b16 %v4402
      %v4892 = vunpack.c.l.b16 %v4403
      %v4893 = vunpack.c.h.b16 %v4403
      %v4894 = vunpack.c.l.b16 %v4404
      %v4895 = vunpack.c.h.b16 %v4404
      %v4896 = vunpack.c.l.b16 %v4405
      %v4897 = vunpack.c.l.b16 %v4406
      %v4898 = vunpack.c.h.b16 %v4406
      %v4899 = vunpack.c.l.b16 %v4407
      %v4900 = vunpack.c.h.b16 %v4407
      %v4901 = vunpack.c.l.b16 %v4408
      %v4902 = vunpack.c.h.b16 %v4408
      %v4903 = vunpack.c.l.b16 %v4409
      %v4904 = vunpack.c.l.b16 %v4410
      %v4905 = vunpack.c.h.b16 %v4410
      %v4906 = vunpack.c.l.b16 %v4411
      %v4907 = vunpack.c.h.b16 %v4411
      %v4908 = vunpack.c.l.b16 %v4412
      %v4909 = vunpack.c.h.b16 %v4412
      %v4910 = vunpack.c.l.b16 %v4413
      %v4911 = vunpack.c.l.b16 %v4414
      %v4912 = vunpack.c.h.b16 %v4414
      %v4913 = vunpack.c.l.b16 %v4415
      %v4914 = vunpack.c.h.b16 %v4415
      %v4915 = vunpack.c.l.b16 %v4416
      %v4916 = vunpack.c.h.b16 %v4416
      %v4917 = vunpack.c.l.b16 %v4417
      %v4918 = vunpack.c.l.b16 %v4418
      %v4919 = vunpack.c.h.b16 %v4418
      %v4920 = vunpack.c.l.b16 %v4419
      %v4921 = vunpack.c.h.b16 %v4419
      %v4922 = vunpack.c.l.b16 %v4420
      %v4923 = vunpack.c.h.b16 %v4420
      %v4924 = vunpack.c.l.b16 %v4421
      %v4925 = vunpack.c.l.b16 %v4422
      %v4926 = vunpack.c.h.b16 %v4422
      %v4927 = vunpack.c.l.b16 %v4423
      %v4928 = vunpack.c.h.b16 %v4423
      %v4929 = vunpack.c.l.b16 %v4424
      %v4930 = vunpack.c.h.b16 %v4424
      %v4931 = vunpack.c.l.b16 %v4425
      %v4932 = vunpack.c.l.b16 %v4426
      %v4933 = vunpack.c.h.b16 %v4426
      %v4934 = vunpack.c.l.b16 %v4427
      %v4935 = vunpack.c.h.b16 %v4427
      %v4936 = vunpack.c.l.b16 %v4428
      %v4937 = vunpack.c.h.b16 %v4428
      %v4938 = vunpack.c.l.b16 %v4429
      %v4939 = vunpack.c.l.b16 %v4430
      %v4940 = vunpack.c.h.b16 %v4430
      %v4941 = vunpack.c.l.b16 %v4431
      %v4942 = vunpack.c.h.b16 %v4431
      %v4943 = vunpack.c.l.b16 %v4432
      %v4944 = vunpack.c.h.b16 %v4432
      %v4945 = vunpack.c.l.b16 %v4433
      %v4946 = vunpack.c.l.b16 %v4434
      %v4947 = vunpack.c.h.b16 %v4434
      %v4948 = vunpack.c.l.b16 %v4435
      %v4949 = vunpack.c.h.b16 %v4435
      %v4950 = vunpack.c.l.b16 %v4436
      %v4951 = vunpack.c.h.b16 %v4436
      %v4952 = vunpack.c.l.b16 %v4437
      %v4953 = vunpack.c.l.b16 %v4438
      %v4954 = vunpack.c.h.b16 %v4438
      %v4955 = vunpack.c.l.b16 %v4439
      %v4956 = vunpack.c.h.b16 %v4439
      %v4957 = vunpack.c.l.b16 %v4440
      %v4958 = vunpack.c.h.b16 %v4440
      %v4959 = vunpack.c.l.b16 %v4441
      %v4960 = vunpack.c.l.b16 %v4442
      %v4961 = vunpack.c.h.b16 %v4442
      %v4962 = vunpack.c.l.b16 %v4443
      %v4963 = vunpack.c.h.b16 %v4443
      %v4964 = vunpack.c.l.b16 %v4444
      %v4965 = vunpack.c.h.b16 %v4444
      %v4966 = vunpack.c.l.b16 %v4445
      %v4967 = vunpack.c.l.b16 %v4446
      %v4968 = vunpack.c.h.b16 %v4446
      %v4969 = vunpack.c.l.b16 %v4447
      %v4970 = vunpack.c.h.b16 %v4447
      %v4971 = vunpack.c.l.b16 %v4448
      %v4972 = vunpack.c.h.b16 %v4448
      %v4973 = vunpack.c.l.b16 %v4449
      %v4974 = vunpack.c.l.b16 %v4450
      %v4975 = vunpack.c.h.b16 %v4450
      %v4976 = vunpack.c.l.b16 %v4451
      %v4977 = vunpack.c.h.b16 %v4451
      %v4978 = vunpack.c.l.b16 %v4452
      %v4979 = vunpack.c.h.b16 %v4452
      %v4980 = vunpack.c.l.b16 %v4453
      %v4981 = vunpack.c.l.b16 %v4454
      %v4982 = vunpack.c.h.b16 %v4454
      %v4983 = vunpack.c.l.b16 %v4455
      %v4984 = vunpack.c.h.b16 %v4455
      %v4985 = vunpack.c.l.b16 %v4456
      %v4986 = vunpack.c.h.b16 %v4456
      %v4987 = vunpack.c.l.b16 %v4457
      %v4988 = vunpack.c.l.b16 %v4458
      %v4989 = vunpack.c.h.b16 %v4458
      %v4990 = vunpack.c.l.b16 %v4459
      %v4991 = vunpack.c.h.b16 %v4459
      %v4992 = vunpack.c.l.b16 %v4460
      %v4993 = vunpack.c.h.b16 %v4460
      %v4994 = vunpack.c.l.b16 %v4461
      %v4995 = vunpack.c.l.b16 %v4462
      %v4996 = vunpack.c.h.b16 %v4462
      %v4997 = vunpack.c.l.b16 %v4463
      %v4998 = vunpack.c.h.b16 %v4463
      %v4999 = vunpack.c.l.b16 %v4464
      %v5000 = vunpack.c.h.b16 %v4464
      %v5001 = vunpack.c.l.b16 %v4465
      %v5002 = vunpack.c.l.b16 %v4466
      %v5003 = vunpack.c.h.b16 %v4466
      %v5004 = vunpack.c.l.b16 %v4467
      %v5005 = vunpack.c.h.b16 %v4467
      %v5006 = vunpack.c.l.b16 %v4468
      %v5007 = vunpack.c.h.b16 %v4468
      %v5008 = vunpack.c.l.b16 %v4469
      %v5009 = vunpack.c.l.b16 %v4470
      %v5010 = vunpack.c.h.b16 %v4470
      %v5011 = vunpack.c.l.b16 %v4471
      %v5012 = vunpack.c.h.b16 %v4471
      %v5013 = vunpack.c.l.b16 %v4472
      %v5014 = vunpack.c.h.b16 %v4472
      %v5015 = vunpack.c.l.b16 %v4473
      %v5016 = vunpack.c.l.b16 %v4474
      %v5017 = vunpack.c.h.b16 %v4474
      %v5018 = vunpack.c.l.b16 %v4475
      %v5019 = vunpack.c.h.b16 %v4475
      %v5020 = vunpack.c.l.b16 %v4476
      %v5021 = vunpack.c.h.b16 %v4476
      %v5022 = vunpack.c.l.b16 %v4477
      %v5023 = vunpack.c.l.b16 %v4478
      %v5024 = vunpack.c.h.b16 %v4478
      %v5025 = vunpack.c.l.b16 %v4479
      %v5026 = vunpack.c.h.b16 %v4479
      %v5027 = vunpack.c.l.b16 %v4480
      %v5028 = vunpack.c.h.b16 %v4480
      %v5029 = vunpack.c.l.b16 %v4481
      %v5030 = vunpack.c.l.b16 %v4482
      %v5031 = vunpack.c.h.b16 %v4482
      %v5032 = vunpack.c.l.b16 %v4483
      %v5033 = vunpack.c.h.b16 %v4483
      %v5034 = vunpack.c.l.b16 %v4484
      %v5035 = vunpack.c.h.b16 %v4484
      %v5036 = vunpack.c.l.b16 %v4485
      %v5037 = vunpack.c.l.b16 %v4486
      %v5038 = vunpack.c.h.b16 %v4486
      %v5039 = vunpack.c.l.b16 %v4487
      %v5040 = vunpack.c.h.b16 %v4487
      %v5041 = vunpack.c.l.b16 %v4488
      %v5042 = vunpack.c.h.b16 %v4488
      %v5043 = vunpack.c.l.b16 %v4489
      %v5044 = vunpack.c.l.b16 %v4490
      %v5045 = vunpack.c.h.b16 %v4490
      %v5046 = vunpack.c.l.b16 %v4491
      %v5047 = vunpack.c.h.b16 %v4491
      %v5048 = vunpack.c.l.b16 %v4492
      %v5049 = vunpack.c.h.b16 %v4492
      %v5050 = vunpack.c.l.b16 %v4493
      %v5051 = vunpack.c.l.b16 %v4494
      %v5052 = vunpack.c.h.b16 %v4494
      %v5053 = vunpack.c.l.b16 %v4495
      %v5054 = vunpack.c.h.b16 %v4495
      %v5055 = vunpack.c.l.b16 %v4496
      %v5056 = vunpack.c.h.b16 %v4496
      %v5057 = vunpack.c.l.b16 %v4497
      %v5058 = vunpack.c.l.b16 %v4498
      %v5059 = vunpack.c.h.b16 %v4498
      %v5060 = vunpack.c.l.b16 %v4499
      %v5061 = vunpack.c.h.b16 %v4499
      %v5062 = vunpack.c.l.b16 %v4500
      %v5063 = vunpack.c.h.b16 %v4500
      %v5064 = vunpack.c.l.b16 %v4501
      %v5065 = vunpack.c.l.b16 %v4502
      %v5066 = vunpack.c.h.b16 %v4502
      %v5067 = vunpack.c.l.b16 %v4503
      %v5068 = vunpack.c.h.b16 %v4503
      %v5069 = vunpack.c.l.b16 %v4504
      %v5070 = vunpack.c.h.b16 %v4504
      %v5071 = vunpack.c.l.b16 %v4505
      %v5072 = vunpack.c.l.b16 %v4506
      %v5073 = vunpack.c.h.b16 %v4506
      %v5074 = vunpack.c.l.b16 %v4507
      %v5075 = vunpack.c.h.b16 %v4507
      %v5076 = vunpack.c.l.b16 %v4508
      %v5077 = vunpack.c.h.b16 %v4508
      %v5078 = vunpack.c.l.b16 %v4509
      %v5079 = vunpack.c.l.b16 %v4510
      %v5080 = vunpack.c.h.b16 %v4510
      %v5081 = vunpack.c.l.b16 %v4511
      %v5082 = vunpack.c.h.b16 %v4511
      %v5083 = vunpack.c.l.b16 %v4512
      %v5084 = vunpack.c.h.b16 %v4512
      %v5085 = vunpack.c.l.b16 %v4513
      %v5086 = vunpack.c.l.b16 %v4514
      %v5087 = vunpack.c.h.b16 %v4514
      %v5088 = vunpack.c.l.b16 %v4515
      %v5089 = vunpack.c.h.b16 %v4515
      %v5090 = vunpack.c.l.b16 %v4516
      %v5091 = vunpack.c.h.b16 %v4516
      %v5092 = vunpack.c.l.b16 %v4517
      %v5093 = vunpack.c.l.b16 %v4518
      %v5094 = vunpack.c.h.b16 %v4518
      %v5095 = vunpack.c.l.b16 %v4519
      %v5096 = vunpack.c.h.b16 %v4519
      %v5097 = vunpack.c.l.b16 %v4520
      %v5098 = vunpack.c.h.b16 %v4520
      %v5099 = vunpack.c.l.b16 %v4521
      %v5100 = vunpack.c.l.b16 %v4522
      %v5101 = vunpack.c.h.b16 %v4522
      %v5102 = vunpack.c.l.b16 %v4523
      %v5103 = vunpack.c.h.b16 %v4523
      %v5104 = vunpack.c.l.b16 %v4524
      %v5105 = vunpack.c.h.b16 %v4524
      %v5106 = vunpack.c.l.b16 %v4525
      %v5107 = vunpack.c.l.b16 %v4526
      %v5108 = vunpack.c.h.b16 %v4526
      %v5109 = vunpack.c.l.b16 %v4527
      %v5110 = vunpack.c.h.b16 %v4527
      %v5111 = vunpack.c.l.b16 %v4528
      %v5112 = vunpack.c.h.b16 %v4528
      %v5113 = vunpack.c.l.b16 %v4529
      %v5114 = vunpack.c.l.b16 %v4530
      %v5115 = vunpack.c.h.b16 %v4530
      %v5116 = vunpack.c.l.b16 %v4531
      %v5117 = vunpack.c.h.b16 %v4531
      %v5118 = vunpack.c.l.b16 %v4532
      %v5119 = vunpack.c.h.b16 %v4532
      %v5120 = vunpack.c.l.b16 %v4533
      %v5121 = vpack.c.b16 %v4778, %v4771
      %v5122 = vpack.c.b16 %v4779, %v4772
      %v5123 = vpack.c.b16 %v4780, %v4773
      %v5124 = vpack.c.b16 %v4781, %v4774
      %v5125 = vpack.c.b16 %v4782, %v4775
      %v5126 = vpack.c.b16 %v4783, %v4776
      %v5127 = vpack.c.b16 %v4784, %v4777
      %v5128 = vpack.c.b16 %v4792, %v4785
      %v5129 = vpack.c.b16 %v4793, %v4786
      %v5130 = vpack.c.b16 %v4794, %v4787
      %v5131 = vpack.c.b16 %v4795, %v4788
      %v5132 = vpack.c.b16 %v4796, %v4789
      %v5133 = vpack.c.b16 %v4797, %v4790
      %v5134 = vpack.c.b16 %v4798, %v4791
      %v5135 = vpack.c.b16 %v4806, %v4799
      %v5136 = vpack.c.b16 %v4807, %v4800
      %v5137 = vpack.c.b16 %v4808, %v4801
      %v5138 = vpack.c.b16 %v4809, %v4802
      %v5139 = vpack.c.b16 %v4810, %v4803
      %v5140 = vpack.c.b16 %v4811, %v4804
      %v5141 = vpack.c.b16 %v4812, %v4805
      %v5142 = vpack.c.b16 %v4820, %v4813
      %v5143 = vpack.c.b16 %v4821, %v4814
      %v5144 = vpack.c.b16 %v4822, %v4815
      %v5145 = vpack.c.b16 %v4823, %v4816
      %v5146 = vpack.c.b16 %v4824, %v4817
      %v5147 = vpack.c.b16 %v4825, %v4818
      %v5148 = vpack.c.b16 %v4826, %v4819
      %v5149 = vpack.c.b16 %v4834, %v4827
      %v5150 = vpack.c.b16 %v4835, %v4828
      %v5151 = vpack.c.b16 %v4836, %v4829
      %v5152 = vpack.c.b16 %v4837, %v4830
      %v5153 = vpack.c.b16 %v4838, %v4831
      %v5154 = vpack.c.b16 %v4839, %v4832
      %v5155 = vpack.c.b16 %v4840, %v4833
      %v5156 = vpack.c.b16 %v4848, %v4841
      %v5157 = vpack.c.b16 %v4849, %v4842
      %v5158 = vpack.c.b16 %v4850, %v4843
      %v5159 = vpack.c.b16 %v4851, %v4844
      %v5160 = vpack.c.b16 %v4852, %v4845
      %v5161 = vpack.c.b16 %v4853, %v4846
      %v5162 = vpack.c.b16 %v4854, %v4847
      %v5163 = vpack.c.b16 %v4862, %v4855
      %v5164 = vpack.c.b16 %v4863, %v4856
      %v5165 = vpack.c.b16 %v4864, %v4857
      %v5166 = vpack.c.b16 %v4865, %v4858
      %v5167 = vpack.c.b16 %v4866, %v4859
      %v5168 = vpack.c.b16 %v4867, %v4860
      %v5169 = vpack.c.b16 %v4868, %v4861
      %v5170 = vpack.c.b16 %v4876, %v4869
      %v5171 = vpack.c.b16 %v4877, %v4870
      %v5172 = vpack.c.b16 %v4878, %v4871
      %v5173 = vpack.c.b16 %v4879, %v4872
      %v5174 = vpack.c.b16 %v4880, %v4873
      %v5175 = vpack.c.b16 %v4881, %v4874
      %v5176 = vpack.c.b16 %v4882, %v4875
      %v5177 = vpack.c.b16 %v4890, %v4883
      %v5178 = vpack.c.b16 %v4891, %v4884
      %v5179 = vpack.c.b16 %v4892, %v4885
      %v5180 = vpack.c.b16 %v4893, %v4886
      %v5181 = vpack.c.b16 %v4894, %v4887
      %v5182 = vpack.c.b16 %v4895, %v4888
      %v5183 = vpack.c.b16 %v4896, %v4889
      %v5184 = vpack.c.b16 %v4904, %v4897
      %v5185 = vpack.c.b16 %v4905, %v4898
      %v5186 = vpack.c.b16 %v4906, %v4899
      %v5187 = vpack.c.b16 %v4907, %v4900
      %v5188 = vpack.c.b16 %v4908, %v4901
      %v5189 = vpack.c.b16 %v4909, %v4902
      %v5190 = vpack.c.b16 %v4910, %v4903
      %v5191 = vpack.c.b16 %v4918, %v4911
      %v5192 = vpack.c.b16 %v4919, %v4912
      %v5193 = vpack.c.b16 %v4920, %v4913
      %v5194 = vpack.c.b16 %v4921, %v4914
      %v5195 = vpack.c.b16 %v4922, %v4915
      %v5196 = vpack.c.b16 %v4923, %v4916
      %v5197 = vpack.c.b16 %v4924, %v4917
      %v5198 = vpack.c.b16 %v4932, %v4925
      %v5199 = vpack.c.b16 %v4933, %v4926
      %v5200 = vpack.c.b16 %v4934, %v4927
      %v5201 = vpack.c.b16 %v4935, %v4928
      %v5202 = vpack.c.b16 %v4936, %v4929
      %v5203 = vpack.c.b16 %v4937, %v4930
      %v5204 = vpack.c.b16 %v4938, %v4931
      %v5205 = vpack.c.b16 %v4946, %v4939
      %v5206 = vpack.c.b16 %v4947, %v4940
      %v5207 = vpack.c.b16 %v4948, %v4941
      %v5208 = vpack.c.b16 %v4949, %v4942
      %v5209 = vpack.c.b16 %v4950, %v4943
      %v5210 = vpack.c.b16 %v4951, %v4944
      %v5211 = vpack.c.b16 %v4952, %v4945
      %v5212 = vpack.c.b16 %v4960, %v4953
      %v5213 = vpack.c.b16 %v4961, %v4954
      %v5214 = vpack.c.b16 %v4962, %v4955
      %v5215 = vpack.c.b16 %v4963, %v4956
      %v5216 = vpack.c.b16 %v4964, %v4957
      %v5217 = vpack.c.b16 %v4965, %v4958
      %v5218 = vpack.c.b16 %v4966, %v4959
      %v5219 = vpack.c.b16 %v4974, %v4967
      %v5220 = vpack.c.b16 %v4975, %v4968
      %v5221 = vpack.c.b16 %v4976, %v4969
      %v5222 = vpack.c.b16 %v4977, %v4970
      %v5223 = vpack.c.b16 %v4978, %v4971
      %v5224 = vpack.c.b16 %v4979, %v4972
      %v5225 = vpack.c.b16 %v4980, %v4973
      %v5226 = vpack.c.b16 %v4988, %v4981
      %v5227 = vpack.c.b16 %v4989, %v4982
      %v5228 = vpack.c.b16 %v4990, %v4983
      %v5229 = vpack.c.b16 %v4991, %v4984
      %v5230 = vpack.c.b16 %v4992, %v4985
      %v5231 = vpack.c.b16 %v4993, %v4986
      %v5232 = vpack.c.b16 %v4994, %v4987
      %v5233 = vpack.c.b16 %v5002, %v4995
      %v5234 = vpack.c.b16 %v5003, %v4996
      %v5235 = vpack.c.b16 %v5004, %v4997
      %v5236 = vpack.c.b16 %v5005, %v4998
      %v5237 = vpack.c.b16 %v5006, %v4999
      %v5238 = vpack.c.b16 %v5007, %v5000
      %v5239 = vpack.c.b16 %v5008, %v5001
      %v5240 = vpack.c.b16 %v5016, %v5009
      %v5241 = vpack.c.b16 %v5017, %v5010
      %v5242 = vpack.c.b16 %v5018, %v5011
      %v5243 = vpack.c.b16 %v5019, %v5012
      %v5244 = vpack.c.b16 %v5020, %v5013
      %v5245 = vpack.c.b16 %v5021, %v5014
      %v5246 = vpack.c.b16 %v5022, %v5015
      %v5247 = vpack.c.b16 %v5030, %v5023
      %v5248 = vpack.c.b16 %v5031, %v5024
      %v5249 = vpack.c.b16 %v5032, %v5025
      %v5250 = vpack.c.b16 %v5033, %v5026
      %v5251 = vpack.c.b16 %v5034, %v5027
      %v5252 = vpack.c.b16 %v5035, %v5028
      %v5253 = vpack.c.b16 %v5036, %v5029
      %v5254 = vpack.c.b16 %v5044, %v5037
      %v5255 = vpack.c.b16 %v5045, %v5038
      %v5256 = vpack.c.b16 %v5046, %v5039
      %v5257 = vpack.c.b16 %v5047, %v5040
      %v5258 = vpack.c.b16 %v5048, %v5041
      %v5259 = vpack.c.b16 %v5049, %v5042
      %v5260 = vpack.c.b16 %v5050, %v5043
      %v5261 = vpack.c.b16 %v5058, %v5051
      %v5262 = vpack.c.b16 %v5059, %v5052
      %v5263 = vpack.c.b16 %v5060, %v5053
      %v5264 = vpack.c.b16 %v5061, %v5054
      %v5265 = vpack.c.b16 %v5062, %v5055
      %v5266 = vpack.c.b16 %v5063, %v5056
      %v5267 = vpack.c.b16 %v5064, %v5057
      %v5268 = vpack.c.b16 %v5072, %v5065
      %v5269 = vpack.c.b16 %v5073, %v5066
      %v5270 = vpack.c.b16 %v5074, %v5067
      %v5271 = vpack.c.b16 %v5075, %v5068
      %v5272 = vpack.c.b16 %v5076, %v5069
      %v5273 = vpack.c.b16 %v5077, %v5070
      %v5274 = vpack.c.b16 %v5078, %v5071
      %v5275 = vpack.c.b16 %v5086, %v5079
      %v5276 = vpack.c.b16 %v5087, %v5080
      %v5277 = vpack.c.b16 %v5088, %v5081
      %v5278 = vpack.c.b16 %v5089, %v5082
      %v5279 = vpack.c.b16 %v5090, %v5083
      %v5280 = vpack.c.b16 %v5091, %v5084
      %v5281 = vpack.c.b16 %v5092, %v5085
      %v5282 = vpack.c.b16 %v5100, %v5093
      %v5283 = vpack.c.b16 %v5101, %v5094
      %v5284 = vpack.c.b16 %v5102, %v5095
      %v5285 = vpack.c.b16 %v5103, %v5096
      %v5286 = vpack.c.b16 %v5104, %v5097
      %v5287 = vpack.c.b16 %v5105, %v5098
      %v5288 = vpack.c.b16 %v5106, %v5099
      %v5289 = vpack.c.b16 %v5114, %v5107
      %v5290 = vpack.c.b16 %v5115, %v5108
      %v5291 = vpack.c.b16 %v5116, %v5109
      %v5292 = vpack.c.b16 %v5117, %v5110
      %v5293 = vpack.c.b16 %v5118, %v5111
      %v5294 = vpack.c.b16 %v5119, %v5112
      %v5295 = vpack.c.b16 %v5120, %v5113
      %v5472 = vsel %vm3395, %v4305, 0
      %v5475 = vsel %vm3395, %v4309, 0
      %v5478 = vsel %vm3395, %v4313, 0
      %v5481 = vsel %vm3395, %v4317, 0
      %v5484 = vsel %vm3395, %v4321, 0
      %v5487 = vsel %vm3395, %v4325, 0
      %v5490 = vsel %vm3395, %v4329, 0
      %v5493 = vsel %vm3395, %v4333, 0
      %5495 = vmatprep.subr.bf16.mxu0 %v5171
      %5496 = vmatpush1.bf16.msra.mxu0 %v5170
      %5497 = vmatprep.subr.bf16.mxu0 %v5164
      %5498 = vmatpush1.bf16.msra.mxu0 %v5163
      %5499 = vmatprep.subr.bf16.mxu0 %v5157
      %5500 = vmatpush1.bf16.msra.mxu0 %v5156
      %5501 = vmatprep.subr.bf16.mxu0 %v5150
      %5502 = vmatpush1.bf16.msra.mxu0 %v5149
      %5503 = vmatprep.subr.bf16.mxu0 %v5143
      %5504 = vmatpush1.bf16.msra.mxu0 %v5142
      %5505 = vmatprep.subr.bf16.mxu0 %v5136
      %5506 = vmatpush1.bf16.msra.mxu0 %v5135
      %5507 = vmatprep.subr.bf16.mxu0 %v5129
      %5508 = vmatpush1.bf16.msra.mxu0 %v5128
      %5509 = vmatprep.subr.bf16.mxu0 %v5122
      %5510 = vmatpush1.bf16.msra.mxu0 %v5121
      %5511 = vmatprep.subr.bf16.mxu0 %v5227
      %5512 = vmatpush2.bf16.msra.mxu0 %v5226
      %5513 = vmatprep.subr.bf16.mxu0 %v5220
      %5514 = vmatpush2.bf16.msra.mxu0 %v5219
      %5515 = vmatprep.subr.bf16.mxu0 %v5213
      %5516 = vmatpush2.bf16.msra.mxu0 %v5212
      %5517 = vmatprep.subr.bf16.mxu0 %v5206
      %5518 = vmatpush2.bf16.msra.mxu0 %v5205
      %5519 = vmatprep.subr.bf16.mxu0 %v5199
      %5520 = vmatpush2.bf16.msra.mxu0 %v5198
      %5521 = vmatprep.subr.bf16.mxu0 %v5192
      %5522 = vmatpush2.bf16.msra.mxu0 %v5191
      %5523 = vmatprep.subr.bf16.mxu0 %v5185
      %5524 = vmatpush2.bf16.msra.mxu0 %v5184
      %5525 = vmatprep.subr.bf16.mxu0 %v5178
      %5526 = vmatpush2.bf16.msra.mxu0 %v5177
      %5527 = vmatprep.mubr.bf16.mxu0 %v4303
      %5528 = vmatmul.mubr.bf16.gmra.mxu0 %v4302
      %v5529 = vpop.f32.mrf.mxu0
      %v5530 = vadd.f32 %v4539, %v5529
      %v5531 = vpop.f32.mrf.mxu0
      %v5532 = vadd.f32 %v4543, %v5531
      %v5533 = vpop.f32.mrf.mxu0
      %v5534 = vadd.f32 %v4539, %v5533
      %v5535 = vpop.f32.mrf.mxu0
      %v5536 = vadd.f32 %v4543, %v5535
      %5537 = vmatprep.mubr.bf16.mxu0 %v4307
      %5538 = vmatmul.mubr.bf16.gmra.mxu0 %v4306
      %v5539 = vpop.f32.mrf.mxu0
      %v5540 = vadd.f32 %v4539, %v5539
      %v5541 = vpop.f32.mrf.mxu0
      %v5542 = vadd.f32 %v4543, %v5541
      %v5543 = vpop.f32.mrf.mxu0
      %v5544 = vadd.f32 %v4539, %v5543
      %v5545 = vpop.f32.mrf.mxu0
      %v5546 = vadd.f32 %v4543, %v5545
      %5547 = vmatprep.mubr.bf16.mxu0 %v4311
      %5548 = vmatmul.mubr.bf16.gmra.mxu0 %v4310
      %v5549 = vpop.f32.mrf.mxu0
      %v5550 = vadd.f32 %v4539, %v5549
      %v5551 = vpop.f32.mrf.mxu0
      %v5552 = vadd.f32 %v4543, %v5551
      %v5553 = vpop.f32.mrf.mxu0
      %v5554 = vadd.f32 %v4539, %v5553
      %v5555 = vpop.f32.mrf.mxu0
      %v5556 = vadd.f32 %v4543, %v5555
      %5557 = vmatprep.mubr.bf16.mxu0 %v4315
      %5558 = vmatmul.mubr.bf16.gmra.mxu0 %v4314
      %v5559 = vpop.f32.mrf.mxu0
      %v5560 = vadd.f32 %v4539, %v5559
      %v5561 = vpop.f32.mrf.mxu0
      %v5562 = vadd.f32 %v4543, %v5561
      %v5563 = vpop.f32.mrf.mxu0
      %v5564 = vadd.f32 %v4539, %v5563
      %v5565 = vpop.f32.mrf.mxu0
      %v5566 = vadd.f32 %v4543, %v5565
      %5567 = vmatprep.mubr.bf16.mxu0 %v4319
      %5568 = vmatmul.mubr.bf16.gmra.mxu0 %v4318
      %v5569 = vpop.f32.mrf.mxu0
      %v5570 = vadd.f32 %v4539, %v5569
      %v5571 = vpop.f32.mrf.mxu0
      %v5572 = vadd.f32 %v4543, %v5571
      %v5573 = vpop.f32.mrf.mxu0
      %v5574 = vadd.f32 %v4539, %v5573
      %v5575 = vpop.f32.mrf.mxu0
      %v5576 = vadd.f32 %v4543, %v5575
      %5577 = vmatprep.mubr.bf16.mxu0 %v4323
      %5578 = vmatmul.mubr.bf16.gmra.mxu0 %v4322
      %v5579 = vpop.f32.mrf.mxu0
      %v5580 = vadd.f32 %v4539, %v5579
      %v5581 = vpop.f32.mrf.mxu0
      %v5582 = vadd.f32 %v4543, %v5581
      %v5583 = vpop.f32.mrf.mxu0
      %v5584 = vadd.f32 %v4539, %v5583
      %v5585 = vpop.f32.mrf.mxu0
      %v5586 = vadd.f32 %v4543, %v5585
      %5587 = vmatprep.mubr.bf16.mxu0 %v4327
      %5588 = vmatmul.mubr.bf16.gmra.mxu0 %v4326
      %v5589 = vpop.f32.mrf.mxu0
      %v5590 = vadd.f32 %v4539, %v5589
      %v5591 = vpop.f32.mrf.mxu0
      %v5592 = vadd.f32 %v4543, %v5591
      %v5593 = vpop.f32.mrf.mxu0
      %v5594 = vadd.f32 %v4539, %v5593
      %v5595 = vpop.f32.mrf.mxu0
      %v5596 = vadd.f32 %v4543, %v5595
      %5597 = vmatprep.mubr.bf16.mxu0 %v4331
      %5598 = vmatmul.mubr.bf16.gmra.mxu0 %v4330
      %v5599 = vpop.f32.mrf.mxu0
      %v5600 = vadd.f32 %v4539, %v5599
      %v5601 = vpop.f32.mrf.mxu0
      %v5602 = vadd.f32 %v4543, %v5601
      %v5603 = vpop.f32.mrf.mxu0
      %v5604 = vadd.f32 %v4539, %v5603
      %v5605 = vpop.f32.mrf.mxu0
      %v5606 = vadd.f32 %v4543, %v5605
      %5607 = vdwg.mxu0
      %5608 = vmatprep.subr.bf16.mxu0 %v5283
      %5609 = vmatpush1.bf16.msra.mxu0 %v5282
      %5610 = vmatprep.subr.bf16.mxu0 %v5276
      %5611 = vmatpush1.bf16.msra.mxu0 %v5275
      %5612 = vmatprep.subr.bf16.mxu0 %v5269
      %5613 = vmatpush1.bf16.msra.mxu0 %v5268
      %5614 = vmatprep.subr.bf16.mxu0 %v5262
      %5615 = vmatpush1.bf16.msra.mxu0 %v5261
      %5616 = vmatprep.subr.bf16.mxu0 %v5255
      %5617 = vmatpush1.bf16.msra.mxu0 %v5254
      %5618 = vmatprep.subr.bf16.mxu0 %v5248
      %5619 = vmatpush1.bf16.msra.mxu0 %v5247
      %5620 = vmatprep.subr.bf16.mxu0 %v5241
      %5621 = vmatpush1.bf16.msra.mxu0 %v5240
      %5622 = vmatprep.subr.bf16.mxu0 %v5234
      %5623 = vmatpush1.bf16.msra.mxu0 %v5233
      %5624 = vmatprep.subr.bf16.mxu0 0
      %5625 = vmatpush2.bf16.msra.mxu0 0
      %5626 = vmatprep.subr.bf16.mxu0 0
      %5627 = vmatpush2.bf16.msra.mxu0 0
      %5628 = vmatprep.subr.bf16.mxu0 0
      %5629 = vmatpush2.bf16.msra.mxu0 0
      %5630 = vmatprep.subr.bf16.mxu0 0
      %5631 = vmatpush2.bf16.msra.mxu0 0
      %5632 = vmatprep.subr.bf16.mxu0 0
      %5633 = vmatpush2.bf16.msra.mxu0 0
      %5634 = vmatprep.subr.bf16.mxu0 0
      %5635 = vmatpush2.bf16.msra.mxu0 0
      %5636 = vmatprep.subr.bf16.mxu0 0
      %5637 = vmatpush2.bf16.msra.mxu0 0
      %5638 = vmatprep.subr.bf16.mxu0 %v5290
      %5639 = vmatpush2.bf16.msra.mxu0 %v5289
      %5640 = vmatprep.mubr.bf16.mxu0 %v5472
      %5641 = vmatmul.mubr.bf16.gmra.mxu0 %v4304
      %v5642 = vpop.f32.mrf.mxu0
      %v5643 = vadd.f32 %v5530, %v5642
      %v5644 = vpop.f32.mrf.mxu0
      %v5645 = vadd.f32 %v5532, %v5644
      %v5646 = vpop.f32.mrf.mxu0
      %v5647 = vadd.f32 %v5534, %v5646
      %v5648 = vpop.f32.mrf.mxu0
      %v5649 = vadd.f32 %v5536, %v5648
      %5650 = vmatprep.mubr.bf16.mxu0 %v5475
      %5651 = vmatmul.mubr.bf16.gmra.mxu0 %v4308
      %v5652 = vpop.f32.mrf.mxu0
      %v5653 = vadd.f32 %v5540, %v5652
      %v5654 = vpop.f32.mrf.mxu0
      %v5655 = vadd.f32 %v5542, %v5654
      %v5656 = vpop.f32.mrf.mxu0
      %v5657 = vadd.f32 %v5544, %v5656
      %v5658 = vpop.f32.mrf.mxu0
      %v5659 = vadd.f32 %v5546, %v5658
      %5660 = vmatprep.mubr.bf16.mxu0 %v5478
      %5661 = vmatmul.mubr.bf16.gmra.mxu0 %v4312
      %v5662 = vpop.f32.mrf.mxu0
      %v5663 = vadd.f32 %v5550, %v5662
      %v5664 = vpop.f32.mrf.mxu0
      %v5665 = vadd.f32 %v5552, %v5664
      %v5666 = vpop.f32.mrf.mxu0
      %v5667 = vadd.f32 %v5554, %v5666
      %v5668 = vpop.f32.mrf.mxu0
      %v5669 = vadd.f32 %v5556, %v5668
      %5670 = vmatprep.mubr.bf16.mxu0 %v5481
      %5671 = vmatmul.mubr.bf16.gmra.mxu0 %v4316
      %v5672 = vpop.f32.mrf.mxu0
      %v5673 = vadd.f32 %v5560, %v5672
      %v5674 = vpop.f32.mrf.mxu0
      %v5675 = vadd.f32 %v5562, %v5674
      %v5676 = vpop.f32.mrf.mxu0
      %v5677 = vadd.f32 %v5564, %v5676
      %v5678 = vpop.f32.mrf.mxu0
      %v5679 = vadd.f32 %v5566, %v5678
      %5680 = vmatprep.mubr.bf16.mxu0 %v5484
      %5681 = vmatmul.mubr.bf16.gmra.mxu0 %v4320
      %v5682 = vpop.f32.mrf.mxu0
      %v5683 = vadd.f32 %v5570, %v5682
      %v5684 = vpop.f32.mrf.mxu0
      %v5685 = vadd.f32 %v5572, %v5684
      %v5686 = vpop.f32.mrf.mxu0
      %v5687 = vadd.f32 %v5574, %v5686
      %v5688 = vpop.f32.mrf.mxu0
      %v5689 = vadd.f32 %v5576, %v5688
      %5690 = vmatprep.mubr.bf16.mxu0 %v5487
      %5691 = vmatmul.mubr.bf16.gmra.mxu0 %v4324
      %v5692 = vpop.f32.mrf.mxu0
      %v5693 = vadd.f32 %v5580, %v5692
      %v5694 = vpop.f32.mrf.mxu0
      %v5695 = vadd.f32 %v5582, %v5694
      %v5696 = vpop.f32.mrf.mxu0
      %v5697 = vadd.f32 %v5584, %v5696
      %v5698 = vpop.f32.mrf.mxu0
      %v5699 = vadd.f32 %v5586, %v5698
      %5700 = vmatprep.mubr.bf16.mxu0 %v5490
      %5701 = vmatmul.mubr.bf16.gmra.mxu0 %v4328
      %v5702 = vpop.f32.mrf.mxu0
      %v5703 = vadd.f32 %v5590, %v5702
      %v5704 = vpop.f32.mrf.mxu0
      %v5705 = vadd.f32 %v5592, %v5704
      %v5706 = vpop.f32.mrf.mxu0
      %v5707 = vadd.f32 %v5594, %v5706
      %v5708 = vpop.f32.mrf.mxu0
      %v5709 = vadd.f32 %v5596, %v5708
      %5710 = vmatprep.mubr.bf16.mxu0 %v5493
      %5711 = vmatmul.mubr.bf16.gmra.mxu0 %v4332
      %v5712 = vpop.f32.mrf.mxu0
      %v5713 = vadd.f32 %v5600, %v5712
      %v5714 = vpop.f32.mrf.mxu0
      %v5715 = vadd.f32 %v5602, %v5714
      %v5716 = vpop.f32.mrf.mxu0
      %v5717 = vadd.f32 %v5604, %v5716
      %v5718 = vpop.f32.mrf.mxu0
      %v5719 = vadd.f32 %v5606, %v5718
      %5720 = vdwg.mxu0
      %5721 = vmatprep.subr.bf16.mxu0 %v5173
      %5722 = vmatpush1.bf16.msra.mxu0 %v5172
      %5723 = vmatprep.subr.bf16.mxu0 %v5166
      %5724 = vmatpush1.bf16.msra.mxu0 %v5165
      %5725 = vmatprep.subr.bf16.mxu0 %v5159
      %5726 = vmatpush1.bf16.msra.mxu0 %v5158
      %5727 = vmatprep.subr.bf16.mxu0 %v5152
      %5728 = vmatpush1.bf16.msra.mxu0 %v5151
      %5729 = vmatprep.subr.bf16.mxu0 %v5145
      %5730 = vmatpush1.bf16.msra.mxu0 %v5144
      %5731 = vmatprep.subr.bf16.mxu0 %v5138
      %5732 = vmatpush1.bf16.msra.mxu0 %v5137
      %5733 = vmatprep.subr.bf16.mxu0 %v5131
      %5734 = vmatpush1.bf16.msra.mxu0 %v5130
      %5735 = vmatprep.subr.bf16.mxu0 %v5124
      %5736 = vmatpush1.bf16.msra.mxu0 %v5123
      %5737 = vmatprep.subr.bf16.mxu0 %v5229
      %5738 = vmatpush2.bf16.msra.mxu0 %v5228
      %5739 = vmatprep.subr.bf16.mxu0 %v5222
      %5740 = vmatpush2.bf16.msra.mxu0 %v5221
      %5741 = vmatprep.subr.bf16.mxu0 %v5215
      %5742 = vmatpush2.bf16.msra.mxu0 %v5214
      %5743 = vmatprep.subr.bf16.mxu0 %v5208
      %5744 = vmatpush2.bf16.msra.mxu0 %v5207
      %5745 = vmatprep.subr.bf16.mxu0 %v5201
      %5746 = vmatpush2.bf16.msra.mxu0 %v5200
      %5747 = vmatprep.subr.bf16.mxu0 %v5194
      %5748 = vmatpush2.bf16.msra.mxu0 %v5193
      %5749 = vmatprep.subr.bf16.mxu0 %v5187
      %5750 = vmatpush2.bf16.msra.mxu0 %v5186
      %5751 = vmatprep.subr.bf16.mxu0 %v5180
      %5752 = vmatpush2.bf16.msra.mxu0 %v5179
      %5753 = vmatprep.mubr.bf16.mxu0 %v4303
      %5754 = vmatmul.mubr.bf16.gmra.mxu0 %v4302
      %v5755 = vpop.f32.mrf.mxu0
      %v5756 = vadd.f32 %v4547, %v5755
      %v5757 = vpop.f32.mrf.mxu0
      %v5758 = vadd.f32 %v4551, %v5757
      %v5759 = vpop.f32.mrf.mxu0
      %v5760 = vadd.f32 %v4547, %v5759
      %v5761 = vpop.f32.mrf.mxu0
      %v5762 = vadd.f32 %v4551, %v5761
      %5763 = vmatprep.mubr.bf16.mxu0 %v4307
      %5764 = vmatmul.mubr.bf16.gmra.mxu0 %v4306
      %v5765 = vpop.f32.mrf.mxu0
      %v5766 = vadd.f32 %v4547, %v5765
      %v5767 = vpop.f32.mrf.mxu0
      %v5768 = vadd.f32 %v4551, %v5767
      %v5769 = vpop.f32.mrf.mxu0
      %v5770 = vadd.f32 %v4547, %v5769
      %v5771 = vpop.f32.mrf.mxu0
      %v5772 = vadd.f32 %v4551, %v5771
      %5773 = vmatprep.mubr.bf16.mxu0 %v4311
      %5774 = vmatmul.mubr.bf16.gmra.mxu0 %v4310
      %v5775 = vpop.f32.mrf.mxu0
      %v5776 = vadd.f32 %v4547, %v5775
      %v5777 = vpop.f32.mrf.mxu0
      %v5778 = vadd.f32 %v4551, %v5777
      %v5779 = vpop.f32.mrf.mxu0
      %v5780 = vadd.f32 %v4547, %v5779
      %v5781 = vpop.f32.mrf.mxu0
      %v5782 = vadd.f32 %v4551, %v5781
      %5783 = vmatprep.mubr.bf16.mxu0 %v4315
      %5784 = vmatmul.mubr.bf16.gmra.mxu0 %v4314
      %v5785 = vpop.f32.mrf.mxu0
      %v5786 = vadd.f32 %v4547, %v5785
      %v5787 = vpop.f32.mrf.mxu0
      %v5788 = vadd.f32 %v4551, %v5787
      %v5789 = vpop.f32.mrf.mxu0
      %v5790 = vadd.f32 %v4547, %v5789
      %v5791 = vpop.f32.mrf.mxu0
      %v5792 = vadd.f32 %v4551, %v5791
      %5793 = vmatprep.mubr.bf16.mxu0 %v4319
      %5794 = vmatmul.mubr.bf16.gmra.mxu0 %v4318
      %v5795 = vpop.f32.mrf.mxu0
      %v5796 = vadd.f32 %v4547, %v5795
      %v5797 = vpop.f32.mrf.mxu0
      %v5798 = vadd.f32 %v4551, %v5797
      %v5799 = vpop.f32.mrf.mxu0
      %v5800 = vadd.f32 %v4547, %v5799
      %v5801 = vpop.f32.mrf.mxu0
      %v5802 = vadd.f32 %v4551, %v5801
      %5803 = vmatprep.mubr.bf16.mxu0 %v4323
      %5804 = vmatmul.mubr.bf16.gmra.mxu0 %v4322
      %v5805 = vpop.f32.mrf.mxu0
      %v5806 = vadd.f32 %v4547, %v5805
      %v5807 = vpop.f32.mrf.mxu0
      %v5808 = vadd.f32 %v4551, %v5807
      %v5809 = vpop.f32.mrf.mxu0
      %v5810 = vadd.f32 %v4547, %v5809
      %v5811 = vpop.f32.mrf.mxu0
      %v5812 = vadd.f32 %v4551, %v5811
      %5813 = vmatprep.mubr.bf16.mxu0 %v4327
      %5814 = vmatmul.mubr.bf16.gmra.mxu0 %v4326
      %v5815 = vpop.f32.mrf.mxu0
      %v5816 = vadd.f32 %v4547, %v5815
      %v5817 = vpop.f32.mrf.mxu0
      %v5818 = vadd.f32 %v4551, %v5817
      %v5819 = vpop.f32.mrf.mxu0
      %v5820 = vadd.f32 %v4547, %v5819
      %v5821 = vpop.f32.mrf.mxu0
      %v5822 = vadd.f32 %v4551, %v5821
      %5823 = vmatprep.mubr.bf16.mxu0 %v4331
      %5824 = vmatmul.mubr.bf16.gmra.mxu0 %v4330
      %v5825 = vpop.f32.mrf.mxu0
      %v5826 = vadd.f32 %v4547, %v5825
      %v5827 = vpop.f32.mrf.mxu0
      %v5828 = vadd.f32 %v4551, %v5827
      %v5829 = vpop.f32.mrf.mxu0
      %v5830 = vadd.f32 %v4547, %v5829
      %v5831 = vpop.f32.mrf.mxu0
      %v5832 = vadd.f32 %v4551, %v5831
      %5833 = vdwg.mxu0
      %5834 = vmatprep.subr.bf16.mxu0 %v5285
      %5835 = vmatpush1.bf16.msra.mxu0 %v5284
      %5836 = vmatprep.subr.bf16.mxu0 %v5278
      %5837 = vmatpush1.bf16.msra.mxu0 %v5277
      %5838 = vmatprep.subr.bf16.mxu0 %v5271
      %5839 = vmatpush1.bf16.msra.mxu0 %v5270
      %5840 = vmatprep.subr.bf16.mxu0 %v5264
      %5841 = vmatpush1.bf16.msra.mxu0 %v5263
      %5842 = vmatprep.subr.bf16.mxu0 %v5257
      %5843 = vmatpush1.bf16.msra.mxu0 %v5256
      %5844 = vmatprep.subr.bf16.mxu0 %v5250
      %5845 = vmatpush1.bf16.msra.mxu0 %v5249
      %5846 = vmatprep.subr.bf16.mxu0 %v5243
      %5847 = vmatpush1.bf16.msra.mxu0 %v5242
      %5848 = vmatprep.subr.bf16.mxu0 %v5236
      %5849 = vmatpush1.bf16.msra.mxu0 %v5235
      %5850 = vmatprep.subr.bf16.mxu0 0
      %5851 = vmatpush2.bf16.msra.mxu0 0
      %5852 = vmatprep.subr.bf16.mxu0 0
      %5853 = vmatpush2.bf16.msra.mxu0 0
      %5854 = vmatprep.subr.bf16.mxu0 0
      %5855 = vmatpush2.bf16.msra.mxu0 0
      %5856 = vmatprep.subr.bf16.mxu0 0
      %5857 = vmatpush2.bf16.msra.mxu0 0
      %5858 = vmatprep.subr.bf16.mxu0 0
      %5859 = vmatpush2.bf16.msra.mxu0 0
      %5860 = vmatprep.subr.bf16.mxu0 0
      %5861 = vmatpush2.bf16.msra.mxu0 0
      %5862 = vmatprep.subr.bf16.mxu0 0
      %5863 = vmatpush2.bf16.msra.mxu0 0
      %5864 = vmatprep.subr.bf16.mxu0 %v5292
      %5865 = vmatpush2.bf16.msra.mxu0 %v5291
      %5866 = vmatprep.mubr.bf16.mxu0 %v5472
      %5867 = vmatmul.mubr.bf16.gmra.mxu0 %v4304
      %v5868 = vpop.f32.mrf.mxu0
      %v5869 = vadd.f32 %v5756, %v5868
      %v5870 = vpop.f32.mrf.mxu0
      %v5871 = vadd.f32 %v5758, %v5870
      %v5872 = vpop.f32.mrf.mxu0
      %v5873 = vadd.f32 %v5760, %v5872
      %v5874 = vpop.f32.mrf.mxu0
      %v5875 = vadd.f32 %v5762, %v5874
      %5876 = vmatprep.mubr.bf16.mxu0 %v5475
      %5877 = vmatmul.mubr.bf16.gmra.mxu0 %v4308
      %v5878 = vpop.f32.mrf.mxu0
      %v5879 = vadd.f32 %v5766, %v5878
      %v5880 = vpop.f32.mrf.mxu0
      %v5881 = vadd.f32 %v5768, %v5880
      %v5882 = vpop.f32.mrf.mxu0
      %v5883 = vadd.f32 %v5770, %v5882
      %v5884 = vpop.f32.mrf.mxu0
      %v5885 = vadd.f32 %v5772, %v5884
      %5886 = vmatprep.mubr.bf16.mxu0 %v5478
      %5887 = vmatmul.mubr.bf16.gmra.mxu0 %v4312
      %v5888 = vpop.f32.mrf.mxu0
      %v5889 = vadd.f32 %v5776, %v5888
      %v5890 = vpop.f32.mrf.mxu0
      %v5891 = vadd.f32 %v5778, %v5890
      %v5892 = vpop.f32.mrf.mxu0
      %v5893 = vadd.f32 %v5780, %v5892
      %v5894 = vpop.f32.mrf.mxu0
      %v5895 = vadd.f32 %v5782, %v5894
      %5896 = vmatprep.mubr.bf16.mxu0 %v5481
      %5897 = vmatmul.mubr.bf16.gmra.mxu0 %v4316
      %v5898 = vpop.f32.mrf.mxu0
      %v5899 = vadd.f32 %v5786, %v5898
      %v5900 = vpop.f32.mrf.mxu0
      %v5901 = vadd.f32 %v5788, %v5900
      %v5902 = vpop.f32.mrf.mxu0
      %v5903 = vadd.f32 %v5790, %v5902
      %v5904 = vpop.f32.mrf.mxu0
      %v5905 = vadd.f32 %v5792, %v5904
      %5906 = vmatprep.mubr.bf16.mxu0 %v5484
      %5907 = vmatmul.mubr.bf16.gmra.mxu0 %v4320
      %v5908 = vpop.f32.mrf.mxu0
      %v5909 = vadd.f32 %v5796, %v5908
      %v5910 = vpop.f32.mrf.mxu0
      %v5911 = vadd.f32 %v5798, %v5910
      %v5912 = vpop.f32.mrf.mxu0
      %v5913 = vadd.f32 %v5800, %v5912
      %v5914 = vpop.f32.mrf.mxu0
      %v5915 = vadd.f32 %v5802, %v5914
      %5916 = vmatprep.mubr.bf16.mxu0 %v5487
      %5917 = vmatmul.mubr.bf16.gmra.mxu0 %v4324
      %v5918 = vpop.f32.mrf.mxu0
      %v5919 = vadd.f32 %v5806, %v5918
      %v5920 = vpop.f32.mrf.mxu0
      %v5921 = vadd.f32 %v5808, %v5920
      %v5922 = vpop.f32.mrf.mxu0
      %v5923 = vadd.f32 %v5810, %v5922
      %v5924 = vpop.f32.mrf.mxu0
      %v5925 = vadd.f32 %v5812, %v5924
      %5926 = vmatprep.mubr.bf16.mxu0 %v5490
      %5927 = vmatmul.mubr.bf16.gmra.mxu0 %v4328
      %v5928 = vpop.f32.mrf.mxu0
      %v5929 = vadd.f32 %v5816, %v5928
      %v5930 = vpop.f32.mrf.mxu0
      %v5931 = vadd.f32 %v5818, %v5930
      %v5932 = vpop.f32.mrf.mxu0
      %v5933 = vadd.f32 %v5820, %v5932
      %v5934 = vpop.f32.mrf.mxu0
      %v5935 = vadd.f32 %v5822, %v5934
      %5936 = vmatprep.mubr.bf16.mxu0 %v5493
      %5937 = vmatmul.mubr.bf16.gmra.mxu0 %v4332
      %v5938 = vpop.f32.mrf.mxu0
      %v5939 = vadd.f32 %v5826, %v5938
      %v5940 = vpop.f32.mrf.mxu0
      %v5941 = vadd.f32 %v5828, %v5940
      %v5942 = vpop.f32.mrf.mxu0
      %v5943 = vadd.f32 %v5830, %v5942
      %v5944 = vpop.f32.mrf.mxu0
      %v5945 = vadd.f32 %v5832, %v5944
      %5946 = vdwg.mxu0
      %5947 = vmatprep.subr.bf16.mxu0 %v5175
      %5948 = vmatpush1.bf16.msra.mxu0 %v5174
      %5949 = vmatprep.subr.bf16.mxu0 %v5168
      %5950 = vmatpush1.bf16.msra.mxu0 %v5167
      %5951 = vmatprep.subr.bf16.mxu0 %v5161
      %5952 = vmatpush1.bf16.msra.mxu0 %v5160
      %5953 = vmatprep.subr.bf16.mxu0 %v5154
      %5954 = vmatpush1.bf16.msra.mxu0 %v5153
      %5955 = vmatprep.subr.bf16.mxu0 %v5147
      %5956 = vmatpush1.bf16.msra.mxu0 %v5146
      %5957 = vmatprep.subr.bf16.mxu0 %v5140
      %5958 = vmatpush1.bf16.msra.mxu0 %v5139
      %5959 = vmatprep.subr.bf16.mxu0 %v5133
      %5960 = vmatpush1.bf16.msra.mxu0 %v5132
      %5961 = vmatprep.subr.bf16.mxu0 %v5126
      %5962 = vmatpush1.bf16.msra.mxu0 %v5125
      %5963 = vmatprep.subr.bf16.mxu0 %v5231
      %5964 = vmatpush2.bf16.msra.mxu0 %v5230
      %5965 = vmatprep.subr.bf16.mxu0 %v5224
      %5966 = vmatpush2.bf16.msra.mxu0 %v5223
      %5967 = vmatprep.subr.bf16.mxu0 %v5217
      %5968 = vmatpush2.bf16.msra.mxu0 %v5216
      %5969 = vmatprep.subr.bf16.mxu0 %v5210
      %5970 = vmatpush2.bf16.msra.mxu0 %v5209
      %5971 = vmatprep.subr.bf16.mxu0 %v5203
      %5972 = vmatpush2.bf16.msra.mxu0 %v5202
      %5973 = vmatprep.subr.bf16.mxu0 %v5196
      %5974 = vmatpush2.bf16.msra.mxu0 %v5195
      %5975 = vmatprep.subr.bf16.mxu0 %v5189
      %5976 = vmatpush2.bf16.msra.mxu0 %v5188
      %5977 = vmatprep.subr.bf16.mxu0 %v5182
      %5978 = vmatpush2.bf16.msra.mxu0 %v5181
      %5979 = vmatprep.mubr.bf16.mxu0 %v4303
      %5980 = vmatmul.mubr.bf16.gmra.mxu0 %v4302
      %v5981 = vpop.f32.mrf.mxu0
      %v5982 = vadd.f32 %v4555, %v5981
      %v5983 = vpop.f32.mrf.mxu0
      %v5984 = vadd.f32 %v4559, %v5983
      %v5985 = vpop.f32.mrf.mxu0
      %v5986 = vadd.f32 %v4555, %v5985
      %v5987 = vpop.f32.mrf.mxu0
      %v5988 = vadd.f32 %v4559, %v5987
      %5989 = vmatprep.mubr.bf16.mxu0 %v4307
      %5990 = vmatmul.mubr.bf16.gmra.mxu0 %v4306
      %v5991 = vpop.f32.mrf.mxu0
      %v5992 = vadd.f32 %v4555, %v5991
      %v5993 = vpop.f32.mrf.mxu0
      %v5994 = vadd.f32 %v4559, %v5993
      %v5995 = vpop.f32.mrf.mxu0
      %v5996 = vadd.f32 %v4555, %v5995
      %v5997 = vpop.f32.mrf.mxu0
      %v5998 = vadd.f32 %v4559, %v5997
      %5999 = vmatprep.mubr.bf16.mxu0 %v4311
      %6000 = vmatmul.mubr.bf16.gmra.mxu0 %v4310
      %v6001 = vpop.f32.mrf.mxu0
      %v6002 = vadd.f32 %v4555, %v6001
      %v6003 = vpop.f32.mrf.mxu0
      %v6004 = vadd.f32 %v4559, %v6003
      %v6005 = vpop.f32.mrf.mxu0
      %v6006 = vadd.f32 %v4555, %v6005
      %v6007 = vpop.f32.mrf.mxu0
      %v6008 = vadd.f32 %v4559, %v6007
      %6009 = vmatprep.mubr.bf16.mxu0 %v4315
      %6010 = vmatmul.mubr.bf16.gmra.mxu0 %v4314
      %v6011 = vpop.f32.mrf.mxu0
      %v6012 = vadd.f32 %v4555, %v6011
      %v6013 = vpop.f32.mrf.mxu0
      %v6014 = vadd.f32 %v4559, %v6013
      %v6015 = vpop.f32.mrf.mxu0
      %v6016 = vadd.f32 %v4555, %v6015
      %v6017 = vpop.f32.mrf.mxu0
      %v6018 = vadd.f32 %v4559, %v6017
      %6019 = vmatprep.mubr.bf16.mxu0 %v4319
      %6020 = vmatmul.mubr.bf16.gmra.mxu0 %v4318
      %v6021 = vpop.f32.mrf.mxu0
      %v6022 = vadd.f32 %v4555, %v6021
      %v6023 = vpop.f32.mrf.mxu0
      %v6024 = vadd.f32 %v4559, %v6023
      %v6025 = vpop.f32.mrf.mxu0
      %v6026 = vadd.f32 %v4555, %v6025
      %v6027 = vpop.f32.mrf.mxu0
      %v6028 = vadd.f32 %v4559, %v6027
      %6029 = vmatprep.mubr.bf16.mxu0 %v4323
      %6030 = vmatmul.mubr.bf16.gmra.mxu0 %v4322
      %v6031 = vpop.f32.mrf.mxu0
      %v6032 = vadd.f32 %v4555, %v6031
      %v6033 = vpop.f32.mrf.mxu0
      %v6034 = vadd.f32 %v4559, %v6033
      %v6035 = vpop.f32.mrf.mxu0
      %v6036 = vadd.f32 %v4555, %v6035
      %v6037 = vpop.f32.mrf.mxu0
      %v6038 = vadd.f32 %v4559, %v6037
      %6039 = vmatprep.mubr.bf16.mxu0 %v4327
      %6040 = vmatmul.mubr.bf16.gmra.mxu0 %v4326
      %v6041 = vpop.f32.mrf.mxu0
      %v6042 = vadd.f32 %v4555, %v6041
      %v6043 = vpop.f32.mrf.mxu0
      %v6044 = vadd.f32 %v4559, %v6043
      %v6045 = vpop.f32.mrf.mxu0
      %v6046 = vadd.f32 %v4555, %v6045
      %v6047 = vpop.f32.mrf.mxu0
      %v6048 = vadd.f32 %v4559, %v6047
      %6049 = vmatprep.mubr.bf16.mxu0 %v4331
      %6050 = vmatmul.mubr.bf16.gmra.mxu0 %v4330
      %v6051 = vpop.f32.mrf.mxu0
      %v6052 = vadd.f32 %v4555, %v6051
      %v6053 = vpop.f32.mrf.mxu0
      %v6054 = vadd.f32 %v4559, %v6053
      %v6055 = vpop.f32.mrf.mxu0
      %v6056 = vadd.f32 %v4555, %v6055
      %v6057 = vpop.f32.mrf.mxu0
      %v6058 = vadd.f32 %v4559, %v6057
      %6059 = vdwg.mxu0
      %6060 = vmatprep.subr.bf16.mxu0 %v5287
      %6061 = vmatpush1.bf16.msra.mxu0 %v5286
      %6062 = vmatprep.subr.bf16.mxu0 %v5280
      %6063 = vmatpush1.bf16.msra.mxu0 %v5279
      %6064 = vmatprep.subr.bf16.mxu0 %v5273
      %6065 = vmatpush1.bf16.msra.mxu0 %v5272
      %6066 = vmatprep.subr.bf16.mxu0 %v5266
      %6067 = vmatpush1.bf16.msra.mxu0 %v5265
      %6068 = vmatprep.subr.bf16.mxu0 %v5259
      %6069 = vmatpush1.bf16.msra.mxu0 %v5258
      %6070 = vmatprep.subr.bf16.mxu0 %v5252
      %6071 = vmatpush1.bf16.msra.mxu0 %v5251
      %6072 = vmatprep.subr.bf16.mxu0 %v5245
      %6073 = vmatpush1.bf16.msra.mxu0 %v5244
      %6074 = vmatprep.subr.bf16.mxu0 %v5238
      %6075 = vmatpush1.bf16.msra.mxu0 %v5237
      %6076 = vmatprep.subr.bf16.mxu0 0
      %6077 = vmatpush2.bf16.msra.mxu0 0
      %6078 = vmatprep.subr.bf16.mxu0 0
      %6079 = vmatpush2.bf16.msra.mxu0 0
      %6080 = vmatprep.subr.bf16.mxu0 0
      %6081 = vmatpush2.bf16.msra.mxu0 0
      %6082 = vmatprep.subr.bf16.mxu0 0
      %6083 = vmatpush2.bf16.msra.mxu0 0
      %6084 = vmatprep.subr.bf16.mxu0 0
      %6085 = vmatpush2.bf16.msra.mxu0 0
      %6086 = vmatprep.subr.bf16.mxu0 0
      %6087 = vmatpush2.bf16.msra.mxu0 0
      %6088 = vmatprep.subr.bf16.mxu0 0
      %6089 = vmatpush2.bf16.msra.mxu0 0
      %6090 = vmatprep.subr.bf16.mxu0 %v5294
      %6091 = vmatpush2.bf16.msra.mxu0 %v5293
      %6092 = vmatprep.mubr.bf16.mxu0 %v5472
      %6093 = vmatmul.mubr.bf16.gmra.mxu0 %v4304
      %v6094 = vpop.f32.mrf.mxu0
      %v6095 = vadd.f32 %v5982, %v6094
      %v6096 = vpop.f32.mrf.mxu0
      %v6097 = vadd.f32 %v5984, %v6096
      %v6098 = vpop.f32.mrf.mxu0
      %v6099 = vadd.f32 %v5986, %v6098
      %v6100 = vpop.f32.mrf.mxu0
      %v6101 = vadd.f32 %v5988, %v6100
      %6102 = vmatprep.mubr.bf16.mxu0 %v5475
      %6103 = vmatmul.mubr.bf16.gmra.mxu0 %v4308
      %v6104 = vpop.f32.mrf.mxu0
      %v6105 = vadd.f32 %v5992, %v6104
      %v6106 = vpop.f32.mrf.mxu0
      %v6107 = vadd.f32 %v5994, %v6106
      %v6108 = vpop.f32.mrf.mxu0
      %v6109 = vadd.f32 %v5996, %v6108
      %v6110 = vpop.f32.mrf.mxu0
      %v6111 = vadd.f32 %v5998, %v6110
      %6112 = vmatprep.mubr.bf16.mxu0 %v5478
      %6113 = vmatmul.mubr.bf16.gmra.mxu0 %v4312
      %v6114 = vpop.f32.mrf.mxu0
      %v6115 = vadd.f32 %v6002, %v6114
      %v6116 = vpop.f32.mrf.mxu0
      %v6117 = vadd.f32 %v6004, %v6116
      %v6118 = vpop.f32.mrf.mxu0
      %v6119 = vadd.f32 %v6006, %v6118
      %v6120 = vpop.f32.mrf.mxu0
      %v6121 = vadd.f32 %v6008, %v6120
      %6122 = vmatprep.mubr.bf16.mxu0 %v5481
      %6123 = vmatmul.mubr.bf16.gmra.mxu0 %v4316
      %v6124 = vpop.f32.mrf.mxu0
      %v6125 = vadd.f32 %v6012, %v6124
      %v6126 = vpop.f32.mrf.mxu0
      %v6127 = vadd.f32 %v6014, %v6126
      %v6128 = vpop.f32.mrf.mxu0
      %v6129 = vadd.f32 %v6016, %v6128
      %v6130 = vpop.f32.mrf.mxu0
      %v6131 = vadd.f32 %v6018, %v6130
      %6132 = vmatprep.mubr.bf16.mxu0 %v5484
      %6133 = vmatmul.mubr.bf16.gmra.mxu0 %v4320
      %v6134 = vpop.f32.mrf.mxu0
      %v6135 = vadd.f32 %v6022, %v6134
      %v6136 = vpop.f32.mrf.mxu0
      %v6137 = vadd.f32 %v6024, %v6136
      %v6138 = vpop.f32.mrf.mxu0
      %v6139 = vadd.f32 %v6026, %v6138
      %v6140 = vpop.f32.mrf.mxu0
      %v6141 = vadd.f32 %v6028, %v6140
      %6142 = vmatprep.mubr.bf16.mxu0 %v5487
      %6143 = vmatmul.mubr.bf16.gmra.mxu0 %v4324
      %v6144 = vpop.f32.mrf.mxu0
      %v6145 = vadd.f32 %v6032, %v6144
      %v6146 = vpop.f32.mrf.mxu0
      %v6147 = vadd.f32 %v6034, %v6146
      %v6148 = vpop.f32.mrf.mxu0
      %v6149 = vadd.f32 %v6036, %v6148
      %v6150 = vpop.f32.mrf.mxu0
      %v6151 = vadd.f32 %v6038, %v6150
      %6152 = vmatprep.mubr.bf16.mxu0 %v5490
      %6153 = vmatmul.mubr.bf16.gmra.mxu0 %v4328
      %v6154 = vpop.f32.mrf.mxu0
      %v6155 = vadd.f32 %v6042, %v6154
      %v6156 = vpop.f32.mrf.mxu0
      %v6157 = vadd.f32 %v6044, %v6156
      %v6158 = vpop.f32.mrf.mxu0
      %v6159 = vadd.f32 %v6046, %v6158
      %v6160 = vpop.f32.mrf.mxu0
      %v6161 = vadd.f32 %v6048, %v6160
      %6162 = vmatprep.mubr.bf16.mxu0 %v5493
      %6163 = vmatmul.mubr.bf16.gmra.mxu0 %v4332
      %v6164 = vpop.f32.mrf.mxu0
      %v6165 = vadd.f32 %v6052, %v6164
      %v6166 = vpop.f32.mrf.mxu0
      %v6167 = vadd.f32 %v6054, %v6166
      %v6168 = vpop.f32.mrf.mxu0
      %v6169 = vadd.f32 %v6056, %v6168
      %v6170 = vpop.f32.mrf.mxu0
      %v6171 = vadd.f32 %v6058, %v6170
      %6172 = vdwg.mxu0
      %6173 = vmatprep.subr.bf16.mxu0 0
      %6174 = vmatpush1.bf16.msra.mxu0 %v5176
      %6175 = vmatprep.subr.bf16.mxu0 0
      %6176 = vmatpush1.bf16.msra.mxu0 %v5169
      %6177 = vmatprep.subr.bf16.mxu0 0
      %6178 = vmatpush1.bf16.msra.mxu0 %v5162
      %6179 = vmatprep.subr.bf16.mxu0 0
      %6180 = vmatpush1.bf16.msra.mxu0 %v5155
      %6181 = vmatprep.subr.bf16.mxu0 0
      %6182 = vmatpush1.bf16.msra.mxu0 %v5148
      %6183 = vmatprep.subr.bf16.mxu0 0
      %6184 = vmatpush1.bf16.msra.mxu0 %v5141
      %6185 = vmatprep.subr.bf16.mxu0 0
      %6186 = vmatpush1.bf16.msra.mxu0 %v5134
      %6187 = vmatprep.subr.bf16.mxu0 0
      %6188 = vmatpush1.bf16.msra.mxu0 %v5127
      %6189 = vmatprep.subr.bf16.mxu0 0
      %6190 = vmatpush2.bf16.msra.mxu0 %v5232
      %6191 = vmatprep.subr.bf16.mxu0 0
      %6192 = vmatpush2.bf16.msra.mxu0 %v5225
      %6193 = vmatprep.subr.bf16.mxu0 0
      %6194 = vmatpush2.bf16.msra.mxu0 %v5218
      %6195 = vmatprep.subr.bf16.mxu0 0
      %6196 = vmatpush2.bf16.msra.mxu0 %v5211
      %6197 = vmatprep.subr.bf16.mxu0 0
      %6198 = vmatpush2.bf16.msra.mxu0 %v5204
      %6199 = vmatprep.subr.bf16.mxu0 0
      %6200 = vmatpush2.bf16.msra.mxu0 %v5197
      %6201 = vmatprep.subr.bf16.mxu0 0
      %6202 = vmatpush2.bf16.msra.mxu0 %v5190
      %6203 = vmatprep.subr.bf16.mxu0 0
      %6204 = vmatpush2.bf16.msra.mxu0 %v5183
      %6205 = vmatprep.mubr.bf16.mxu0 %v4303
      %6206 = vmatmul.mubr.bf16.gmra.mxu0 %v4302
      %v6207 = vpop.f32.mrf.mxu0
      %v6208 = vadd.f32 %v4563, %v6207
      %v6209 = vpop.f32.mrf.mxu0
      %v6210 = vpop.f32.mrf.mxu0
      %v6211 = vadd.f32 %v4563, %v6210
      %v6212 = vpop.f32.mrf.mxu0
      %6213 = vmatprep.mubr.bf16.mxu0 %v4307
      %6214 = vmatmul.mubr.bf16.gmra.mxu0 %v4306
      %v6215 = vpop.f32.mrf.mxu0
      %v6216 = vadd.f32 %v4563, %v6215
      %v6217 = vpop.f32.mrf.mxu0
      %v6218 = vpop.f32.mrf.mxu0
      %v6219 = vadd.f32 %v4563, %v6218
      %v6220 = vpop.f32.mrf.mxu0
      %6221 = vmatprep.mubr.bf16.mxu0 %v4311
      %6222 = vmatmul.mubr.bf16.gmra.mxu0 %v4310
      %v6223 = vpop.f32.mrf.mxu0
      %v6224 = vadd.f32 %v4563, %v6223
      %v6225 = vpop.f32.mrf.mxu0
      %v6226 = vpop.f32.mrf.mxu0
      %v6227 = vadd.f32 %v4563, %v6226
      %v6228 = vpop.f32.mrf.mxu0
      %6229 = vmatprep.mubr.bf16.mxu0 %v4315
      %6230 = vmatmul.mubr.bf16.gmra.mxu0 %v4314
      %v6231 = vpop.f32.mrf.mxu0
      %v6232 = vadd.f32 %v4563, %v6231
      %v6233 = vpop.f32.mrf.mxu0
      %v6234 = vpop.f32.mrf.mxu0
      %v6235 = vadd.f32 %v4563, %v6234
      %v6236 = vpop.f32.mrf.mxu0
      %6237 = vmatprep.mubr.bf16.mxu0 %v4319
      %6238 = vmatmul.mubr.bf16.gmra.mxu0 %v4318
      %v6239 = vpop.f32.mrf.mxu0
      %v6240 = vadd.f32 %v4563, %v6239
      %v6241 = vpop.f32.mrf.mxu0
      %v6242 = vpop.f32.mrf.mxu0
      %v6243 = vadd.f32 %v4563, %v6242
      %v6244 = vpop.f32.mrf.mxu0
      %6245 = vmatprep.mubr.bf16.mxu0 %v4323
      %6246 = vmatmul.mubr.bf16.gmra.mxu0 %v4322
      %v6247 = vpop.f32.mrf.mxu0
      %v6248 = vadd.f32 %v4563, %v6247
      %v6249 = vpop.f32.mrf.mxu0
      %v6250 = vpop.f32.mrf.mxu0
      %v6251 = vadd.f32 %v4563, %v6250
      %v6252 = vpop.f32.mrf.mxu0
      %6253 = vmatprep.mubr.bf16.mxu0 %v4327
      %6254 = vmatmul.mubr.bf16.gmra.mxu0 %v4326
      %v6255 = vpop.f32.mrf.mxu0
      %v6256 = vadd.f32 %v4563, %v6255
      %v6257 = vpop.f32.mrf.mxu0
      %v6258 = vpop.f32.mrf.mxu0
      %v6259 = vadd.f32 %v4563, %v6258
      %v6260 = vpop.f32.mrf.mxu0
      %6261 = vmatprep.mubr.bf16.mxu0 %v4331
      %6262 = vmatmul.mubr.bf16.gmra.mxu0 %v4330
      %v6263 = vpop.f32.mrf.mxu0
      %v6264 = vadd.f32 %v4563, %v6263
      %v6265 = vpop.f32.mrf.mxu0
      %v6266 = vpop.f32.mrf.mxu0
      %v6267 = vadd.f32 %v4563, %v6266
      %v6268 = vpop.f32.mrf.mxu0
      %6269 = vdwg.mxu0
      %6270 = vmatprep.subr.bf16.mxu0 0
      %6271 = vmatpush1.bf16.msra.mxu0 %v5288
      %6272 = vmatprep.subr.bf16.mxu0 0
      %6273 = vmatpush1.bf16.msra.mxu0 %v5281
      %6274 = vmatprep.subr.bf16.mxu0 0
      %6275 = vmatpush1.bf16.msra.mxu0 %v5274
      %6276 = vmatprep.subr.bf16.mxu0 0
      %6277 = vmatpush1.bf16.msra.mxu0 %v5267
      %6278 = vmatprep.subr.bf16.mxu0 0
      %6279 = vmatpush1.bf16.msra.mxu0 %v5260
      %6280 = vmatprep.subr.bf16.mxu0 0
      %6281 = vmatpush1.bf16.msra.mxu0 %v5253
      %6282 = vmatprep.subr.bf16.mxu0 0
      %6283 = vmatpush1.bf16.msra.mxu0 %v5246
      %6284 = vmatprep.subr.bf16.mxu0 0
      %6285 = vmatpush1.bf16.msra.mxu0 %v5239
      %6286 = vmatprep.subr.bf16.mxu0 0
      %6287 = vmatpush2.bf16.msra.mxu0 0
      %6288 = vmatprep.subr.bf16.mxu0 0
      %6289 = vmatpush2.bf16.msra.mxu0 0
      %6290 = vmatprep.subr.bf16.mxu0 0
      %6291 = vmatpush2.bf16.msra.mxu0 0
      %6292 = vmatprep.subr.bf16.mxu0 0
      %6293 = vmatpush2.bf16.msra.mxu0 0
      %6294 = vmatprep.subr.bf16.mxu0 0
      %6295 = vmatpush2.bf16.msra.mxu0 0
      %6296 = vmatprep.subr.bf16.mxu0 0
      %6297 = vmatpush2.bf16.msra.mxu0 0
      %6298 = vmatprep.subr.bf16.mxu0 0
      %6299 = vmatpush2.bf16.msra.mxu0 0
      %6300 = vmatprep.subr.bf16.mxu0 0
      %6301 = vmatpush2.bf16.msra.mxu0 %v5295
      %6302 = vmatprep.mubr.bf16.mxu0 %v5472
      %6303 = vmatmul.mubr.bf16.gmra.mxu0 %v4304
      %v6304 = vpop.f32.mrf.mxu0
      %v6305 = vadd.f32 %v6208, %v6304
      %v6306 = vpop.f32.mrf.mxu0
      %v6307 = vpop.f32.mrf.mxu0
      %v6308 = vadd.f32 %v6211, %v6307
      %v6309 = vpop.f32.mrf.mxu0
      %6310 = vmatprep.mubr.bf16.mxu0 %v5475
      %6311 = vmatmul.mubr.bf16.gmra.mxu0 %v4308
      %v6312 = vpop.f32.mrf.mxu0
      %v6313 = vadd.f32 %v6216, %v6312
      %v6314 = vpop.f32.mrf.mxu0
      %v6315 = vpop.f32.mrf.mxu0
      %v6316 = vadd.f32 %v6219, %v6315
      %v6317 = vpop.f32.mrf.mxu0
      %6318 = vmatprep.mubr.bf16.mxu0 %v5478
      %6319 = vmatmul.mubr.bf16.gmra.mxu0 %v4312
      %v6320 = vpop.f32.mrf.mxu0
      %v6321 = vadd.f32 %v6224, %v6320
      %v6322 = vpop.f32.mrf.mxu0
      %v6323 = vpop.f32.mrf.mxu0
      %v6324 = vadd.f32 %v6227, %v6323
      %v6325 = vpop.f32.mrf.mxu0
      %6326 = vmatprep.mubr.bf16.mxu0 %v5481
      %6327 = vmatmul.mubr.bf16.gmra.mxu0 %v4316
      %v6328 = vpop.f32.mrf.mxu0
      %v6329 = vadd.f32 %v6232, %v6328
      %v6330 = vpop.f32.mrf.mxu0
      %v6331 = vpop.f32.mrf.mxu0
      %v6332 = vadd.f32 %v6235, %v6331
      %v6333 = vpop.f32.mrf.mxu0
      %6334 = vmatprep.mubr.bf16.mxu0 %v5484
      %6335 = vmatmul.mubr.bf16.gmra.mxu0 %v4320
      %v6336 = vpop.f32.mrf.mxu0
      %v6337 = vadd.f32 %v6240, %v6336
      %v6338 = vpop.f32.mrf.mxu0
      %v6339 = vpop.f32.mrf.mxu0
      %v6340 = vadd.f32 %v6243, %v6339
      %v6341 = vpop.f32.mrf.mxu0
      %6342 = vmatprep.mubr.bf16.mxu0 %v5487
      %6343 = vmatmul.mubr.bf16.gmra.mxu0 %v4324
      %v6344 = vpop.f32.mrf.mxu0
      %v6345 = vadd.f32 %v6248, %v6344
      %v6346 = vpop.f32.mrf.mxu0
      %v6347 = vpop.f32.mrf.mxu0
      %v6348 = vadd.f32 %v6251, %v6347
      %v6349 = vpop.f32.mrf.mxu0
      %6350 = vmatprep.mubr.bf16.mxu0 %v5490
      %6351 = vmatmul.mubr.bf16.gmra.mxu0 %v4328
      %v6352 = vpop.f32.mrf.mxu0
      %v6353 = vadd.f32 %v6256, %v6352
      %v6354 = vpop.f32.mrf.mxu0
      %v6355 = vpop.f32.mrf.mxu0
      %v6356 = vadd.f32 %v6259, %v6355
      %v6357 = vpop.f32.mrf.mxu0
      %6358 = vmatprep.mubr.bf16.mxu0 %v5493
      %6359 = vmatmul.mubr.bf16.gmra.mxu0 %v4332
      %v6360 = vpop.f32.mrf.mxu0
      %v6361 = vadd.f32 %v6264, %v6360
      %v6362 = vpop.f32.mrf.mxu0
      %v6363 = vpop.f32.mrf.mxu0
      %v6364 = vadd.f32 %v6267, %v6363
      %v6365 = vpop.f32.mrf.mxu0
      %6366 = vdwg.mxu0
      %v6367 = vsub.f32 0.0, %v5643
      %v6368 = vsub.f32 0.0, %v5645
      %v6369 = vsub.f32 0.0, %v5869
      %v6370 = vsub.f32 0.0, %v5871
      %v6371 = vsub.f32 0.0, %v6095
      %v6372 = vsub.f32 0.0, %v6097
      %v6373 = vsub.f32 0.0, %v6305
      %v6374 = vsub.f32 0.0, %v5647
      %v6375 = vsub.f32 0.0, %v5649
      %v6376 = vsub.f32 0.0, %v5873
      %v6377 = vsub.f32 0.0, %v5875
      %v6378 = vsub.f32 0.0, %v6099
      %v6379 = vsub.f32 0.0, %v6101
      %v6380 = vsub.f32 0.0, %v6308
      %v6381 = vsub.f32 0.0, %v5653
      %v6382 = vsub.f32 0.0, %v5655
      %v6383 = vsub.f32 0.0, %v5879
      %v6384 = vsub.f32 0.0, %v5881
      %v6385 = vsub.f32 0.0, %v6105
      %v6386 = vsub.f32 0.0, %v6107
      %v6387 = vsub.f32 0.0, %v6313
      %v6388 = vsub.f32 0.0, %v5657
      %v6389 = vsub.f32 0.0, %v5659
      %v6390 = vsub.f32 0.0, %v5883
      %v6391 = vsub.f32 0.0, %v5885
      %v6392 = vsub.f32 0.0, %v6109
      %v6393 = vsub.f32 0.0, %v6111
      %v6394 = vsub.f32 0.0, %v6316
      %v6395 = vsub.f32 0.0, %v5663
      %v6396 = vsub.f32 0.0, %v5665
      %v6397 = vsub.f32 0.0, %v5889
      %v6398 = vsub.f32 0.0, %v5891
      %v6399 = vsub.f32 0.0, %v6115
      %v6400 = vsub.f32 0.0, %v6117
      %v6401 = vsub.f32 0.0, %v6321
      %v6402 = vsub.f32 0.0, %v5667
      %v6403 = vsub.f32 0.0, %v5669
      %v6404 = vsub.f32 0.0, %v5893
      %v6405 = vsub.f32 0.0, %v5895
      %v6406 = vsub.f32 0.0, %v6119
      %v6407 = vsub.f32 0.0, %v6121
      %v6408 = vsub.f32 0.0, %v6324
      %v6409 = vsub.f32 0.0, %v5673
      %v6410 = vsub.f32 0.0, %v5675
      %v6411 = vsub.f32 0.0, %v5899
      %v6412 = vsub.f32 0.0, %v5901
      %v6413 = vsub.f32 0.0, %v6125
      %v6414 = vsub.f32 0.0, %v6127
      %v6415 = vsub.f32 0.0, %v6329
      %v6416 = vsub.f32 0.0, %v5677
      %v6417 = vsub.f32 0.0, %v5679
      %v6418 = vsub.f32 0.0, %v5903
      %v6419 = vsub.f32 0.0, %v5905
      %v6420 = vsub.f32 0.0, %v6129
      %v6421 = vsub.f32 0.0, %v6131
      %v6422 = vsub.f32 0.0, %v6332
      %v6423 = vsub.f32 0.0, %v5683
      %v6424 = vsub.f32 0.0, %v5685
      %v6425 = vsub.f32 0.0, %v5909
      %v6426 = vsub.f32 0.0, %v5911
      %v6427 = vsub.f32 0.0, %v6135
      %v6428 = vsub.f32 0.0, %v6137
      %v6429 = vsub.f32 0.0, %v6337
      %v6430 = vsub.f32 0.0, %v5687
      %v6431 = vsub.f32 0.0, %v5689
      %v6432 = vsub.f32 0.0, %v5913
      %v6433 = vsub.f32 0.0, %v5915
      %v6434 = vsub.f32 0.0, %v6139
      %v6435 = vsub.f32 0.0, %v6141
      %v6436 = vsub.f32 0.0, %v6340
      %v6437 = vsub.f32 0.0, %v5693
      %v6438 = vsub.f32 0.0, %v5695
      %v6439 = vsub.f32 0.0, %v5919
      %v6440 = vsub.f32 0.0, %v5921
      %v6441 = vsub.f32 0.0, %v6145
      %v6442 = vsub.f32 0.0, %v6147
      %v6443 = vsub.f32 0.0, %v6345
      %v6444 = vsub.f32 0.0, %v5697
      %v6445 = vsub.f32 0.0, %v5699
      %v6446 = vsub.f32 0.0, %v5923
      %v6447 = vsub.f32 0.0, %v5925
      %v6448 = vsub.f32 0.0, %v6149
      %v6449 = vsub.f32 0.0, %v6151
      %v6450 = vsub.f32 0.0, %v6348
      %v6451 = vsub.f32 0.0, %v5703
      %v6452 = vsub.f32 0.0, %v5705
      %v6453 = vsub.f32 0.0, %v5929
      %v6454 = vsub.f32 0.0, %v5931
      %v6455 = vsub.f32 0.0, %v6155
      %v6456 = vsub.f32 0.0, %v6157
      %v6457 = vsub.f32 0.0, %v6353
      %v6458 = vsub.f32 0.0, %v5707
      %v6459 = vsub.f32 0.0, %v5709
      %v6460 = vsub.f32 0.0, %v5933
      %v6461 = vsub.f32 0.0, %v5935
      %v6462 = vsub.f32 0.0, %v6159
      %v6463 = vsub.f32 0.0, %v6161
      %v6464 = vsub.f32 0.0, %v6356
      %v6465 = vsub.f32 0.0, %v5713
      %v6466 = vsub.f32 0.0, %v5715
      %v6467 = vsub.f32 0.0, %v5939
      %v6468 = vsub.f32 0.0, %v5941
      %v6469 = vsub.f32 0.0, %v6165
      %v6470 = vsub.f32 0.0, %v6167
      %v6471 = vsub.f32 0.0, %v6361
      %v6472 = vsub.f32 0.0, %v5717
      %v6473 = vsub.f32 0.0, %v5719
      %v6474 = vsub.f32 0.0, %v5943
      %v6475 = vsub.f32 0.0, %v5945
      %v6476 = vsub.f32 0.0, %v6169
      %v6477 = vsub.f32 0.0, %v6171
      %v6478 = vsub.f32 0.0, %v6364
      %v6479 = vmul.f32 %v6367, 1.442695
      %v6480 = vpow.pop %v6479
      %v6481 = vmul.f32 %v6368, 1.442695
      %v6482 = vpow.pop %v6481
      %v6483 = vmul.f32 %v6369, 1.442695
      %v6484 = vpow.pop %v6483
      %v6485 = vmul.f32 %v6370, 1.442695
      %v6486 = vpow.pop %v6485
      %v6487 = vmul.f32 %v6371, 1.442695
      %v6488 = vpow.pop %v6487
      %v6489 = vmul.f32 %v6372, 1.442695
      %v6490 = vpow.pop %v6489
      %v6491 = vmul.f32 %v6373, 1.442695
      %v6492 = vpow.pop %v6491
      %v6493 = vmul.f32 %v6374, 1.442695
      %v6494 = vpow.pop %v6493
      %v6495 = vmul.f32 %v6375, 1.442695
      %v6496 = vpow.pop %v6495
      %v6497 = vmul.f32 %v6376, 1.442695
      %v6498 = vpow.pop %v6497
      %v6499 = vmul.f32 %v6377, 1.442695
      %v6500 = vpow.pop %v6499
      %v6501 = vmul.f32 %v6378, 1.442695
      %v6502 = vpow.pop %v6501
      %v6503 = vmul.f32 %v6379, 1.442695
      %v6504 = vpow.pop %v6503
      %v6505 = vmul.f32 %v6380, 1.442695
      %v6506 = vpow.pop %v6505
      %v6507 = vmul.f32 %v6381, 1.442695
      %v6508 = vpow.pop %v6507
      %v6509 = vmul.f32 %v6382, 1.442695
      %v6510 = vpow.pop %v6509
      %v6511 = vmul.f32 %v6383, 1.442695
      %v6512 = vpow.pop %v6511
      %v6513 = vmul.f32 %v6384, 1.442695
      %v6514 = vpow.pop %v6513
      %v6515 = vmul.f32 %v6385, 1.442695
      %v6516 = vpow.pop %v6515
      %v6517 = vmul.f32 %v6386, 1.442695
      %v6518 = vpow.pop %v6517
      %v6519 = vmul.f32 %v6387, 1.442695
      %v6520 = vpow.pop %v6519
      %v6521 = vmul.f32 %v6388, 1.442695
      %v6522 = vpow.pop %v6521
      %v6523 = vmul.f32 %v6389, 1.442695
      %v6524 = vpow.pop %v6523
      %v6525 = vmul.f32 %v6390, 1.442695
      %v6526 = vpow.pop %v6525
      %v6527 = vmul.f32 %v6391, 1.442695
      %v6528 = vpow.pop %v6527
      %v6529 = vmul.f32 %v6392, 1.442695
      %v6530 = vpow.pop %v6529
      %v6531 = vmul.f32 %v6393, 1.442695
      %v6532 = vpow.pop %v6531
      %v6533 = vmul.f32 %v6394, 1.442695
      %v6534 = vpow.pop %v6533
      %v6535 = vmul.f32 %v6395, 1.442695
      %v6536 = vpow.pop %v6535
      %v6537 = vmul.f32 %v6396, 1.442695
      %v6538 = vpow.pop %v6537
      %v6539 = vmul.f32 %v6397, 1.442695
      %v6540 = vpow.pop %v6539
      %v6541 = vmul.f32 %v6398, 1.442695
      %v6542 = vpow.pop %v6541
      %v6543 = vmul.f32 %v6399, 1.442695
      %v6544 = vpow.pop %v6543
      %v6545 = vmul.f32 %v6400, 1.442695
      %v6546 = vpow.pop %v6545
      %v6547 = vmul.f32 %v6401, 1.442695
      %v6548 = vpow.pop %v6547
      %v6549 = vmul.f32 %v6402, 1.442695
      %v6550 = vpow.pop %v6549
      %v6551 = vmul.f32 %v6403, 1.442695
      %v6552 = vpow.pop %v6551
      %v6553 = vmul.f32 %v6404, 1.442695
      %v6554 = vpow.pop %v6553
      %v6555 = vmul.f32 %v6405, 1.442695
      %v6556 = vpow.pop %v6555
      %v6557 = vmul.f32 %v6406, 1.442695
      %v6558 = vpow.pop %v6557
      %v6559 = vmul.f32 %v6407, 1.442695
      %v6560 = vpow.pop %v6559
      %v6561 = vmul.f32 %v6408, 1.442695
      %v6562 = vpow.pop %v6561
      %v6563 = vmul.f32 %v6409, 1.442695
      %v6564 = vpow.pop %v6563
      %v6565 = vmul.f32 %v6410, 1.442695
      %v6566 = vpow.pop %v6565
      %v6567 = vmul.f32 %v6411, 1.442695
      %v6568 = vpow.pop %v6567
      %v6569 = vmul.f32 %v6412, 1.442695
      %v6570 = vpow.pop %v6569
      %v6571 = vmul.f32 %v6413, 1.442695
      %v6572 = vpow.pop %v6571
      %v6573 = vmul.f32 %v6414, 1.442695
      %v6574 = vpow.pop %v6573
      %v6575 = vmul.f32 %v6415, 1.442695
      %v6576 = vpow.pop %v6575
      %v6577 = vmul.f32 %v6416, 1.442695
      %v6578 = vpow.pop %v6577
      %v6579 = vmul.f32 %v6417, 1.442695
      %v6580 = vpow.pop %v6579
      %v6581 = vmul.f32 %v6418, 1.442695
      %v6582 = vpow.pop %v6581
      %v6583 = vmul.f32 %v6419, 1.442695
      %v6584 = vpow.pop %v6583
      %v6585 = vmul.f32 %v6420, 1.442695
      %v6586 = vpow.pop %v6585
      %v6587 = vmul.f32 %v6421, 1.442695
      %v6588 = vpow.pop %v6587
      %v6589 = vmul.f32 %v6422, 1.442695
      %v6590 = vpow.pop %v6589
      %v6591 = vmul.f32 %v6423, 1.442695
      %v6592 = vpow.pop %v6591
      %v6593 = vmul.f32 %v6424, 1.442695
      %v6594 = vpow.pop %v6593
      %v6595 = vmul.f32 %v6425, 1.442695
      %v6596 = vpow.pop %v6595
      %v6597 = vmul.f32 %v6426, 1.442695
      %v6598 = vpow.pop %v6597
      %v6599 = vmul.f32 %v6427, 1.442695
      %v6600 = vpow.pop %v6599
      %v6601 = vmul.f32 %v6428, 1.442695
      %v6602 = vpow.pop %v6601
      %v6603 = vmul.f32 %v6429, 1.442695
      %v6604 = vpow.pop %v6603
      %v6605 = vmul.f32 %v6430, 1.442695
      %v6606 = vpow.pop %v6605
      %v6607 = vmul.f32 %v6431, 1.442695
      %v6608 = vpow.pop %v6607
      %v6609 = vmul.f32 %v6432, 1.442695
      %v6610 = vpow.pop %v6609
      %v6611 = vmul.f32 %v6433, 1.442695
      %v6612 = vpow.pop %v6611
      %v6613 = vmul.f32 %v6434, 1.442695
      %v6614 = vpow.pop %v6613
      %v6615 = vmul.f32 %v6435, 1.442695
      %v6616 = vpow.pop %v6615
      %v6617 = vmul.f32 %v6436, 1.442695
      %v6618 = vpow.pop %v6617
      %v6619 = vmul.f32 %v6437, 1.442695
      %v6620 = vpow.pop %v6619
      %v6621 = vmul.f32 %v6438, 1.442695
      %v6622 = vpow.pop %v6621
      %v6623 = vmul.f32 %v6439, 1.442695
      %v6624 = vpow.pop %v6623
      %v6625 = vmul.f32 %v6440, 1.442695
      %v6626 = vpow.pop %v6625
      %v6627 = vmul.f32 %v6441, 1.442695
      %v6628 = vpow.pop %v6627
      %v6629 = vmul.f32 %v6442, 1.442695
      %v6630 = vpow.pop %v6629
      %v6631 = vmul.f32 %v6443, 1.442695
      %v6632 = vpow.pop %v6631
      %v6633 = vmul.f32 %v6444, 1.442695
      %v6634 = vpow.pop %v6633
      %v6635 = vmul.f32 %v6445, 1.442695
      %v6636 = vpow.pop %v6635
      %v6637 = vmul.f32 %v6446, 1.442695
      %v6638 = vpow.pop %v6637
      %v6639 = vmul.f32 %v6447, 1.442695
      %v6640 = vpow.pop %v6639
      %v6641 = vmul.f32 %v6448, 1.442695
      %v6642 = vpow.pop %v6641
      %v6643 = vmul.f32 %v6449, 1.442695
      %v6644 = vpow.pop %v6643
      %v6645 = vmul.f32 %v6450, 1.442695
      %v6646 = vpow.pop %v6645
      %v6647 = vmul.f32 %v6451, 1.442695
      %v6648 = vpow.pop %v6647
      %v6649 = vmul.f32 %v6452, 1.442695
      %v6650 = vpow.pop %v6649
      %v6651 = vmul.f32 %v6453, 1.442695
      %v6652 = vpow.pop %v6651
      %v6653 = vmul.f32 %v6454, 1.442695
      %v6654 = vpow.pop %v6653
      %v6655 = vmul.f32 %v6455, 1.442695
      %v6656 = vpow.pop %v6655
      %v6657 = vmul.f32 %v6456, 1.442695
      %v6658 = vpow.pop %v6657
      %v6659 = vmul.f32 %v6457, 1.442695
      %v6660 = vpow.pop %v6659
      %v6661 = vmul.f32 %v6458, 1.442695
      %v6662 = vpow.pop %v6661
      %v6663 = vmul.f32 %v6459, 1.442695
      %v6664 = vpow.pop %v6663
      %v6665 = vmul.f32 %v6460, 1.442695
      %v6666 = vpow.pop %v6665
      %v6667 = vmul.f32 %v6461, 1.442695
      %v6668 = vpow.pop %v6667
      %v6669 = vmul.f32 %v6462, 1.442695
      %v6670 = vpow.pop %v6669
      %v6671 = vmul.f32 %v6463, 1.442695
      %v6672 = vpow.pop %v6671
      %v6673 = vmul.f32 %v6464, 1.442695
      %v6674 = vpow.pop %v6673
      %v6675 = vmul.f32 %v6465, 1.442695
      %v6676 = vpow.pop %v6675
      %v6677 = vmul.f32 %v6466, 1.442695
      %v6678 = vpow.pop %v6677
      %v6679 = vmul.f32 %v6467, 1.442695
      %v6680 = vpow.pop %v6679
      %v6681 = vmul.f32 %v6468, 1.442695
      %v6682 = vpow.pop %v6681
      %v6683 = vmul.f32 %v6469, 1.442695
      %v6684 = vpow.pop %v6683
      %v6685 = vmul.f32 %v6470, 1.442695
      %v6686 = vpow.pop %v6685
      %v6687 = vmul.f32 %v6471, 1.442695
      %v6688 = vpow.pop %v6687
      %v6689 = vmul.f32 %v6472, 1.442695
      %v6690 = vpow.pop %v6689
      %v6691 = vmul.f32 %v6473, 1.442695
      %v6692 = vpow.pop %v6691
      %v6693 = vmul.f32 %v6474, 1.442695
      %v6694 = vpow.pop %v6693
      %v6695 = vmul.f32 %v6475, 1.442695
      %v6696 = vpow.pop %v6695
      %v6697 = vmul.f32 %v6476, 1.442695
      %v6698 = vpow.pop %v6697
      %v6699 = vmul.f32 %v6477, 1.442695
      %v6700 = vpow.pop %v6699
      %v6701 = vmul.f32 %v6478, 1.442695
      %v6702 = vpow.pop %v6701
      %v6703 = vadd.f32 %v6480, 1.0
      %v6704 = vadd.f32 %v6482, 1.0
      %v6705 = vadd.f32 %v6484, 1.0
      %v6706 = vadd.f32 %v6486, 1.0
      %v6707 = vadd.f32 %v6488, 1.0
      %v6708 = vadd.f32 %v6490, 1.0
      %v6709 = vadd.f32 %v6492, 1.0
      %v6710 = vadd.f32 %v6494, 1.0
      %v6711 = vadd.f32 %v6496, 1.0
      %v6712 = vadd.f32 %v6498, 1.0
      %v6713 = vadd.f32 %v6500, 1.0
      %v6714 = vadd.f32 %v6502, 1.0
      %v6715 = vadd.f32 %v6504, 1.0
      %v6716 = vadd.f32 %v6506, 1.0
      %v6717 = vadd.f32 %v6508, 1.0
      %v6718 = vadd.f32 %v6510, 1.0
      %v6719 = vadd.f32 %v6512, 1.0
      %v6720 = vadd.f32 %v6514, 1.0
      %v6721 = vadd.f32 %v6516, 1.0
      %v6722 = vadd.f32 %v6518, 1.0
      %v6723 = vadd.f32 %v6520, 1.0
      %v6724 = vadd.f32 %v6522, 1.0
      %v6725 = vadd.f32 %v6524, 1.0
      %v6726 = vadd.f32 %v6526, 1.0
      %v6727 = vadd.f32 %v6528, 1.0
      %v6728 = vadd.f32 %v6530, 1.0
      %v6729 = vadd.f32 %v6532, 1.0
      %v6730 = vadd.f32 %v6534, 1.0
      %v6731 = vadd.f32 %v6536, 1.0
      %v6732 = vadd.f32 %v6538, 1.0
      %v6733 = vadd.f32 %v6540, 1.0
      %v6734 = vadd.f32 %v6542, 1.0
      %v6735 = vadd.f32 %v6544, 1.0
      %v6736 = vadd.f32 %v6546, 1.0
      %v6737 = vadd.f32 %v6548, 1.0
      %v6738 = vadd.f32 %v6550, 1.0
      %v6739 = vadd.f32 %v6552, 1.0
      %v6740 = vadd.f32 %v6554, 1.0
      %v6741 = vadd.f32 %v6556, 1.0
      %v6742 = vadd.f32 %v6558, 1.0
      %v6743 = vadd.f32 %v6560, 1.0
      %v6744 = vadd.f32 %v6562, 1.0
      %v6745 = vadd.f32 %v6564, 1.0
      %v6746 = vadd.f32 %v6566, 1.0
      %v6747 = vadd.f32 %v6568, 1.0
      %v6748 = vadd.f32 %v6570, 1.0
      %v6749 = vadd.f32 %v6572, 1.0
      %v6750 = vadd.f32 %v6574, 1.0
      %v6751 = vadd.f32 %v6576, 1.0
      %v6752 = vadd.f32 %v6578, 1.0
      %v6753 = vadd.f32 %v6580, 1.0
      %v6754 = vadd.f32 %v6582, 1.0
      %v6755 = vadd.f32 %v6584, 1.0
      %v6756 = vadd.f32 %v6586, 1.0
      %v6757 = vadd.f32 %v6588, 1.0
      %v6758 = vadd.f32 %v6590, 1.0
      %v6759 = vadd.f32 %v6592, 1.0
      %v6760 = vadd.f32 %v6594, 1.0
      %v6761 = vadd.f32 %v6596, 1.0
      %v6762 = vadd.f32 %v6598, 1.0
      %v6763 = vadd.f32 %v6600, 1.0
      %v6764 = vadd.f32 %v6602, 1.0
      %v6765 = vadd.f32 %v6604, 1.0
      %v6766 = vadd.f32 %v6606, 1.0
      %v6767 = vadd.f32 %v6608, 1.0
      %v6768 = vadd.f32 %v6610, 1.0
      %v6769 = vadd.f32 %v6612, 1.0
      %v6770 = vadd.f32 %v6614, 1.0
      %v6771 = vadd.f32 %v6616, 1.0
      %v6772 = vadd.f32 %v6618, 1.0
      %v6773 = vadd.f32 %v6620, 1.0
      %v6774 = vadd.f32 %v6622, 1.0
      %v6775 = vadd.f32 %v6624, 1.0
      %v6776 = vadd.f32 %v6626, 1.0
      %v6777 = vadd.f32 %v6628, 1.0
      %v6778 = vadd.f32 %v6630, 1.0
      %v6779 = vadd.f32 %v6632, 1.0
      %v6780 = vadd.f32 %v6634, 1.0
      %v6781 = vadd.f32 %v6636, 1.0
      %v6782 = vadd.f32 %v6638, 1.0
      %v6783 = vadd.f32 %v6640, 1.0
      %v6784 = vadd.f32 %v6642, 1.0
      %v6785 = vadd.f32 %v6644, 1.0
      %v6786 = vadd.f32 %v6646, 1.0
      %v6787 = vadd.f32 %v6648, 1.0
      %v6788 = vadd.f32 %v6650, 1.0
      %v6789 = vadd.f32 %v6652, 1.0
      %v6790 = vadd.f32 %v6654, 1.0
      %v6791 = vadd.f32 %v6656, 1.0
      %v6792 = vadd.f32 %v6658, 1.0
      %v6793 = vadd.f32 %v6660, 1.0
      %v6794 = vadd.f32 %v6662, 1.0
      %v6795 = vadd.f32 %v6664, 1.0
      %v6796 = vadd.f32 %v6666, 1.0
      %v6797 = vadd.f32 %v6668, 1.0
      %v6798 = vadd.f32 %v6670, 1.0
      %v6799 = vadd.f32 %v6672, 1.0
      %v6800 = vadd.f32 %v6674, 1.0
      %v6801 = vadd.f32 %v6676, 1.0
      %v6802 = vadd.f32 %v6678, 1.0
      %v6803 = vadd.f32 %v6680, 1.0
      %v6804 = vadd.f32 %v6682, 1.0
      %v6805 = vadd.f32 %v6684, 1.0
      %v6806 = vadd.f32 %v6686, 1.0
      %v6807 = vadd.f32 %v6688, 1.0
      %v6808 = vadd.f32 %v6690, 1.0
      %v6809 = vadd.f32 %v6692, 1.0
      %v6810 = vadd.f32 %v6694, 1.0
      %v6811 = vadd.f32 %v6696, 1.0
      %v6812 = vadd.f32 %v6698, 1.0
      %v6813 = vadd.f32 %v6700, 1.0
      %v6814 = vadd.f32 %v6702, 1.0
      %v6815 = vrcp.pop %v6703
      %v6816 = vrcp.pop %v6704
      %v6817 = vrcp.pop %v6705
      %v6818 = vrcp.pop %v6706
      %v6819 = vrcp.pop %v6707
      %v6820 = vrcp.pop %v6708
      %v6821 = vrcp.pop %v6709
      %v6822 = vrcp.pop %v6710
      %v6823 = vrcp.pop %v6711
      %v6824 = vrcp.pop %v6712
      %v6825 = vrcp.pop %v6713
      %v6826 = vrcp.pop %v6714
      %v6827 = vrcp.pop %v6715
      %v6828 = vrcp.pop %v6716
      %v6829 = vrcp.pop %v6717
      %v6830 = vrcp.pop %v6718
      %v6831 = vrcp.pop %v6719
      %v6832 = vrcp.pop %v6720
      %v6833 = vrcp.pop %v6721
      %v6834 = vrcp.pop %v6722
      %v6835 = vrcp.pop %v6723
      %v6836 = vrcp.pop %v6724
      %v6837 = vrcp.pop %v6725
      %v6838 = vrcp.pop %v6726
      %v6839 = vrcp.pop %v6727
      %v6840 = vrcp.pop %v6728
      %v6841 = vrcp.pop %v6729
      %v6842 = vrcp.pop %v6730
      %v6843 = vrcp.pop %v6731
      %v6844 = vrcp.pop %v6732
      %v6845 = vrcp.pop %v6733
      %v6846 = vrcp.pop %v6734
      %v6847 = vrcp.pop %v6735
      %v6848 = vrcp.pop %v6736
      %v6849 = vrcp.pop %v6737
      %v6850 = vrcp.pop %v6738
      %v6851 = vrcp.pop %v6739
      %v6852 = vrcp.pop %v6740
      %v6853 = vrcp.pop %v6741
      %v6854 = vrcp.pop %v6742
      %v6855 = vrcp.pop %v6743
      %v6856 = vrcp.pop %v6744
      %v6857 = vrcp.pop %v6745
      %v6858 = vrcp.pop %v6746
      %v6859 = vrcp.pop %v6747
      %v6860 = vrcp.pop %v6748
      %v6861 = vrcp.pop %v6749
      %v6862 = vrcp.pop %v6750
      %v6863 = vrcp.pop %v6751
      %v6864 = vrcp.pop %v6752
      %v6865 = vrcp.pop %v6753
      %v6866 = vrcp.pop %v6754
      %v6867 = vrcp.pop %v6755
      %v6868 = vrcp.pop %v6756
      %v6869 = vrcp.pop %v6757
      %v6870 = vrcp.pop %v6758
      %v6871 = vrcp.pop %v6759
      %v6872 = vrcp.pop %v6760
      %v6873 = vrcp.pop %v6761
      %v6874 = vrcp.pop %v6762
      %v6875 = vrcp.pop %v6763
      %v6876 = vrcp.pop %v6764
      %v6877 = vrcp.pop %v6765
      %v6878 = vrcp.pop %v6766
      %v6879 = vrcp.pop %v6767
      %v6880 = vrcp.pop %v6768
      %v6881 = vrcp.pop %v6769
      %v6882 = vrcp.pop %v6770
      %v6883 = vrcp.pop %v6771
      %v6884 = vrcp.pop %v6772
      %v6885 = vrcp.pop %v6773
      %v6886 = vrcp.pop %v6774
      %v6887 = vrcp.pop %v6775
      %v6888 = vrcp.pop %v6776
      %v6889 = vrcp.pop %v6777
      %v6890 = vrcp.pop %v6778
      %v6891 = vrcp.pop %v6779
      %v6892 = vrcp.pop %v6780
      %v6893 = vrcp.pop %v6781
      %v6894 = vrcp.pop %v6782
      %v6895 = vrcp.pop %v6783
      %v6896 = vrcp.pop %v6784
      %v6897 = vrcp.pop %v6785
      %v6898 = vrcp.pop %v6786
      %v6899 = vrcp.pop %v6787
      %v6900 = vrcp.pop %v6788
      %v6901 = vrcp.pop %v6789
      %v6902 = vrcp.pop %v6790
      %v6903 = vrcp.pop %v6791
      %v6904 = vrcp.pop %v6792
      %v6905 = vrcp.pop %v6793
      %v6906 = vrcp.pop %v6794
      %v6907 = vrcp.pop %v6795
      %v6908 = vrcp.pop %v6796
      %v6909 = vrcp.pop %v6797
      %v6910 = vrcp.pop %v6798
      %v6911 = vrcp.pop %v6799
      %v6912 = vrcp.pop %v6800
      %v6913 = vrcp.pop %v6801
      %v6914 = vrcp.pop %v6802
      %v6915 = vrcp.pop %v6803
      %v6916 = vrcp.pop %v6804
      %v6917 = vrcp.pop %v6805
      %v6918 = vrcp.pop %v6806
      %v6919 = vrcp.pop %v6807
      %v6920 = vrcp.pop %v6808
      %v6921 = vrcp.pop %v6809
      %v6922 = vrcp.pop %v6810
      %v6923 = vrcp.pop %v6811
      %v6924 = vrcp.pop %v6812
      %v6925 = vrcp.pop %v6813
      %v6926 = vrcp.pop %v6814
      %6927 = vst [vmem:[%s339] sm:$0xff] %v6815
      %6928 = vst [vmem:[%s339 + $0x8] sm:$0xff] %v6816
      %6929 = vst [vmem:[%s339 + $0x10] sm:$0xff] %v6817
      %6930 = vst [vmem:[%s339 + $0x18] sm:$0xff] %v6818
      %6931 = vst [vmem:[%s339 + $0x20] sm:$0xff] %v6819
      %6932 = vst [vmem:[%s339 + $0x28] sm:$0xff] %v6820
      %6933 = vst [vmem:[%s339 + $0x30] sm:$0xff] %v6821
      %6934 = vst [vmem:[%s339 + $0x38] sm:$0xff] %v6822
      %6935 = vst [vmem:[%s339 + $0x40] sm:$0xff] %v6823
      %6936 = vst [vmem:[%s339 + $0x48] sm:$0xff] %v6824
      %6937 = vst [vmem:[%s339 + $0x50] sm:$0xff] %v6825
      %6938 = vst [vmem:[%s339 + $0x58] sm:$0xff] %v6826
      %6939 = vst [vmem:[%s339 + $0x60] sm:$0xff] %v6827
      %6940 = vst [vmem:[%s339 + $0x68] sm:$0xff] %v6828
      %6941 = vst [vmem:[%s339 + $0x70] sm:$0xff] %v6829
      %6942 = vst [vmem:[%s339 + $0x78] sm:$0xff] %v6830
      %6943 = vst [vmem:[%s339 + $0x80] sm:$0xff] %v6831
      %6944 = vst [vmem:[%s339 + $0x88] sm:$0xff] %v6832
      %6945 = vst [vmem:[%s339 + $0x90] sm:$0xff] %v6833
      %6946 = vst [vmem:[%s339 + $0x98] sm:$0xff] %v6834
      %6947 = vst [vmem:[%s339 + $0xa0] sm:$0xff] %v6835
      %6948 = vst [vmem:[%s339 + $0xa8] sm:$0xff] %v6836
      %6949 = vst [vmem:[%s339 + $0xb0] sm:$0xff] %v6837
      %6950 = vst [vmem:[%s339 + $0xb8] sm:$0xff] %v6838
      %6951 = vst [vmem:[%s339 + $0xc0] sm:$0xff] %v6839
      %6952 = vst [vmem:[%s339 + $0xc8] sm:$0xff] %v6840
      %6953 = vst [vmem:[%s339 + $0xd0] sm:$0xff] %v6841
      %6954 = vst [vmem:[%s339 + $0xd8] sm:$0xff] %v6842
      %6955 = vst [vmem:[%s339 + $0xe0] sm:$0xff] %v6843
      %6956 = vst [vmem:[%s339 + $0xe8] sm:$0xff] %v6844
      %6957 = vst [vmem:[%s339 + $0xf0] sm:$0xff] %v6845
      %6958 = vst [vmem:[%s339 + $0xf8] sm:$0xff] %v6846
      %6959 = vst [vmem:[%s339 + $0x100] sm:$0xff] %v6847
      %6960 = vst [vmem:[%s339 + $0x108] sm:$0xff] %v6848
      %6961 = vst [vmem:[%s339 + $0x110] sm:$0xff] %v6849
      %6962 = vst [vmem:[%s339 + $0x118] sm:$0xff] %v6850
      %6963 = vst [vmem:[%s339 + $0x120] sm:$0xff] %v6851
      %6964 = vst [vmem:[%s339 + $0x128] sm:$0xff] %v6852
      %6965 = vst [vmem:[%s339 + $0x130] sm:$0xff] %v6853
      %6966 = vst [vmem:[%s339 + $0x138] sm:$0xff] %v6854
      %6967 = vst [vmem:[%s339 + $0x140] sm:$0xff] %v6855
      %6968 = vst [vmem:[%s339 + $0x148] sm:$0xff] %v6856
      %6969 = vst [vmem:[%s339 + $0x150] sm:$0xff] %v6857
      %6970 = vst [vmem:[%s339 + $0x158] sm:$0xff] %v6858
      %6971 = vst [vmem:[%s339 + $0x160] sm:$0xff] %v6859
      %6972 = vst [vmem:[%s339 + $0x168] sm:$0xff] %v6860
      %6973 = vst [vmem:[%s339 + $0x170] sm:$0xff] %v6861
      %6974 = vst [vmem:[%s339 + $0x178] sm:$0xff] %v6862
      %6975 = vst [vmem:[%s339 + $0x180] sm:$0xff] %v6863
      %6976 = vst [vmem:[%s339 + $0x188] sm:$0xff] %v6864
      %6977 = vst [vmem:[%s339 + $0x190] sm:$0xff] %v6865
      %6978 = vst [vmem:[%s339 + $0x198] sm:$0xff] %v6866
      %6979 = vst [vmem:[%s339 + $0x1a0] sm:$0xff] %v6867
      %6980 = vst [vmem:[%s339 + $0x1a8] sm:$0xff] %v6868
      %6981 = vst [vmem:[%s339 + $0x1b0] sm:$0xff] %v6869
      %6982 = vst [vmem:[%s339 + $0x1b8] sm:$0xff] %v6870
      %6983 = vst [vmem:[%s339 + $0x1c0] sm:$0xff] %v6871
      %6984 = vst [vmem:[%s339 + $0x1c8] sm:$0xff] %v6872
      %6985 = vst [vmem:[%s339 + $0x1d0] sm:$0xff] %v6873
      %6986 = vst [vmem:[%s339 + $0x1d8] sm:$0xff] %v6874
      %6987 = vst [vmem:[%s339 + $0x1e0] sm:$0xff] %v6875
      %6988 = vst [vmem:[%s339 + $0x1e8] sm:$0xff] %v6876
      %6989 = vst [vmem:[%s339 + $0x1f0] sm:$0xff] %v6877
      %6990 = vst [vmem:[%s339 + $0x1f8] sm:$0xff] %v6878
      %6991 = vst [vmem:[%s339 + $0x200] sm:$0xff] %v6879
      %6992 = vst [vmem:[%s339 + $0x208] sm:$0xff] %v6880
      %6993 = vst [vmem:[%s339 + $0x210] sm:$0xff] %v6881
      %6994 = vst [vmem:[%s339 + $0x218] sm:$0xff] %v6882
      %6995 = vst [vmem:[%s339 + $0x220] sm:$0xff] %v6883
      %6996 = vst [vmem:[%s339 + $0x228] sm:$0xff] %v6884
      %6997 = vst [vmem:[%s339 + $0x230] sm:$0xff] %v6885
      %6998 = vst [vmem:[%s339 + $0x238] sm:$0xff] %v6886
      %6999 = vst [vmem:[%s339 + $0x240] sm:$0xff] %v6887
      %7000 = vst [vmem:[%s339 + $0x248] sm:$0xff] %v6888
      %7001 = vst [vmem:[%s339 + $0x250] sm:$0xff] %v6889
      %7002 = vst [vmem:[%s339 + $0x258] sm:$0xff] %v6890
      %7003 = vst [vmem:[%s339 + $0x260] sm:$0xff] %v6891
      %7004 = vst [vmem:[%s339 + $0x268] sm:$0xff] %v6892
      %7005 = vst [vmem:[%s339 + $0x270] sm:$0xff] %v6893
      %7006 = vst [vmem:[%s339 + $0x278] sm:$0xff] %v6894
      %7007 = vst [vmem:[%s339 + $0x280] sm:$0xff] %v6895
      %7008 = vst [vmem:[%s339 + $0x288] sm:$0xff] %v6896
      %7009 = vst [vmem:[%s339 + $0x290] sm:$0xff] %v6897
      %7010 = vst [vmem:[%s339 + $0x298] sm:$0xff] %v6898
      %7011 = vst [vmem:[%s339 + $0x2a0] sm:$0xff] %v6899
      %7012 = vst [vmem:[%s339 + $0x2a8] sm:$0xff] %v6900
      %7013 = vst [vmem:[%s339 + $0x2b0] sm:$0xff] %v6901
      %7014 = vst [vmem:[%s339 + $0x2b8] sm:$0xff] %v6902
      %7015 = vst [vmem:[%s339 + $0x2c0] sm:$0xff] %v6903
      %7016 = vst [vmem:[%s339 + $0x2c8] sm:$0xff] %v6904
      %7017 = vst [vmem:[%s339 + $0x2d0] sm:$0xff] %v6905
      %7018 = vst [vmem:[%s339 + $0x2d8] sm:$0xff] %v6906
      %7019 = vst [vmem:[%s339 + $0x2e0] sm:$0xff] %v6907
      %7020 = vst [vmem:[%s339 + $0x2e8] sm:$0xff] %v6908
      %7021 = vst [vmem:[%s339 + $0x2f0] sm:$0xff] %v6909
      %7022 = vst [vmem:[%s339 + $0x2f8] sm:$0xff] %v6910
      %7023 = vst [vmem:[%s339 + $0x300] sm:$0xff] %v6911
      %7024 = vst [vmem:[%s339 + $0x308] sm:$0xff] %v6912
      %7025 = vst [vmem:[%s339 + $0x310] sm:$0xff] %v6913
      %7026 = vst [vmem:[%s339 + $0x318] sm:$0xff] %v6914
      %7027 = vst [vmem:[%s339 + $0x320] sm:$0xff] %v6915
      %7028 = vst [vmem:[%s339 + $0x328] sm:$0xff] %v6916
      %7029 = vst [vmem:[%s339 + $0x330] sm:$0xff] %v6917
      %7030 = vst [vmem:[%s339 + $0x338] sm:$0xff] %v6918
      %7031 = vst [vmem:[%s339 + $0x340] sm:$0xff] %v6919
      %7032 = vst [vmem:[%s339 + $0x348] sm:$0xff] %v6920
      %7033 = vst [vmem:[%s339 + $0x350] sm:$0xff] %v6921
      %7034 = vst [vmem:[%s339 + $0x358] sm:$0xff] %v6922
      %7035 = vst [vmem:[%s339 + $0x360] sm:$0xff] %v6923
      %7036 = vst [vmem:[%s339 + $0x368] sm:$0xff] %v6924
      %7037 = vst [vmem:[%s339 + $0x370] sm:$0xff] %v6925
      %7038 = vst [vmem:[%s339 + $0x378] sm:$0xff] %v6926
      %s7039 = smul.u32 16, %s20
      %p7040 = scmp.lt.s32.totalorder %s7039, 31
      %s7041 = scalar_select %p7040, %s7039, 31
      %s7042 = smul.addr %s7041, 7
      %s7043 = smul.addr %s7042, 8
      %s7044 = scalar_lea.vmem %s9, %s7043
      // Predicated region
      $region57: #{denoiser_forward.1} parent=55 // pred_check
        %p7045 = pneg %p232
      $region58: #{denoiser_forward.1} parent=55 // pred_check_branch
        %7047 = sbr.rel (%p7045) target = $region60
      $region59: #{denoiser_forward.1} parent=55 // pred_region
        %s7048 = smul.u32 16, %s20
      $region60: #{denoiser_forward.1} parent=55 // pred_fallthru
        _
    $region56: #{denoiser_forward.1} parent=5 // pred_fallthru
      _
    %p7049 = scmp.le.s32.totalorder 2, %s15
    // Predicated region
    $region61: #{denoiser_forward.1} parent=5 // pred_check
      %p7050 = pneg %p7049
    $region62: #{denoiser_forward.1} parent=5 // pred_check_branch
      %7052 = sbr.rel (%p7050) target = $region64
    $region63: #{denoiser_forward.1} parent=5 // pred_region
      %s7053 = ssub.s32 %s15, 2
      // Predicated region
      $region65: #{denoiser_forward.1} parent=63 // pred_check
        %p7054 = pneg %p238
      $region66: #{denoiser_forward.1} parent=63 // pred_check_branch
        %7056 = sbr.rel (%p7054) target = $region68
      $region67: #{denoiser_forward.1} parent=63 // pred_region
        %s7057 = smul.u32 16, %s21
        %p7058 = scmp.lt.s32.totalorder %s7057, 31
        %s7059 = scalar_select %p7058, %s7057, 31
        %s7060 = smul.addr %s7059, 7
        %s7061 = smul.addr %s7060, 8
        %s7062 = scalar_lea.vmem %s9, %s7061
      $region68: #{denoiser_forward.1} parent=63 // pred_fallthru
        _
    $region64: #{denoiser_forward.1} parent=5 // pred_fallthru
      _
  $region6: #{denoiser_forward.1} parent=0 // loop_footer
    %s19 = sadd.s32 1, %s15
  $region7: #{denoiser_forward.1} parent=0 // loop_footer_branch
    %14 = sbr.rel target = $region3
  $region8: #{denoiser_forward.1} parent=0 // loop_exit
    _

</llo_original>
